<compile_context>
chip_gen: v6e
topology: v6e:2x2x1
jax: 0.10.0
libtpu: 0.0.40
codegen_flags: <defaults>
</compile_context>

<pallas_src>
import functools

import jax
import jax.numpy as jnp
from jax.experimental import pallas as pl
from jax.experimental.pallas import tpu as pltpu


def _mlp_kernel(x_ref, w1_ref, b1_ref, w2_ref, b2_ref, o_ref):
    # Cast x to bf16 in-kernel (VPU work, hidden under the MXU).
    x = x_ref[...].astype(jnp.bfloat16)
    # fc1 on the MXU: bf16 operands, f32 accumulation.
    h = jnp.dot(x, w1_ref[...], preferred_element_type=jnp.float32)
    # Bias add + ReLU in f32, then downcast to bf16 for fc2.
    h = jnp.maximum(h + b1_ref[...], 0.0)
    out = jnp.dot(h.astype(jnp.bfloat16), w2_ref[...],
                  preferred_element_type=jnp.float32)
    o_ref[...] = (out + b2_ref[...]).astype(o_ref.dtype)


def _round_up(n, m):
    return ((n + m - 1) // m) * m


def _choose_tm(B, max_tm=1024):
    """Batch tile: large enough to amortize per-step overhead, but keep the
    grid >= 2 steps so v7x megacore sharding + double buffering stay active."""
    if B <= 256:
        return _round_up(max(B, 8), 8)
    tm = 256 * max(1, pl.cdiv(B, 2) // 256)
    return min(max(tm, 256), max_tm)


@functools.partial(jax.jit, static_argnames=("tm",))
def _simple_nn_forward(x, w1_bf, b1_f, w2_bf, b2_f, *, tm):
    B, d_in = x.shape
    h_pad = w1_bf.shape[1]
    d_out_pad = w2_bf.shape[1]

    grid = (pl.cdiv(B, tm),)  # partial last block handled by Pallas

    # VMEM working set (x tile f32 double-buffered, resident bf16 weights,
    # f32 biases, f32+bf16 hidden intermediates, f32 out tile double-buffered).
    bytes_needed = (
        2 * tm * d_in * 4            # x tile, f32, double-buffered
        + tm * d_in * 2              # in-kernel bf16 copy of x
        + d_in * h_pad * 2           # w1, bf16, resident
        + h_pad * d_out_pad * 2      # w2, bf16, resident
        + (h_pad + d_out_pad) * 4    # biases, f32, resident
        + tm * h_pad * (4 + 2)       # hidden activation, f32 + bf16 copy
        + 2 * tm * d_out_pad * 4     # out tile, f32, double-buffered
    )
    # Never under-declare below the 32 MiB scoped default; cap v7x-safe.
    vmem_limit = min(max(int(bytes_needed * 1.5) + (4 << 20), 32 << 20),
                     48 << 20)

    flops = 2 * B * (d_in * h_pad + h_pad * d_out_pad)
    bytes_accessed = (
        B * d_in * 4                 # x, f32 (cast happens in-kernel)
        + d_in * h_pad * 2 + h_pad * d_out_pad * 2
        + (h_pad + d_out_pad) * 4
        + B * d_out_pad * 4
    )

    out = pl.pallas_call(
        _mlp_kernel,
        out_shape=jax.ShapeDtypeStruct((B, d_out_pad), jnp.float32),
        grid=grid,
        in_specs=[
            pl.BlockSpec((tm, d_in), lambda i: (i, 0)),          # x: streamed
            pl.BlockSpec((d_in, h_pad), lambda i: (0, 0)),       # w1: resident
            pl.BlockSpec((1, h_pad), lambda i: (0, 0)),          # b1: resident
            pl.BlockSpec((h_pad, d_out_pad), lambda i: (0, 0)),  # w2: resident
            pl.BlockSpec((1, d_out_pad), lambda i: (0, 0)),      # b2: resident
        ],
        out_specs=pl.BlockSpec((tm, d_out_pad), lambda i: (i, 0)),
        compiler_params=pltpu.CompilerParams(
            dimension_semantics=("parallel",),
            vmem_limit_bytes=vmem_limit,
        ),
        cost_estimate=pl.CostEstimate(
            flops=flops, transcendentals=0, bytes_accessed=bytes_accessed),
    )(x, w1_bf, b1_f, w2_bf, b2_f)

    return out


def prepare_simple_nn_params(w1, b1, w2, b2, *, h_multiple=256,
                             out_multiple=128):
    """One-time conversion (call ONCE, reuse across forward calls):
      * cast weights to bf16 for the MXU, keep biases f32,
      * zero-pad hidden dim to a 256-multiple (clean MXU tiles),
      * zero-pad output dim to a 128-multiple (lane-dense output stores).
    Inputs are (in, out)-layout weights, i.e. PyTorch fc.weight.T."""
    d_in, h = w1.shape
    _, d_out = w2.shape
    h_pad = _round_up(h, h_multiple)
    d_out_pad = _round_up(d_out, out_multiple)

    w1_bf = jnp.zeros((d_in, h_pad), jnp.bfloat16)
    w1_bf = w1_bf.at[:, :h].set(w1.astype(jnp.bfloat16))
    b1_f = jnp.zeros((1, h_pad), jnp.float32)
    b1_f = b1_f.at[:, :h].set(b1.reshape(1, -1).astype(jnp.float32))

    w2_bf = jnp.zeros((h_pad, d_out_pad), jnp.bfloat16)
    w2_bf = w2_bf.at[:h, :d_out].set(w2.astype(jnp.bfloat16))
    b2_f = jnp.zeros((1, d_out_pad), jnp.float32)
    b2_f = b2_f.at[:, :d_out].set(b2.reshape(1, -1).astype(jnp.float32))

    return (w1_bf, b1_f, w2_bf, b2_f, d_out)


def simple_nn_forward(x, params, *, max_tm=1024):
    """Fused SimpleNN forward.

    x:      (B, D_in) float32
    params: output of prepare_simple_nn_params
    returns (B, D_out) float32 (bf16 MXU matmuls, f32 accumulation)
    """
    w1_bf, b1_f, w2_bf, b2_f, d_out = params
    tm = _choose_tm(x.shape[0], max_tm)
    out = _simple_nn_forward(x, w1_bf, b1_f, w2_bf, b2_f, tm=tm)
    return out[:, :d_out]


def init_simple_nn_params(key, input_size, hidden_size, out_size):
    """Deterministic init mimicking PyTorch nn.Linear default:
    U(-1/sqrt(fan_in), 1/sqrt(fan_in)) for both weight and bias.
    Returned weights are already transposed: (in, out)."""
    k1, k2, k3, k4 = jax.random.split(key, 4)
    lim1 = 1.0 / jnp.sqrt(jnp.float32(input_size))
    lim2 = 1.0 / jnp.sqrt(jnp.float32(hidden_size))
    w1 = jax.random.uniform(k1, (input_size, hidden_size),
                            minval=-lim1, maxval=lim1, dtype=jnp.float32)
    b1 = jax.random.uniform(k2, (1, hidden_size),
                            minval=-lim1, maxval=lim1, dtype=jnp.float32)
    w2 = jax.random.uniform(k3, (hidden_size, out_size),
                            minval=-lim2, maxval=lim2, dtype=jnp.float32)
    b2 = jax.random.uniform(k4, (1, out_size),
                            minval=-lim2, maxval=lim2, dtype=jnp.float32)
    return w1, b1, w2, b2


if __name__ == "__main__":
    # Shapes from the original module: input_size=400, hidden_size=800.
    # batch=500 is deliberately NOT a multiple of the batch tile so the
    # pad-free partial-last-block path is exercised.
    batch = 500
    input_size = 400
    hidden_size = 800
    out_size = 16

    key = jax.random.PRNGKey(0)
    kx, kp = jax.random.split(key)

    x = jax.random.normal(kx, (batch, input_size), dtype=jnp.float32)
    w1, b1, w2, b2 = init_simple_nn_params(kp, input_size, hidden_size,
                                           out_size)
    # One-time (cached) weight conversion + padding.
    params = prepare_simple_nn_params(w1, b1, w2, b2)

    out = simple_nn_forward(x, params)
    out = jax.block_until_ready(out)
    assert out.shape == (batch, out_size)

    # Reference in plain JAX using the same bf16-operand / f32-accumulation
    # math as the kernel (unpadded weights).
    h_ref = jnp.maximum(
        jnp.dot(x.astype(jnp.bfloat16), w1.astype(jnp.bfloat16),
                preferred_element_type=jnp.float32) + b1, 0.0)
    ref = jnp.dot(h_ref.astype(jnp.bfloat16), w2.astype(jnp.bfloat16),
                  preferred_element_type=jnp.float32) + b2
    assert jnp.allclose(out, ref, atol=2e-2, rtol=2e-2)

    print("KERNEL_OK")
</pallas_src>

<mosaic_0001>
module attributes {stable_mosaic.version = 11 : i64} {
  func.func @_mlp_kernel(%arg0: i32, %arg1: memref<256x400xf32, #tpu.memory_space<vmem>>, %arg2: memref<400x1024xbf16, #tpu.memory_space<vmem>>, %arg3: memref<1x1024xf32, #tpu.memory_space<vmem>>, %arg4: memref<1024x128xbf16, #tpu.memory_space<vmem>>, %arg5: memref<1x128xf32, #tpu.memory_space<vmem>>, %arg6: memref<256x128xf32, #tpu.memory_space<vmem>>) attributes {dimension_semantics = [#tpu.dimension_semantics<parallel>], iteration_bounds = array<i64: 2>, scalar_prefetch = 0 : i64, scratch_operands = 0 : i64, tpu.core_type = #tpu.core_type<tc>, window_params = [{transform_indices = @transform_0, window_bounds = array<i64: 256, 400>}, {pipeline_mode = #tpu.pipeline_mode<synchronous>, transform_indices = @transform_1, window_bounds = array<i64: 400, 1024>}, {pipeline_mode = #tpu.pipeline_mode<synchronous>, transform_indices = @transform_2, window_bounds = array<i64: 1, 1024>}, {pipeline_mode = #tpu.pipeline_mode<synchronous>, transform_indices = @transform_3, window_bounds = array<i64: 1024, 128>}, {pipeline_mode = #tpu.pipeline_mode<synchronous>, transform_indices = @transform_4, window_bounds = array<i64: 1, 128>}, {transform_indices = @transform_5, window_bounds = array<i64: 256, 128>}]} {
    %c0 = arith.constant 0 : index
    %c0_0 = arith.constant 0 : index
    %0 = vector.load %arg1[%c0, %c0_0] : memref<256x400xf32, #tpu.memory_space<vmem>>, vector<256x400xf32>
    %1 = arith.truncf %0 : vector<256x400xf32> to vector<256x400xbf16>
    %c0_1 = arith.constant 0 : index
    %c0_2 = arith.constant 0 : index
    %2 = vector.load %arg2[%c0_1, %c0_2] : memref<400x1024xbf16, #tpu.memory_space<vmem>>, vector<400x1024xbf16>
    %cst = arith.constant dense<0.000000e+00> : vector<256x1024xf32>
    %3 = tpu.matmul %1, %2, %cst {dimension_numbers = #tpu.dot_dimension_numbers<[1], [0], [0], [1], [0, 0, 1, 1], [], []>} : vector<256x400xbf16>, vector<400x1024xbf16>, vector<256x1024xf32> -> vector<256x1024xf32>
    %c0_3 = arith.constant 0 : index
    %c0_4 = arith.constant 0 : index
    %4 = vector.load %arg3[%c0_3, %c0_4] : memref<1x1024xf32, #tpu.memory_space<vmem>>, vector<1x1024xf32>
    %5 = vector.broadcast %4 : vector<1x1024xf32> to vector<256x1024xf32>
    %6 = arith.addf %3, %5 : vector<256x1024xf32>
    %cst_5 = arith.constant 0.000000e+00 : f32
    %7 = vector.broadcast %cst_5 : f32 to vector<256x1024xf32>
    %8 = arith.maximumf %6, %7 : vector<256x1024xf32>
    %9 = arith.truncf %8 : vector<256x1024xf32> to vector<256x1024xbf16>
    %c0_6 = arith.constant 0 : index
    %c0_7 = arith.constant 0 : index
    %10 = vector.load %arg4[%c0_6, %c0_7] : memref<1024x128xbf16, #tpu.memory_space<vmem>>, vector<1024x128xbf16>
    %cst_8 = arith.constant dense<0.000000e+00> : vector<256x128xf32>
    %11 = tpu.matmul %9, %10, %cst_8 {dimension_numbers = #tpu.dot_dimension_numbers<[1], [0], [0], [1], [0, 0, 1, 1], [], []>} : vector<256x1024xbf16>, vector<1024x128xbf16>, vector<256x128xf32> -> vector<256x128xf32>
    %c0_9 = arith.constant 0 : index
    %c0_10 = arith.constant 0 : index
    %12 = vector.load %arg5[%c0_9, %c0_10] : memref<1x128xf32, #tpu.memory_space<vmem>>, vector<1x128xf32>
    %13 = vector.broadcast %12 : vector<1x128xf32> to vector<256x128xf32>
    %14 = arith.addf %11, %13 : vector<256x128xf32>
    %c0_11 = arith.constant 0 : index
    %c0_12 = arith.constant 0 : index
    %15 = vector.load %arg6[%c0_11, %c0_12] : memref<256x128xf32, #tpu.memory_space<vmem>>, vector<256x128xf32>
    tpu.vector_store %arg6[%c0_11, %c0_12], %14 {strides = array<i32>} : memref<256x128xf32, #tpu.memory_space<vmem>>, vector<256x128xf32>,
    return
  }
  func.func @transform_0(%arg0: i32) -> (i32, i32) {
    %c0_i32 = arith.constant 0 : i32
    %c0_i32_0 = arith.constant 0 : i32
    return %arg0, %c0_i32 : i32, i32
  }
  func.func @transform_1(%arg0: i32) -> (i32, i32) {
    %c0_i32 = arith.constant 0 : i32
    %c0_i32_0 = arith.constant 0 : i32
    %c0_i32_1 = arith.constant 0 : i32
    return %c0_i32, %c0_i32_0 : i32, i32
  }
  func.func @transform_2(%arg0: i32) -> (i32, i32) {
    %c0_i32 = arith.constant 0 : i32
    %c0_i32_0 = arith.constant 0 : i32
    %c0_i32_1 = arith.constant 0 : i32
    return %c0_i32, %c0_i32_0 : i32, i32
  }
  func.func @transform_3(%arg0: i32) -> (i32, i32) {
    %c0_i32 = arith.constant 0 : i32
    %c0_i32_0 = arith.constant 0 : i32
    %c0_i32_1 = arith.constant 0 : i32
    return %c0_i32, %c0_i32_0 : i32, i32
  }
  func.func @transform_4(%arg0: i32) -> (i32, i32) {
    %c0_i32 = arith.constant 0 : i32
    %c0_i32_0 = arith.constant 0 : i32
    %c0_i32_1 = arith.constant 0 : i32
    return %c0_i32, %c0_i32_0 : i32, i32
  }
  func.func @transform_5(%arg0: i32) -> (i32, i32) {
    %c0_i32 = arith.constant 0 : i32
    %c0_i32_0 = arith.constant 0 : i32
    return %arg0, %c0_i32 : i32, i32
  }
}

</mosaic_0001>

<llo_original>
// kernel: _simple_nn_forward.1
$region0: #{_simple_nn_forward.1}
  #allocation0 [shape = 'u32[]', space=smem, size = 0x4, offset = 0x4, fixed_abs, tag = 'smem constant byte address 0x4 - core index']
  #allocation1 [shape = 'u32[144,128]{1,0:T(1,128)}', space=vmem, size = 0x12000, scoped, tag = 'internal scratch']
  %s0 = inlined_call_operand.vmem [shape: f32[500,400], index: 0, kind: input, shape index: {}]
  %s1 = inlined_call_operand.vmem [shape: bf16[400,1024], index: 1, kind: input, shape index: {}]
  %s2 = inlined_call_operand.vmem [shape: f32[1,1024], index: 2, kind: input, shape index: {}]
  %s3 = inlined_call_operand.vmem [shape: bf16[1024,128], index: 3, kind: input, shape index: {}]
  %s4 = inlined_call_operand.vmem [shape: f32[1,128], index: 4, kind: input, shape index: {}]
  %s5 = inlined_call_operand.hbm [shape: f32[500,128], index: 5, kind: output, shape index: {}]
  %s6 = sld [smem:[#allocation0]]
  $region53: #{_simple_nn_forward.1} parent=0
    _
  %s8 = ssub.s32 1, %s6
  %s9 = scalar_select 0, %s8, %s6
  $region1: #{_simple_nn_forward.1} parent=0
    #allocation2 [shape = 'u8[262144]{0}', space=vmem, size = 0x40000, scoped, tag = 'output window, operand 0']
    #allocation3 [shape = 's32[2]{0}', space=sflag, size = 0x8, scoped, tag = 'scoped memory for _simple_nn_forward.1']
    %10 = vsyncpa [#allocation3], 0
    %s11 = scalar_lea.sflag [#allocation3], 1
    %12 = vsyncpa %s11, 0
    loop: start=0, step=1, limit=4
    $region2: #{_simple_nn_forward.1} parent=1 // loop_pre_header
      _
    $region3: #{_simple_nn_forward.1} parent=1 // loop_header
      %s14 = sphi 0, %s18
      %p15 = scmp.ge.s32.totalorder %s14, 4
      %s24 = sphi 0, %s26
      %s27 = sphi 0, %s24
      %s28 = sphi 0, %s27
      %s44 = sphi 0, %s28
      %s48 = sphi 0, %s48
      %s50 = sphi 0, %s48
      %s51 = sphi 0, %s50
      %s65 = sphi 0, %s51
      %s69 = sphi 0, %s69
      %s71 = sphi 0, %s69
      %s72 = sphi 0, %s71
      %s86 = sphi 0, %s72
      %s90 = sphi 0, %s90
      %s92 = sphi 0, %s90
      %s93 = sphi 0, %s92
      %s107 = sphi 0, %s93
      %s111 = sphi 0, %s111
      %s113 = sphi 0, %s111
      %s114 = sphi 0, %s113
      %s128 = sphi 0, %s114
      %s134 = sphi 0, %s136
      %s137 = sphi 0, %s134
      %s138 = sphi 0, %s137
      %s154 = sphi 0, %s138
    $region4: #{_simple_nn_forward.1} parent=1 // loop_header_branch
      %17 = sbr.rel (%p15) target = $region8
    $region5: #{_simple_nn_forward.1} parent=1 // loop_body
      %s19 = ssub.s32 %s14, 1
      %s20 = ssub.s32 %s14, 2
      %s21 = sadd.s32 %s14, 1
      %s22 = ssub.s32 %s14, %s21
      %p23 = scmp.eq.s32.totalorder %s22, 0
      %s25 = sadd.s32 %s24, 1
      %s26 = scalar_select %p23, %s24, %s25
      %p29 = pneg %p23
      %p30 = scmp.eq.s32.totalorder %s14, 1
      %p31 = por %p29, %p30
      %p32 = scmp.ne.s32.totalorder %s24, %s27
      %p33 = scmp.eq.s32.totalorder %s14, 0
      %p34 = por %p32, %p33
      %p35 = scmp.ne.s32.totalorder %s24, %s27
      %p36 = scmp.eq.s32.totalorder %s19, 1
      %p37 = por %p35, %p36
      %p38 = scmp.ne.s32.totalorder %s27, %s28
      %p39 = scmp.eq.s32.totalorder %s19, 0
      %p40 = por %p38, %p39
      %p41 = scmp.ne.s32.totalorder %s27, %s28
      %p42 = scmp.eq.s32.totalorder %s20, 1
      %p43 = por %p41, %p42
      %p45 = scmp.ne.s32.totalorder %s28, %s44
      %p46 = scmp.eq.s32.totalorder %s20, 0
      %p47 = por %p45, %p46
      %s49 = sadd.s32 %s48, 1
      %p52 = scmp.eq.s32.totalorder %s14, 1
      %p53 = scmp.ne.s32.totalorder %s48, %s50
      %p54 = scmp.eq.s32.totalorder %s14, 0
      %p55 = por %p53, %p54
      %p56 = scmp.ne.s32.totalorder %s48, %s50
      %p57 = scmp.eq.s32.totalorder %s19, 1
      %p58 = por %p56, %p57
      %p59 = scmp.ne.s32.totalorder %s50, %s51
      %p60 = scmp.eq.s32.totalorder %s19, 0
      %p61 = por %p59, %p60
      %p62 = scmp.ne.s32.totalorder %s50, %s51
      %p63 = scmp.eq.s32.totalorder %s20, 1
      %p64 = por %p62, %p63
      %p66 = scmp.ne.s32.totalorder %s51, %s65
      %p67 = scmp.eq.s32.totalorder %s20, 0
      %p68 = por %p66, %p67
      %s70 = sadd.s32 %s69, 1
      %p73 = scmp.eq.s32.totalorder %s14, 1
      %p74 = scmp.ne.s32.totalorder %s69, %s71
      %p75 = scmp.eq.s32.totalorder %s14, 0
      %p76 = por %p74, %p75
      %p77 = scmp.ne.s32.totalorder %s69, %s71
      %p78 = scmp.eq.s32.totalorder %s19, 1
      %p79 = por %p77, %p78
      %p80 = scmp.ne.s32.totalorder %s71, %s72
      %p81 = scmp.eq.s32.totalorder %s19, 0
      %p82 = por %p80, %p81
      %p83 = scmp.ne.s32.totalorder %s71, %s72
      %p84 = scmp.eq.s32.totalorder %s20, 1
      %p85 = por %p83, %p84
      %p87 = scmp.ne.s32.totalorder %s72, %s86
      %p88 = scmp.eq.s32.totalorder %s20, 0
      %p89 = por %p87, %p88
      %s91 = sadd.s32 %s90, 1
      %p94 = scmp.eq.s32.totalorder %s14, 1
      %p95 = scmp.ne.s32.totalorder %s90, %s92
      %p96 = scmp.eq.s32.totalorder %s14, 0
      %p97 = por %p95, %p96
      %p98 = scmp.ne.s32.totalorder %s90, %s92
      %p99 = scmp.eq.s32.totalorder %s19, 1
      %p100 = por %p98, %p99
      %p101 = scmp.ne.s32.totalorder %s92, %s93
      %p102 = scmp.eq.s32.totalorder %s19, 0
      %p103 = por %p101, %p102
      %p104 = scmp.ne.s32.totalorder %s92, %s93
      %p105 = scmp.eq.s32.totalorder %s20, 1
      %p106 = por %p104, %p105
      %p108 = scmp.ne.s32.totalorder %s93, %s107
      %p109 = scmp.eq.s32.totalorder %s20, 0
      %p110 = por %p108, %p109
      %s112 = sadd.s32 %s111, 1
      %p115 = scmp.eq.s32.totalorder %s14, 1
      %p116 = scmp.ne.s32.totalorder %s111, %s113
      %p117 = scmp.eq.s32.totalorder %s14, 0
      %p118 = por %p116, %p117
      %p119 = scmp.ne.s32.totalorder %s111, %s113
      %p120 = scmp.eq.s32.totalorder %s19, 1
      %p121 = por %p119, %p120
      %p122 = scmp.ne.s32.totalorder %s113, %s114
      %p123 = scmp.eq.s32.totalorder %s19, 0
      %p124 = por %p122, %p123
      %p125 = scmp.ne.s32.totalorder %s113, %s114
      %p126 = scmp.eq.s32.totalorder %s20, 1
      %p127 = por %p125, %p126
      %p129 = scmp.ne.s32.totalorder %s114, %s128
      %p130 = scmp.eq.s32.totalorder %s20, 0
      %p131 = por %p129, %p130
      %s132 = ssub.s32 %s14, %s21
      %p133 = scmp.eq.s32.totalorder %s132, 0
      %s135 = sadd.s32 %s134, 1
      %s136 = scalar_select %p133, %s134, %s135
      %p139 = pneg %p133
      %p140 = scmp.eq.s32.totalorder %s14, 1
      %p141 = por %p139, %p140
      %p142 = scmp.ne.s32.totalorder %s134, %s137
      %p143 = scmp.eq.s32.totalorder %s14, 0
      %p144 = por %p142, %p143
      %p145 = scmp.ne.s32.totalorder %s134, %s137
      %p146 = scmp.eq.s32.totalorder %s19, 1
      %p147 = por %p145, %p146
      %p148 = scmp.ne.s32.totalorder %s137, %s138
      %p149 = scmp.eq.s32.totalorder %s19, 0
      %p150 = por %p148, %p149
      %p151 = scmp.ne.s32.totalorder %s137, %s138
      %p152 = scmp.eq.s32.totalorder %s20, 1
      %p153 = por %p151, %p152
      %p155 = scmp.ne.s32.totalorder %s138, %s154
      %p156 = scmp.eq.s32.totalorder %s20, 0
      %p157 = por %p155, %p156
      %p158 = scmp.le.s32.totalorder 1, %s14
      %p159 = scmp.lt.s32.totalorder %s14, 3
      %p160 = pnand %p158, %p159
      %p161 = pneg %p160
      // Predicated region
      $region9: #{_simple_nn_forward.1} parent=5 // pred_check
        _
      $region10: #{_simple_nn_forward.1} parent=5 // pred_check_branch
        %163 = sbr.rel (%p160) target = $region12
      $region11: #{_simple_nn_forward.1} parent=5 // pred_region
        %s164 = ssub.s32 %s14, 1
        // Predicated region
        $region13: #{_simple_nn_forward.1} parent=11 // pred_check
          %p165 = pneg %p61
        $region14: #{_simple_nn_forward.1} parent=11 // pred_check_branch
          %167 = sbr.rel (%p165) target = $region16
        $region15: #{_simple_nn_forward.1} parent=11 // pred_region
          _
        $region16: #{_simple_nn_forward.1} parent=11 // pred_fallthru
          _
        // Predicated region
        $region17: #{_simple_nn_forward.1} parent=11 // pred_check
          %p168 = pneg %p82
        $region18: #{_simple_nn_forward.1} parent=11 // pred_check_branch
          %170 = sbr.rel (%p168) target = $region20
        $region19: #{_simple_nn_forward.1} parent=11 // pred_region
          _
        $region20: #{_simple_nn_forward.1} parent=11 // pred_fallthru
          _
        // Predicated region
        $region21: #{_simple_nn_forward.1} parent=11 // pred_check
          %p171 = pneg %p103
        $region22: #{_simple_nn_forward.1} parent=11 // pred_check_branch
          %173 = sbr.rel (%p171) target = $region24
        $region23: #{_simple_nn_forward.1} parent=11 // pred_region
          _
        $region24: #{_simple_nn_forward.1} parent=11 // pred_fallthru
          _
        // Predicated region
        $region25: #{_simple_nn_forward.1} parent=11 // pred_check
          %p174 = pneg %p124
        $region26: #{_simple_nn_forward.1} parent=11 // pred_check_branch
          %176 = sbr.rel (%p174) target = $region28
        $region27: #{_simple_nn_forward.1} parent=11 // pred_region
          _
        $region28: #{_simple_nn_forward.1} parent=11 // pred_fallthru
          _
      $region12: #{_simple_nn_forward.1} parent=5 // pred_fallthru
        _
      %p177 = scmp.lt.s32.totalorder %s14, 2
      // Predicated region
      $region29: #{_simple_nn_forward.1} parent=5 // pred_check
        %p178 = pneg %p177
      $region30: #{_simple_nn_forward.1} parent=5 // pred_check_branch
        %180 = sbr.rel (%p178) target = $region32
      $region31: #{_simple_nn_forward.1} parent=5 // pred_region
        // Predicated region
        $region33: #{_simple_nn_forward.1} parent=31 // pred_check
          %p181 = pneg %p34
        $region34: #{_simple_nn_forward.1} parent=31 // pred_check_branch
          %183 = sbr.rel (%p181) target = $region36
        $region35: #{_simple_nn_forward.1} parent=31 // pred_region
          %s184 = smul.u32 32, %s14
          %s185 = ssub.s32 63, %s184
          %p186 = scmp.lt.s32.totalorder %s185, 32
          %s187 = scalar_select %p186, %s185, 32
          %s188 = smul.u32 128, %s187
          %s189 = smul.u32 %s188, 4
          %p190 = scmp.lt.s32.totalorder %s184, 62
          %s191 = scalar_select %p190, %s184, 62
          %s192 = smul.addr %s191, 4
          %s193 = smul.addr %s192, 8
          %s194 = scalar_lea.vmem %s0, %s193
          %s195 = smul.u32 32, %s14
          %s196 = ssub.s32 63, %s195
          %p197 = scmp.lt.s32.totalorder %s196, 32
          %s198 = scalar_select %p197, %s196, 32
          %s199 = smul.u32 128, %s198
          %s200 = smul.u32 %s199, 4
        $region36: #{_simple_nn_forward.1} parent=31 // pred_fallthru
          _
      $region32: #{_simple_nn_forward.1} parent=5 // pred_fallthru
        _
      %p201 = scmp.le.s32.totalorder 1, %s14
      %p202 = scmp.lt.s32.totalorder %s14, 3
      %p203 = pnand %p201, %p202
      %p204 = pneg %p203
      // Predicated region
      $region37: #{_simple_nn_forward.1} parent=5 // pred_check
        _
      $region38: #{_simple_nn_forward.1} parent=5 // pred_check_branch
        %206 = sbr.rel (%p203) target = $region40
      $region39: #{_simple_nn_forward.1} parent=5 // pred_region
        %s207 = ssub.s32 %s14, 1
        %s208 = smul.u32 32, %s19
        %s209 = ssub.s32 63, %s208
        %p210 = scmp.lt.s32.totalorder %s209, 32
        %s211 = scalar_select %p210, %s209, 32
        %s212 = smul.u32 128, %s211
        %s213 = smul.u32 %s212, 4
        %p214 = scmp.lt.s32.totalorder %s208, 62
        %s215 = scalar_select %p214, %s208, 62
        %s216 = smul.addr %s215, 4
        %s217 = smul.addr %s216, 8
        %s218 = scalar_lea.vmem %s0, %s217
        %p219 = pneg %p40
        %p220 = pneg %p37
        %p221 = pneg %p61
        %p222 = pneg %p58
        %p223 = pneg %p82
        %p224 = pneg %p79
        %p225 = pneg %p103
        %p226 = pneg %p100
        %p227 = pneg %p124
        %p228 = pneg %p121
        %p229 = pneg %p150
        %p230 = pneg %p147
        %s231 = sand.u32 %s137, 1
        %s232 = scalar_lea.sflag [#allocation3], %s231
        %s233 = sand.u32 %s137, 1
        %s234 = smul.addr %s233, 256
        %s235 = scalar_lea.vmem [#allocation2], %s234
        %s236 = smul.u32 32, %s19
        %s237 = ssub.s32 63, %s236
        %p238 = scmp.lt.s32.totalorder %s237, 32
        %s239 = scalar_select %p238, %s237, 32
        %s240 = smul.u32 128, %s239
        %s241 = smul.u32 %s240, 4
        %p242 = scmp.lt.s32.totalorder %s236, 62
        %s243 = scalar_select %p242, %s236, 62
        %s244 = smul.addr %s243, 4
        %s245 = smul.addr %s244, 8
        %s246 = scalar_lea.vmem %s0, %s245
        %s247 = smul.u32 32, %s19
        %s248 = ssub.s32 63, %s247
        %p249 = scmp.lt.s32.totalorder %s248, 32
        %s250 = scalar_select %p249, %s248, 32
        %s251 = smul.u32 128, %s250
        %s252 = smul.u32 %s251, 4
        %s253 = smul.u32 32, %s19
        %s254 = ssub.s32 63, %s253
        %p255 = scmp.lt.s32.totalorder %s254, 32
        %s256 = scalar_select %p255, %s254, 32
        %s257 = smul.u32 128, %s256
        %v259 = vld [vmem:[%s246] sm:$0xff]
        %v260 = vld [vmem:[%s246 + $0x8] sm:$0xff]
        %v261 = vld [vmem:[%s246 + $0x10] sm:$0xff]
        %v262 = vld [vmem:[%s246 + $0x18] sm:$0xff]
        %v263 = vld [vmem:[%s246 + $0x20] sm:$0xff]
        %v264 = vld [vmem:[%s246 + $0x28] sm:$0xff]
        %v265 = vld [vmem:[%s246 + $0x30] sm:$0xff]
        %v266 = vld [vmem:[%s246 + $0x38] sm:$0xff]
        %v267 = vld [vmem:[%s246 + $0x40] sm:$0xff]
        %v268 = vld [vmem:[%s246 + $0x48] sm:$0xff]
        %v269 = vld [vmem:[%s246 + $0x50] sm:$0xff]
        %v270 = vld [vmem:[%s246 + $0x58] sm:$0xff]
        %v271 = vld [vmem:[%s246 + $0x60] sm:$0xff]
        %v272 = vld [vmem:[%s246 + $0x68] sm:$0xff]
        %v273 = vld [vmem:[%s246 + $0x70] sm:$0xff]
        %v274 = vld [vmem:[%s246 + $0x78] sm:$0xff]
        %v275 = vld [vmem:[%s246 + $0x80] sm:$0xff]
        %v276 = vld [vmem:[%s246 + $0x88] sm:$0xff]
        %v277 = vld [vmem:[%s246 + $0x90] sm:$0xff]
        %v278 = vld [vmem:[%s246 + $0x98] sm:$0xff]
        %v279 = vld [vmem:[%s246 + $0xa0] sm:$0xff]
        %v280 = vld [vmem:[%s246 + $0xa8] sm:$0xff]
        %v281 = vld [vmem:[%s246 + $0xb0] sm:$0xff]
        %v282 = vld [vmem:[%s246 + $0xb8] sm:$0xff]
        %v283 = vld [vmem:[%s246 + $0xc0] sm:$0xff]
        %v284 = vld [vmem:[%s246 + $0xc8] sm:$0xff]
        %v285 = vld [vmem:[%s246 + $0xd0] sm:$0xff]
        %v286 = vld [vmem:[%s246 + $0xd8] sm:$0xff]
        %v287 = vld [vmem:[%s246 + $0xe0] sm:$0xff]
        %v288 = vld [vmem:[%s246 + $0xe8] sm:$0xff]
        %v289 = vld [vmem:[%s246 + $0xf0] sm:$0xff]
        %v290 = vld [vmem:[%s246 + $0xf8] sm:$0xff]
        %v291 = vld [vmem:[%s246 + $0x100] sm:$0xff]
        %v292 = vld [vmem:[%s246 + $0x108] sm:$0xff]
        %v293 = vld [vmem:[%s246 + $0x110] sm:$0xff]
        %v294 = vld [vmem:[%s246 + $0x118] sm:$0xff]
        %v295 = vld [vmem:[%s246 + $0x120] sm:$0xff]
        %v296 = vld [vmem:[%s246 + $0x128] sm:$0xff]
        %v297 = vld [vmem:[%s246 + $0x130] sm:$0xff]
        %v298 = vld [vmem:[%s246 + $0x138] sm:$0xff]
        %v299 = vld [vmem:[%s246 + $0x140] sm:$0xff]
        %v300 = vld [vmem:[%s246 + $0x148] sm:$0xff]
        %v301 = vld [vmem:[%s246 + $0x150] sm:$0xff]
        %v302 = vld [vmem:[%s246 + $0x158] sm:$0xff]
        %v303 = vld [vmem:[%s246 + $0x160] sm:$0xff]
        %v304 = vld [vmem:[%s246 + $0x168] sm:$0xff]
        %v305 = vld [vmem:[%s246 + $0x170] sm:$0xff]
        %v306 = vld [vmem:[%s246 + $0x178] sm:$0xff]
        %v307 = vld [vmem:[%s246 + $0x180] sm:$0xff]
        %v308 = vld [vmem:[%s246 + $0x188] sm:$0xff]
        %v309 = vld [vmem:[%s246 + $0x190] sm:$0xff]
        %v310 = vld [vmem:[%s246 + $0x198] sm:$0xff]
        %v311 = vld [vmem:[%s246 + $0x1a0] sm:$0xff]
        %v312 = vld [vmem:[%s246 + $0x1a8] sm:$0xff]
        %v313 = vld [vmem:[%s246 + $0x1b0] sm:$0xff]
        %v314 = vld [vmem:[%s246 + $0x1b8] sm:$0xff]
        %v315 = vld [vmem:[%s246 + $0x1c0] sm:$0xff]
        %v316 = vld [vmem:[%s246 + $0x1c8] sm:$0xff]
        %v317 = vld [vmem:[%s246 + $0x1d0] sm:$0xff]
        %v318 = vld [vmem:[%s246 + $0x1d8] sm:$0xff]
        %v319 = vld [vmem:[%s246 + $0x1e0] sm:$0xff]
        %v320 = vld [vmem:[%s246 + $0x1e8] sm:$0xff]
        %v321 = vld [vmem:[%s246 + $0x1f0] sm:$0xff]
        %v322 = vld [vmem:[%s246 + $0x1f8] sm:$0xff]
        %v323 = vld [vmem:[%s246 + $0x200] sm:$0xff]
        %v324 = vld [vmem:[%s246 + $0x208] sm:$0xff]
        %v325 = vld [vmem:[%s246 + $0x210] sm:$0xff]
        %v326 = vld [vmem:[%s246 + $0x218] sm:$0xff]
        %v327 = vld [vmem:[%s246 + $0x220] sm:$0xff]
        %v328 = vld [vmem:[%s246 + $0x228] sm:$0xff]
        %v329 = vld [vmem:[%s246 + $0x230] sm:$0xff]
        %v330 = vld [vmem:[%s246 + $0x238] sm:$0xff]
        %v331 = vld [vmem:[%s246 + $0x240] sm:$0xff]
        %v332 = vld [vmem:[%s246 + $0x248] sm:$0xff]
        %v333 = vld [vmem:[%s246 + $0x250] sm:$0xff]
        %v334 = vld [vmem:[%s246 + $0x258] sm:$0xff]
        %v335 = vld [vmem:[%s246 + $0x260] sm:$0xff]
        %v336 = vld [vmem:[%s246 + $0x268] sm:$0xff]
        %v337 = vld [vmem:[%s246 + $0x270] sm:$0xff]
        %v338 = vld [vmem:[%s246 + $0x278] sm:$0xff]
        %v339 = vld [vmem:[%s246 + $0x280] sm:$0xff]
        %v340 = vld [vmem:[%s246 + $0x288] sm:$0xff]
        %v341 = vld [vmem:[%s246 + $0x290] sm:$0xff]
        %v342 = vld [vmem:[%s246 + $0x298] sm:$0xff]
        %v343 = vld [vmem:[%s246 + $0x2a0] sm:$0xff]
        %v344 = vld [vmem:[%s246 + $0x2a8] sm:$0xff]
        %v345 = vld [vmem:[%s246 + $0x2b0] sm:$0xff]
        %v346 = vld [vmem:[%s246 + $0x2b8] sm:$0xff]
        %v347 = vld [vmem:[%s246 + $0x2c0] sm:$0xff]
        %v348 = vld [vmem:[%s246 + $0x2c8] sm:$0xff]
        %v349 = vld [vmem:[%s246 + $0x2d0] sm:$0xff]
        %v350 = vld [vmem:[%s246 + $0x2d8] sm:$0xff]
        %v351 = vld [vmem:[%s246 + $0x2e0] sm:$0xff]
        %v352 = vld [vmem:[%s246 + $0x2e8] sm:$0xff]
        %v353 = vld [vmem:[%s246 + $0x2f0] sm:$0xff]
        %v354 = vld [vmem:[%s246 + $0x2f8] sm:$0xff]
        %v355 = vld [vmem:[%s246 + $0x300] sm:$0xff]
        %v356 = vld [vmem:[%s246 + $0x308] sm:$0xff]
        %v357 = vld [vmem:[%s246 + $0x310] sm:$0xff]
        %v358 = vld [vmem:[%s246 + $0x318] sm:$0xff]
        %v359 = vld [vmem:[%s246 + $0x320] sm:$0xff]
        %v360 = vld [vmem:[%s246 + $0x328] sm:$0xff]
        %v361 = vld [vmem:[%s246 + $0x330] sm:$0xff]
        %v362 = vld [vmem:[%s246 + $0x338] sm:$0xff]
        %v363 = vld [vmem:[%s246 + $0x340] sm:$0xff]
        %v364 = vld [vmem:[%s246 + $0x348] sm:$0xff]
        %v365 = vld [vmem:[%s246 + $0x350] sm:$0xff]
        %v366 = vld [vmem:[%s246 + $0x358] sm:$0xff]
        %v367 = vld [vmem:[%s246 + $0x360] sm:$0xff]
        %v368 = vld [vmem:[%s246 + $0x368] sm:$0xff]
        %v369 = vld [vmem:[%s246 + $0x370] sm:$0xff]
        %v370 = vld [vmem:[%s246 + $0x378] sm:$0xff]
        %v371 = vld [vmem:[%s246 + $0x380] sm:$0xff]
        %v372 = vld [vmem:[%s246 + $0x388] sm:$0xff]
        %v373 = vld [vmem:[%s246 + $0x390] sm:$0xff]
        %v374 = vld [vmem:[%s246 + $0x398] sm:$0xff]
        %v375 = vld [vmem:[%s246 + $0x3a0] sm:$0xff]
        %v376 = vld [vmem:[%s246 + $0x3a8] sm:$0xff]
        %v377 = vld [vmem:[%s246 + $0x3b0] sm:$0xff]
        %v378 = vld [vmem:[%s246 + $0x3b8] sm:$0xff]
        %v379 = vld [vmem:[%s246 + $0x3c0] sm:$0xff]
        %v380 = vld [vmem:[%s246 + $0x3c8] sm:$0xff]
        %v381 = vld [vmem:[%s246 + $0x3d0] sm:$0xff]
        %v382 = vld [vmem:[%s246 + $0x3d8] sm:$0xff]
        %v383 = vld [vmem:[%s246 + $0x3e0] sm:$0xff]
        %v384 = vld [vmem:[%s246 + $0x3e8] sm:$0xff]
        %v385 = vld [vmem:[%s246 + $0x3f0] sm:$0xff]
        %v386 = vld [vmem:[%s246 + $0x3f8] sm:$0xff]
        %v387 = vpack.c.bf16 %v263, %v259
        %v388 = vpack.c.bf16 %v264, %v260
        %v389 = vpack.c.bf16 %v265, %v261
        %v390 = vpack.c.bf16 %v266, %v262
        %v391 = vpack.c.bf16 %v271, %v267
        %v392 = vpack.c.bf16 %v272, %v268
        %v393 = vpack.c.bf16 %v273, %v269
        %v394 = vpack.c.bf16 %v274, %v270
        %v395 = vpack.c.bf16 %v279, %v275
        %v396 = vpack.c.bf16 %v280, %v276
        %v397 = vpack.c.bf16 %v281, %v277
        %v398 = vpack.c.bf16 %v282, %v278
        %v399 = vpack.c.bf16 %v287, %v283
        %v400 = vpack.c.bf16 %v288, %v284
        %v401 = vpack.c.bf16 %v289, %v285
        %v402 = vpack.c.bf16 %v290, %v286
        %v403 = vpack.c.bf16 %v295, %v291
        %v404 = vpack.c.bf16 %v296, %v292
        %v405 = vpack.c.bf16 %v297, %v293
        %v406 = vpack.c.bf16 %v298, %v294
        %v407 = vpack.c.bf16 %v303, %v299
        %v408 = vpack.c.bf16 %v304, %v300
        %v409 = vpack.c.bf16 %v305, %v301
        %v410 = vpack.c.bf16 %v306, %v302
        %v411 = vpack.c.bf16 %v311, %v307
        %v412 = vpack.c.bf16 %v312, %v308
        %v413 = vpack.c.bf16 %v313, %v309
        %v414 = vpack.c.bf16 %v314, %v310
        %v415 = vpack.c.bf16 %v319, %v315
        %v416 = vpack.c.bf16 %v320, %v316
        %v417 = vpack.c.bf16 %v321, %v317
        %v418 = vpack.c.bf16 %v322, %v318
        %v419 = vpack.c.bf16 %v327, %v323
        %v420 = vpack.c.bf16 %v328, %v324
        %v421 = vpack.c.bf16 %v329, %v325
        %v422 = vpack.c.bf16 %v330, %v326
        %v423 = vpack.c.bf16 %v335, %v331
        %v424 = vpack.c.bf16 %v336, %v332
        %v425 = vpack.c.bf16 %v337, %v333
        %v426 = vpack.c.bf16 %v338, %v334
        %v427 = vpack.c.bf16 %v343, %v339
        %v428 = vpack.c.bf16 %v344, %v340
        %v429 = vpack.c.bf16 %v345, %v341
        %v430 = vpack.c.bf16 %v346, %v342
        %v431 = vpack.c.bf16 %v351, %v347
        %v432 = vpack.c.bf16 %v352, %v348
        %v433 = vpack.c.bf16 %v353, %v349
        %v434 = vpack.c.bf16 %v354, %v350
        %v435 = vpack.c.bf16 %v359, %v355
        %v436 = vpack.c.bf16 %v360, %v356
        %v437 = vpack.c.bf16 %v361, %v357
        %v438 = vpack.c.bf16 %v362, %v358
        %v439 = vpack.c.bf16 %v367, %v363
        %v440 = vpack.c.bf16 %v368, %v364
        %v441 = vpack.c.bf16 %v369, %v365
        %v442 = vpack.c.bf16 %v370, %v366
        %v443 = vpack.c.bf16 %v375, %v371
        %v444 = vpack.c.bf16 %v376, %v372
        %v445 = vpack.c.bf16 %v377, %v373
        %v446 = vpack.c.bf16 %v378, %v374
        %v447 = vpack.c.bf16 %v383, %v379
        %v448 = vpack.c.bf16 %v384, %v380
        %v449 = vpack.c.bf16 %v385, %v381
        %v450 = vpack.c.bf16 %v386, %v382
        %v451 = vld [vmem:[%s1] sm:$0xff]
        %v452 = vld [vmem:[%s1 + $0x8] sm:$0xff]
        %v453 = vld [vmem:[%s1 + $0x10] sm:$0xff]
        %v454 = vld [vmem:[%s1 + $0x18] sm:$0xff]
        %v455 = vld [vmem:[%s1 + $0x20] sm:$0xff]
        %v456 = vld [vmem:[%s1 + $0x28] sm:$0xff]
        %v457 = vld [vmem:[%s1 + $0x30] sm:$0xff]
        %v458 = vld [vmem:[%s1 + $0x38] sm:$0xff]
        %v459 = vld [vmem:[%s1 + $0x40] sm:$0xff]
        %v460 = vld [vmem:[%s1 + $0x48] sm:$0xff]
        %v461 = vld [vmem:[%s1 + $0x50] sm:$0xff]
        %v462 = vld [vmem:[%s1 + $0x58] sm:$0xff]
        %v463 = vld [vmem:[%s1 + $0x60] sm:$0xff]
        %v464 = vld [vmem:[%s1 + $0x68] sm:$0xff]
        %v465 = vld [vmem:[%s1 + $0x70] sm:$0xff]
        %v466 = vld [vmem:[%s1 + $0x78] sm:$0xff]
        %v467 = vld [vmem:[%s1 + $0x80] sm:$0xff]
        %v468 = vld [vmem:[%s1 + $0x88] sm:$0xff]
        %v469 = vld [vmem:[%s1 + $0x90] sm:$0xff]
        %v470 = vld [vmem:[%s1 + $0x98] sm:$0xff]
        %v471 = vld [vmem:[%s1 + $0xa0] sm:$0xff]
        %v472 = vld [vmem:[%s1 + $0xa8] sm:$0xff]
        %v473 = vld [vmem:[%s1 + $0xb0] sm:$0xff]
        %v474 = vld [vmem:[%s1 + $0xb8] sm:$0xff]
        %v475 = vld [vmem:[%s1 + $0xc0] sm:$0xff]
        %v476 = vld [vmem:[%s1 + $0xc8] sm:$0xff]
        %v477 = vld [vmem:[%s1 + $0xd0] sm:$0xff]
        %v478 = vld [vmem:[%s1 + $0xd8] sm:$0xff]
        %v479 = vld [vmem:[%s1 + $0xe0] sm:$0xff]
        %v480 = vld [vmem:[%s1 + $0xe8] sm:$0xff]
        %v481 = vld [vmem:[%s1 + $0xf0] sm:$0xff]
        %v482 = vld [vmem:[%s1 + $0xf8] sm:$0xff]
        %v483 = vld [vmem:[%s1 + $0x100] sm:$0xff]
        %v484 = vld [vmem:[%s1 + $0x108] sm:$0xff]
        %v485 = vld [vmem:[%s1 + $0x110] sm:$0xff]
        %v486 = vld [vmem:[%s1 + $0x118] sm:$0xff]
        %v487 = vld [vmem:[%s1 + $0x120] sm:$0xff]
        %v488 = vld [vmem:[%s1 + $0x128] sm:$0xff]
        %v489 = vld [vmem:[%s1 + $0x130] sm:$0xff]
        %v490 = vld [vmem:[%s1 + $0x138] sm:$0xff]
        %v491 = vld [vmem:[%s1 + $0x140] sm:$0xff]
        %v492 = vld [vmem:[%s1 + $0x148] sm:$0xff]
        %v493 = vld [vmem:[%s1 + $0x150] sm:$0xff]
        %v494 = vld [vmem:[%s1 + $0x158] sm:$0xff]
        %v495 = vld [vmem:[%s1 + $0x160] sm:$0xff]
        %v496 = vld [vmem:[%s1 + $0x168] sm:$0xff]
        %v497 = vld [vmem:[%s1 + $0x170] sm:$0xff]
        %v498 = vld [vmem:[%s1 + $0x178] sm:$0xff]
        %v499 = vld [vmem:[%s1 + $0x180] sm:$0xff]
        %v500 = vld [vmem:[%s1 + $0x188] sm:$0xff]
        %v501 = vld [vmem:[%s1 + $0x190] sm:$0xff]
        %v502 = vld [vmem:[%s1 + $0x198] sm:$0xff]
        %v503 = vld [vmem:[%s1 + $0x1a0] sm:$0xff]
        %v504 = vld [vmem:[%s1 + $0x1a8] sm:$0xff]
        %v505 = vld [vmem:[%s1 + $0x1b0] sm:$0xff]
        %v506 = vld [vmem:[%s1 + $0x1b8] sm:$0xff]
        %v507 = vld [vmem:[%s1 + $0x1c0] sm:$0xff]
        %v508 = vld [vmem:[%s1 + $0x1c8] sm:$0xff]
        %v509 = vld [vmem:[%s1 + $0x1d0] sm:$0xff]
        %v510 = vld [vmem:[%s1 + $0x1d8] sm:$0xff]
        %v511 = vld [vmem:[%s1 + $0x1e0] sm:$0xff]
        %v512 = vld [vmem:[%s1 + $0x1e8] sm:$0xff]
        %v513 = vld [vmem:[%s1 + $0x1f0] sm:$0xff]
        %v514 = vld [vmem:[%s1 + $0x1f8] sm:$0xff]
        %v515 = vld [vmem:[%s1 + $0x200] sm:$0xff]
        %v516 = vld [vmem:[%s1 + $0x208] sm:$0xff]
        %v517 = vld [vmem:[%s1 + $0x210] sm:$0xff]
        %v518 = vld [vmem:[%s1 + $0x218] sm:$0xff]
        %v519 = vld [vmem:[%s1 + $0x220] sm:$0xff]
        %v520 = vld [vmem:[%s1 + $0x228] sm:$0xff]
        %v521 = vld [vmem:[%s1 + $0x230] sm:$0xff]
        %v522 = vld [vmem:[%s1 + $0x238] sm:$0xff]
        %v523 = vld [vmem:[%s1 + $0x240] sm:$0xff]
        %v524 = vld [vmem:[%s1 + $0x248] sm:$0xff]
        %v525 = vld [vmem:[%s1 + $0x250] sm:$0xff]
        %v526 = vld [vmem:[%s1 + $0x258] sm:$0xff]
        %v527 = vld [vmem:[%s1 + $0x260] sm:$0xff]
        %v528 = vld [vmem:[%s1 + $0x268] sm:$0xff]
        %v529 = vld [vmem:[%s1 + $0x270] sm:$0xff]
        %v530 = vld [vmem:[%s1 + $0x278] sm:$0xff]
        %v531 = vld [vmem:[%s1 + $0x280] sm:$0xff]
        %v532 = vld [vmem:[%s1 + $0x288] sm:$0xff]
        %v533 = vld [vmem:[%s1 + $0x290] sm:$0xff]
        %v534 = vld [vmem:[%s1 + $0x298] sm:$0xff]
        %v535 = vld [vmem:[%s1 + $0x2a0] sm:$0xff]
        %v536 = vld [vmem:[%s1 + $0x2a8] sm:$0xff]
        %v537 = vld [vmem:[%s1 + $0x2b0] sm:$0xff]
        %v538 = vld [vmem:[%s1 + $0x2b8] sm:$0xff]
        %v539 = vld [vmem:[%s1 + $0x2c0] sm:$0xff]
        %v540 = vld [vmem:[%s1 + $0x2c8] sm:$0xff]
        %v541 = vld [vmem:[%s1 + $0x2d0] sm:$0xff]
        %v542 = vld [vmem:[%s1 + $0x2d8] sm:$0xff]
        %v543 = vld [vmem:[%s1 + $0x2e0] sm:$0xff]
        %v544 = vld [vmem:[%s1 + $0x2e8] sm:$0xff]
        %v545 = vld [vmem:[%s1 + $0x2f0] sm:$0xff]
        %v546 = vld [vmem:[%s1 + $0x2f8] sm:$0xff]
        %v547 = vld [vmem:[%s1 + $0x300] sm:$0xff]
        %v548 = vld [vmem:[%s1 + $0x308] sm:$0xff]
        %v549 = vld [vmem:[%s1 + $0x310] sm:$0xff]
        %v550 = vld [vmem:[%s1 + $0x318] sm:$0xff]
        %v551 = vld [vmem:[%s1 + $0x320] sm:$0xff]
        %v552 = vld [vmem:[%s1 + $0x328] sm:$0xff]
        %v553 = vld [vmem:[%s1 + $0x330] sm:$0xff]
        %v554 = vld [vmem:[%s1 + $0x338] sm:$0xff]
        %v555 = vld [vmem:[%s1 + $0x340] sm:$0xff]
        %v556 = vld [vmem:[%s1 + $0x348] sm:$0xff]
        %v557 = vld [vmem:[%s1 + $0x350] sm:$0xff]
        %v558 = vld [vmem:[%s1 + $0x358] sm:$0xff]
        %v559 = vld [vmem:[%s1 + $0x360] sm:$0xff]
        %v560 = vld [vmem:[%s1 + $0x368] sm:$0xff]
        %v561 = vld [vmem:[%s1 + $0x370] sm:$0xff]
        %v562 = vld [vmem:[%s1 + $0x378] sm:$0xff]
        %v563 = vld [vmem:[%s1 + $0x380] sm:$0xff]
        %v564 = vld [vmem:[%s1 + $0x388] sm:$0xff]
        %v565 = vld [vmem:[%s1 + $0x390] sm:$0xff]
        %v566 = vld [vmem:[%s1 + $0x398] sm:$0xff]
        %v567 = vld [vmem:[%s1 + $0x3a0] sm:$0xff]
        %v568 = vld [vmem:[%s1 + $0x3a8] sm:$0xff]
        %v569 = vld [vmem:[%s1 + $0x3b0] sm:$0xff]
        %v570 = vld [vmem:[%s1 + $0x3b8] sm:$0xff]
        %v571 = vld [vmem:[%s1 + $0x3c0] sm:$0xff]
        %v572 = vld [vmem:[%s1 + $0x3c8] sm:$0xff]
        %v573 = vld [vmem:[%s1 + $0x3d0] sm:$0xff]
        %v574 = vld [vmem:[%s1 + $0x3d8] sm:$0xff]
        %v575 = vld [vmem:[%s1 + $0x3e0] sm:$0xff]
        %v576 = vld [vmem:[%s1 + $0x3e8] sm:$0xff]
        %v577 = vld [vmem:[%s1 + $0x3f0] sm:$0xff]
        %v578 = vld [vmem:[%s1 + $0x3f8] sm:$0xff]
        %v579 = vld [vmem:[%s1 + $0x400] sm:$0xff]
        %v580 = vld [vmem:[%s1 + $0x408] sm:$0xff]
        %v581 = vld [vmem:[%s1 + $0x410] sm:$0xff]
        %v582 = vld [vmem:[%s1 + $0x418] sm:$0xff]
        %v583 = vld [vmem:[%s1 + $0x420] sm:$0xff]
        %v584 = vld [vmem:[%s1 + $0x428] sm:$0xff]
        %v585 = vld [vmem:[%s1 + $0x430] sm:$0xff]
        %v586 = vld [vmem:[%s1 + $0x438] sm:$0xff]
        %v587 = vld [vmem:[%s1 + $0x440] sm:$0xff]
        %v588 = vld [vmem:[%s1 + $0x448] sm:$0xff]
        %v589 = vld [vmem:[%s1 + $0x450] sm:$0xff]
        %v590 = vld [vmem:[%s1 + $0x458] sm:$0xff]
        %v591 = vld [vmem:[%s1 + $0x460] sm:$0xff]
        %v592 = vld [vmem:[%s1 + $0x468] sm:$0xff]
        %v593 = vld [vmem:[%s1 + $0x470] sm:$0xff]
        %v594 = vld [vmem:[%s1 + $0x478] sm:$0xff]
        %v595 = vld [vmem:[%s1 + $0x480] sm:$0xff]
        %v596 = vld [vmem:[%s1 + $0x488] sm:$0xff]
        %v597 = vld [vmem:[%s1 + $0x490] sm:$0xff]
        %v598 = vld [vmem:[%s1 + $0x498] sm:$0xff]
        %v599 = vld [vmem:[%s1 + $0x4a0] sm:$0xff]
        %v600 = vld [vmem:[%s1 + $0x4a8] sm:$0xff]
        %v601 = vld [vmem:[%s1 + $0x4b0] sm:$0xff]
        %v602 = vld [vmem:[%s1 + $0x4b8] sm:$0xff]
        %v603 = vld [vmem:[%s1 + $0x4c0] sm:$0xff]
        %v604 = vld [vmem:[%s1 + $0x4c8] sm:$0xff]
        %v605 = vld [vmem:[%s1 + $0x4d0] sm:$0xff]
        %v606 = vld [vmem:[%s1 + $0x4d8] sm:$0xff]
        %v607 = vld [vmem:[%s1 + $0x4e0] sm:$0xff]
        %v608 = vld [vmem:[%s1 + $0x4e8] sm:$0xff]
        %v609 = vld [vmem:[%s1 + $0x4f0] sm:$0xff]
        %v610 = vld [vmem:[%s1 + $0x4f8] sm:$0xff]
        %v611 = vld [vmem:[%s1 + $0x500] sm:$0xff]
        %v612 = vld [vmem:[%s1 + $0x508] sm:$0xff]
        %v613 = vld [vmem:[%s1 + $0x510] sm:$0xff]
        %v614 = vld [vmem:[%s1 + $0x518] sm:$0xff]
        %v615 = vld [vmem:[%s1 + $0x520] sm:$0xff]
        %v616 = vld [vmem:[%s1 + $0x528] sm:$0xff]
        %v617 = vld [vmem:[%s1 + $0x530] sm:$0xff]
        %v618 = vld [vmem:[%s1 + $0x538] sm:$0xff]
        %v619 = vld [vmem:[%s1 + $0x540] sm:$0xff]
        %v620 = vld [vmem:[%s1 + $0x548] sm:$0xff]
        %v621 = vld [vmem:[%s1 + $0x550] sm:$0xff]
        %v622 = vld [vmem:[%s1 + $0x558] sm:$0xff]
        %v623 = vld [vmem:[%s1 + $0x560] sm:$0xff]
        %v624 = vld [vmem:[%s1 + $0x568] sm:$0xff]
        %v625 = vld [vmem:[%s1 + $0x570] sm:$0xff]
        %v626 = vld [vmem:[%s1 + $0x578] sm:$0xff]
        %v627 = vld [vmem:[%s1 + $0x580] sm:$0xff]
        %v628 = vld [vmem:[%s1 + $0x588] sm:$0xff]
        %v629 = vld [vmem:[%s1 + $0x590] sm:$0xff]
        %v630 = vld [vmem:[%s1 + $0x598] sm:$0xff]
        %v631 = vld [vmem:[%s1 + $0x5a0] sm:$0xff]
        %v632 = vld [vmem:[%s1 + $0x5a8] sm:$0xff]
        %v633 = vld [vmem:[%s1 + $0x5b0] sm:$0xff]
        %v634 = vld [vmem:[%s1 + $0x5b8] sm:$0xff]
        %v635 = vld [vmem:[%s1 + $0x5c0] sm:$0xff]
        %v636 = vld [vmem:[%s1 + $0x5c8] sm:$0xff]
        %v637 = vld [vmem:[%s1 + $0x5d0] sm:$0xff]
        %v638 = vld [vmem:[%s1 + $0x5d8] sm:$0xff]
        %v639 = vld [vmem:[%s1 + $0x5e0] sm:$0xff]
        %v640 = vld [vmem:[%s1 + $0x5e8] sm:$0xff]
        %v641 = vld [vmem:[%s1 + $0x5f0] sm:$0xff]
        %v642 = vld [vmem:[%s1 + $0x5f8] sm:$0xff]
        %v643 = vld [vmem:[%s1 + $0x600] sm:$0xff]
        %v644 = vld [vmem:[%s1 + $0x608] sm:$0xff]
        %v645 = vld [vmem:[%s1 + $0x610] sm:$0xff]
        %v646 = vld [vmem:[%s1 + $0x618] sm:$0xff]
        %v647 = vld [vmem:[%s1 + $0x620] sm:$0xff]
        %v648 = vld [vmem:[%s1 + $0x628] sm:$0xff]
        %v649 = vld [vmem:[%s1 + $0x630] sm:$0xff]
        %v650 = vld [vmem:[%s1 + $0x638] sm:$0xff]
        %v651 = vld [vmem:[%s2] sm:$0xff]
        %v653 = vlaneseq
        %v654 = vshrl.u32 %v653, 7
        %v655 = vsub.s32 0, %v654
        %v656 = vrot.slane %v651, %v655
        %v657 = vlaneseq
        %v658 = vshrl.u32 %v657, 7
        %v659 = vsub.s32 1, %v658
        %v660 = vrot.slane %v651, %v659
        %v661 = vlaneseq
        %v662 = vshrl.u32 %v661, 7
        %v663 = vsub.s32 2, %v662
        %v664 = vrot.slane %v651, %v663
        %v665 = vlaneseq
        %v666 = vshrl.u32 %v665, 7
        %v667 = vsub.s32 3, %v666
        %v668 = vrot.slane %v651, %v667
        %v669 = vlaneseq
        %v670 = vshrl.u32 %v669, 7
        %v671 = vsub.s32 4, %v670
        %v672 = vrot.slane %v651, %v671
        %v673 = vlaneseq
        %v674 = vshrl.u32 %v673, 7
        %v675 = vsub.s32 5, %v674
        %v676 = vrot.slane %v651, %v675
        %v677 = vlaneseq
        %v678 = vshrl.u32 %v677, 7
        %v679 = vsub.s32 6, %v678
        %v680 = vrot.slane %v651, %v679
        %v681 = vlaneseq
        %v682 = vshrl.u32 %v681, 7
        %v683 = vsub.s32 7, %v682
        %v684 = vrot.slane %v651, %v683
        %v893 = vunpack.c.l.b16 %v451
        %v894 = vunpack.c.h.b16 %v451
        %v895 = vunpack.c.l.b16 %v452
        %v896 = vunpack.c.h.b16 %v452
        %v897 = vunpack.c.l.b16 %v453
        %v898 = vunpack.c.h.b16 %v453
        %v899 = vunpack.c.l.b16 %v454
        %v900 = vunpack.c.h.b16 %v454
        %v901 = vunpack.c.l.b16 %v455
        %v902 = vunpack.c.h.b16 %v455
        %v903 = vunpack.c.l.b16 %v456
        %v904 = vunpack.c.h.b16 %v456
        %v905 = vunpack.c.l.b16 %v457
        %v906 = vunpack.c.h.b16 %v457
        %v907 = vunpack.c.l.b16 %v458
        %v908 = vunpack.c.h.b16 %v458
        %v909 = vunpack.c.l.b16 %v459
        %v910 = vunpack.c.h.b16 %v459
        %v911 = vunpack.c.l.b16 %v460
        %v912 = vunpack.c.h.b16 %v460
        %v913 = vunpack.c.l.b16 %v461
        %v914 = vunpack.c.h.b16 %v461
        %v915 = vunpack.c.l.b16 %v462
        %v916 = vunpack.c.h.b16 %v462
        %v917 = vunpack.c.l.b16 %v463
        %v918 = vunpack.c.h.b16 %v463
        %v919 = vunpack.c.l.b16 %v464
        %v920 = vunpack.c.h.b16 %v464
        %v921 = vunpack.c.l.b16 %v465
        %v922 = vunpack.c.h.b16 %v465
        %v923 = vunpack.c.l.b16 %v466
        %v924 = vunpack.c.h.b16 %v466
        %v925 = vunpack.c.l.b16 %v467
        %v926 = vunpack.c.h.b16 %v467
        %v927 = vunpack.c.l.b16 %v468
        %v928 = vunpack.c.h.b16 %v468
        %v929 = vunpack.c.l.b16 %v469
        %v930 = vunpack.c.h.b16 %v469
        %v931 = vunpack.c.l.b16 %v470
        %v932 = vunpack.c.h.b16 %v470
        %v933 = vunpack.c.l.b16 %v471
        %v934 = vunpack.c.h.b16 %v471
        %v935 = vunpack.c.l.b16 %v472
        %v936 = vunpack.c.h.b16 %v472
        %v937 = vunpack.c.l.b16 %v473
        %v938 = vunpack.c.h.b16 %v473
        %v939 = vunpack.c.l.b16 %v474
        %v940 = vunpack.c.h.b16 %v474
        %v941 = vunpack.c.l.b16 %v475
        %v942 = vunpack.c.h.b16 %v475
        %v943 = vunpack.c.l.b16 %v476
        %v944 = vunpack.c.h.b16 %v476
        %v945 = vunpack.c.l.b16 %v477
        %v946 = vunpack.c.h.b16 %v477
        %v947 = vunpack.c.l.b16 %v478
        %v948 = vunpack.c.h.b16 %v478
        %v949 = vunpack.c.l.b16 %v479
        %v950 = vunpack.c.h.b16 %v479
        %v951 = vunpack.c.l.b16 %v480
        %v952 = vunpack.c.h.b16 %v480
        %v953 = vunpack.c.l.b16 %v481
        %v954 = vunpack.c.h.b16 %v481
        %v955 = vunpack.c.l.b16 %v482
        %v956 = vunpack.c.h.b16 %v482
        %v957 = vunpack.c.l.b16 %v483
        %v958 = vunpack.c.h.b16 %v483
        %v959 = vunpack.c.l.b16 %v484
        %v960 = vunpack.c.h.b16 %v484
        %v961 = vunpack.c.l.b16 %v485
        %v962 = vunpack.c.h.b16 %v485
        %v963 = vunpack.c.l.b16 %v486
        %v964 = vunpack.c.h.b16 %v486
        %v965 = vunpack.c.l.b16 %v487
        %v966 = vunpack.c.h.b16 %v487
        %v967 = vunpack.c.l.b16 %v488
        %v968 = vunpack.c.h.b16 %v488
        %v969 = vunpack.c.l.b16 %v489
        %v970 = vunpack.c.h.b16 %v489
        %v971 = vunpack.c.l.b16 %v490
        %v972 = vunpack.c.h.b16 %v490
        %v973 = vunpack.c.l.b16 %v491
        %v974 = vunpack.c.h.b16 %v491
        %v975 = vunpack.c.l.b16 %v492
        %v976 = vunpack.c.h.b16 %v492
        %v977 = vunpack.c.l.b16 %v493
        %v978 = vunpack.c.h.b16 %v493
        %v979 = vunpack.c.l.b16 %v494
        %v980 = vunpack.c.h.b16 %v494
        %v981 = vunpack.c.l.b16 %v495
        %v982 = vunpack.c.h.b16 %v495
        %v983 = vunpack.c.l.b16 %v496
        %v984 = vunpack.c.h.b16 %v496
        %v985 = vunpack.c.l.b16 %v497
        %v986 = vunpack.c.h.b16 %v497
        %v987 = vunpack.c.l.b16 %v498
        %v988 = vunpack.c.h.b16 %v498
        %v989 = vunpack.c.l.b16 %v499
        %v990 = vunpack.c.h.b16 %v499
        %v991 = vunpack.c.l.b16 %v500
        %v992 = vunpack.c.h.b16 %v500
        %v993 = vunpack.c.l.b16 %v501
        %v994 = vunpack.c.h.b16 %v501
        %v995 = vunpack.c.l.b16 %v502
        %v996 = vunpack.c.h.b16 %v502
        %v997 = vunpack.c.l.b16 %v503
        %v998 = vunpack.c.h.b16 %v503
        %v999 = vunpack.c.l.b16 %v504
        %v1000 = vunpack.c.h.b16 %v504
        %v1001 = vunpack.c.l.b16 %v505
        %v1002 = vunpack.c.h.b16 %v505
        %v1003 = vunpack.c.l.b16 %v506
        %v1004 = vunpack.c.h.b16 %v506
        %v1005 = vunpack.c.l.b16 %v507
        %v1006 = vunpack.c.h.b16 %v507
        %v1007 = vunpack.c.l.b16 %v508
        %v1008 = vunpack.c.h.b16 %v508
        %v1009 = vunpack.c.l.b16 %v509
        %v1010 = vunpack.c.h.b16 %v509
        %v1011 = vunpack.c.l.b16 %v510
        %v1012 = vunpack.c.h.b16 %v510
        %v1013 = vunpack.c.l.b16 %v511
        %v1014 = vunpack.c.h.b16 %v511
        %v1015 = vunpack.c.l.b16 %v512
        %v1016 = vunpack.c.h.b16 %v512
        %v1017 = vunpack.c.l.b16 %v513
        %v1018 = vunpack.c.h.b16 %v513
        %v1019 = vunpack.c.l.b16 %v514
        %v1020 = vunpack.c.h.b16 %v514
        %v1021 = vunpack.c.l.b16 %v515
        %v1022 = vunpack.c.h.b16 %v515
        %v1023 = vunpack.c.l.b16 %v516
        %v1024 = vunpack.c.h.b16 %v516
        %v1025 = vunpack.c.l.b16 %v517
        %v1026 = vunpack.c.h.b16 %v517
        %v1027 = vunpack.c.l.b16 %v518
        %v1028 = vunpack.c.h.b16 %v518
        %v1029 = vunpack.c.l.b16 %v519
        %v1030 = vunpack.c.h.b16 %v519
        %v1031 = vunpack.c.l.b16 %v520
        %v1032 = vunpack.c.h.b16 %v520
        %v1033 = vunpack.c.l.b16 %v521
        %v1034 = vunpack.c.h.b16 %v521
        %v1035 = vunpack.c.l.b16 %v522
        %v1036 = vunpack.c.h.b16 %v522
        %v1037 = vunpack.c.l.b16 %v523
        %v1038 = vunpack.c.h.b16 %v523
        %v1039 = vunpack.c.l.b16 %v524
        %v1040 = vunpack.c.h.b16 %v524
        %v1041 = vunpack.c.l.b16 %v525
        %v1042 = vunpack.c.h.b16 %v525
        %v1043 = vunpack.c.l.b16 %v526
        %v1044 = vunpack.c.h.b16 %v526
        %v1045 = vunpack.c.l.b16 %v527
        %v1046 = vunpack.c.h.b16 %v527
        %v1047 = vunpack.c.l.b16 %v528
        %v1048 = vunpack.c.h.b16 %v528
        %v1049 = vunpack.c.l.b16 %v529
        %v1050 = vunpack.c.h.b16 %v529
        %v1051 = vunpack.c.l.b16 %v530
        %v1052 = vunpack.c.h.b16 %v530
        %v1053 = vunpack.c.l.b16 %v531
        %v1054 = vunpack.c.h.b16 %v531
        %v1055 = vunpack.c.l.b16 %v532
        %v1056 = vunpack.c.h.b16 %v532
        %v1057 = vunpack.c.l.b16 %v533
        %v1058 = vunpack.c.h.b16 %v533
        %v1059 = vunpack.c.l.b16 %v534
        %v1060 = vunpack.c.h.b16 %v534
        %v1061 = vunpack.c.l.b16 %v535
        %v1062 = vunpack.c.h.b16 %v535
        %v1063 = vunpack.c.l.b16 %v536
        %v1064 = vunpack.c.h.b16 %v536
        %v1065 = vunpack.c.l.b16 %v537
        %v1066 = vunpack.c.h.b16 %v537
        %v1067 = vunpack.c.l.b16 %v538
        %v1068 = vunpack.c.h.b16 %v538
        %v1069 = vunpack.c.l.b16 %v539
        %v1070 = vunpack.c.h.b16 %v539
        %v1071 = vunpack.c.l.b16 %v540
        %v1072 = vunpack.c.h.b16 %v540
        %v1073 = vunpack.c.l.b16 %v541
        %v1074 = vunpack.c.h.b16 %v541
        %v1075 = vunpack.c.l.b16 %v542
        %v1076 = vunpack.c.h.b16 %v542
        %v1077 = vunpack.c.l.b16 %v543
        %v1078 = vunpack.c.h.b16 %v543
        %v1079 = vunpack.c.l.b16 %v544
        %v1080 = vunpack.c.h.b16 %v544
        %v1081 = vunpack.c.l.b16 %v545
        %v1082 = vunpack.c.h.b16 %v545
        %v1083 = vunpack.c.l.b16 %v546
        %v1084 = vunpack.c.h.b16 %v546
        %v1085 = vunpack.c.l.b16 %v547
        %v1086 = vunpack.c.h.b16 %v547
        %v1087 = vunpack.c.l.b16 %v548
        %v1088 = vunpack.c.h.b16 %v548
        %v1089 = vunpack.c.l.b16 %v549
        %v1090 = vunpack.c.h.b16 %v549
        %v1091 = vunpack.c.l.b16 %v550
        %v1092 = vunpack.c.h.b16 %v550
        %v1093 = vunpack.c.l.b16 %v551
        %v1094 = vunpack.c.h.b16 %v551
        %v1095 = vunpack.c.l.b16 %v552
        %v1096 = vunpack.c.h.b16 %v552
        %v1097 = vunpack.c.l.b16 %v553
        %v1098 = vunpack.c.h.b16 %v553
        %v1099 = vunpack.c.l.b16 %v554
        %v1100 = vunpack.c.h.b16 %v554
        %v1101 = vunpack.c.l.b16 %v555
        %v1102 = vunpack.c.h.b16 %v555
        %v1103 = vunpack.c.l.b16 %v556
        %v1104 = vunpack.c.h.b16 %v556
        %v1105 = vunpack.c.l.b16 %v557
        %v1106 = vunpack.c.h.b16 %v557
        %v1107 = vunpack.c.l.b16 %v558
        %v1108 = vunpack.c.h.b16 %v558
        %v1109 = vunpack.c.l.b16 %v559
        %v1110 = vunpack.c.h.b16 %v559
        %v1111 = vunpack.c.l.b16 %v560
        %v1112 = vunpack.c.h.b16 %v560
        %v1113 = vunpack.c.l.b16 %v561
        %v1114 = vunpack.c.h.b16 %v561
        %v1115 = vunpack.c.l.b16 %v562
        %v1116 = vunpack.c.h.b16 %v562
        %v1117 = vunpack.c.l.b16 %v563
        %v1118 = vunpack.c.h.b16 %v563
        %v1119 = vunpack.c.l.b16 %v564
        %v1120 = vunpack.c.h.b16 %v564
        %v1121 = vunpack.c.l.b16 %v565
        %v1122 = vunpack.c.h.b16 %v565
        %v1123 = vunpack.c.l.b16 %v566
        %v1124 = vunpack.c.h.b16 %v566
        %v1125 = vunpack.c.l.b16 %v567
        %v1126 = vunpack.c.h.b16 %v567
        %v1127 = vunpack.c.l.b16 %v568
        %v1128 = vunpack.c.h.b16 %v568
        %v1129 = vunpack.c.l.b16 %v569
        %v1130 = vunpack.c.h.b16 %v569
        %v1131 = vunpack.c.l.b16 %v570
        %v1132 = vunpack.c.h.b16 %v570
        %v1133 = vunpack.c.l.b16 %v571
        %v1134 = vunpack.c.h.b16 %v571
        %v1135 = vunpack.c.l.b16 %v572
        %v1136 = vunpack.c.h.b16 %v572
        %v1137 = vunpack.c.l.b16 %v573
        %v1138 = vunpack.c.h.b16 %v573
        %v1139 = vunpack.c.l.b16 %v574
        %v1140 = vunpack.c.h.b16 %v574
        %v1141 = vunpack.c.l.b16 %v575
        %v1142 = vunpack.c.h.b16 %v575
        %v1143 = vunpack.c.l.b16 %v576
        %v1144 = vunpack.c.h.b16 %v576
        %v1145 = vunpack.c.l.b16 %v577
        %v1146 = vunpack.c.h.b16 %v577
        %v1147 = vunpack.c.l.b16 %v578
        %v1148 = vunpack.c.h.b16 %v578
        %v1149 = vunpack.c.l.b16 %v579
        %v1150 = vunpack.c.h.b16 %v579
        %v1151 = vunpack.c.l.b16 %v580
        %v1152 = vunpack.c.h.b16 %v580
        %v1153 = vunpack.c.l.b16 %v581
        %v1154 = vunpack.c.h.b16 %v581
        %v1155 = vunpack.c.l.b16 %v582
        %v1156 = vunpack.c.h.b16 %v582
        %v1157 = vunpack.c.l.b16 %v583
        %v1158 = vunpack.c.h.b16 %v583
        %v1159 = vunpack.c.l.b16 %v584
        %v1160 = vunpack.c.h.b16 %v584
        %v1161 = vunpack.c.l.b16 %v585
        %v1162 = vunpack.c.h.b16 %v585
        %v1163 = vunpack.c.l.b16 %v586
        %v1164 = vunpack.c.h.b16 %v586
        %v1165 = vunpack.c.l.b16 %v587
        %v1166 = vunpack.c.h.b16 %v587
        %v1167 = vunpack.c.l.b16 %v588
        %v1168 = vunpack.c.h.b16 %v588
        %v1169 = vunpack.c.l.b16 %v589
        %v1170 = vunpack.c.h.b16 %v589
        %v1171 = vunpack.c.l.b16 %v590
        %v1172 = vunpack.c.h.b16 %v590
        %v1173 = vunpack.c.l.b16 %v591
        %v1174 = vunpack.c.h.b16 %v591
        %v1175 = vunpack.c.l.b16 %v592
        %v1176 = vunpack.c.h.b16 %v592
        %v1177 = vunpack.c.l.b16 %v593
        %v1178 = vunpack.c.h.b16 %v593
        %v1179 = vunpack.c.l.b16 %v594
        %v1180 = vunpack.c.h.b16 %v594
        %v1181 = vunpack.c.l.b16 %v595
        %v1182 = vunpack.c.h.b16 %v595
        %v1183 = vunpack.c.l.b16 %v596
        %v1184 = vunpack.c.h.b16 %v596
        %v1185 = vunpack.c.l.b16 %v597
        %v1186 = vunpack.c.h.b16 %v597
        %v1187 = vunpack.c.l.b16 %v598
        %v1188 = vunpack.c.h.b16 %v598
        %v1189 = vunpack.c.l.b16 %v599
        %v1190 = vunpack.c.h.b16 %v599
        %v1191 = vunpack.c.l.b16 %v600
        %v1192 = vunpack.c.h.b16 %v600
        %v1193 = vunpack.c.l.b16 %v601
        %v1194 = vunpack.c.h.b16 %v601
        %v1195 = vunpack.c.l.b16 %v602
        %v1196 = vunpack.c.h.b16 %v602
        %v1197 = vunpack.c.l.b16 %v603
        %v1198 = vunpack.c.h.b16 %v603
        %v1199 = vunpack.c.l.b16 %v604
        %v1200 = vunpack.c.h.b16 %v604
        %v1201 = vunpack.c.l.b16 %v605
        %v1202 = vunpack.c.h.b16 %v605
        %v1203 = vunpack.c.l.b16 %v606
        %v1204 = vunpack.c.h.b16 %v606
        %v1205 = vunpack.c.l.b16 %v607
        %v1206 = vunpack.c.h.b16 %v607
        %v1207 = vunpack.c.l.b16 %v608
        %v1208 = vunpack.c.h.b16 %v608
        %v1209 = vunpack.c.l.b16 %v609
        %v1210 = vunpack.c.h.b16 %v609
        %v1211 = vunpack.c.l.b16 %v610
        %v1212 = vunpack.c.h.b16 %v610
        %v1213 = vunpack.c.l.b16 %v611
        %v1214 = vunpack.c.h.b16 %v611
        %v1215 = vunpack.c.l.b16 %v612
        %v1216 = vunpack.c.h.b16 %v612
        %v1217 = vunpack.c.l.b16 %v613
        %v1218 = vunpack.c.h.b16 %v613
        %v1219 = vunpack.c.l.b16 %v614
        %v1220 = vunpack.c.h.b16 %v614
        %v1221 = vunpack.c.l.b16 %v615
        %v1222 = vunpack.c.h.b16 %v615
        %v1223 = vunpack.c.l.b16 %v616
        %v1224 = vunpack.c.h.b16 %v616
        %v1225 = vunpack.c.l.b16 %v617
        %v1226 = vunpack.c.h.b16 %v617
        %v1227 = vunpack.c.l.b16 %v618
        %v1228 = vunpack.c.h.b16 %v618
        %v1229 = vunpack.c.l.b16 %v619
        %v1230 = vunpack.c.h.b16 %v619
        %v1231 = vunpack.c.l.b16 %v620
        %v1232 = vunpack.c.h.b16 %v620
        %v1233 = vunpack.c.l.b16 %v621
        %v1234 = vunpack.c.h.b16 %v621
        %v1235 = vunpack.c.l.b16 %v622
        %v1236 = vunpack.c.h.b16 %v622
        %v1237 = vunpack.c.l.b16 %v623
        %v1238 = vunpack.c.h.b16 %v623
        %v1239 = vunpack.c.l.b16 %v624
        %v1240 = vunpack.c.h.b16 %v624
        %v1241 = vunpack.c.l.b16 %v625
        %v1242 = vunpack.c.h.b16 %v625
        %v1243 = vunpack.c.l.b16 %v626
        %v1244 = vunpack.c.h.b16 %v626
        %v1245 = vunpack.c.l.b16 %v627
        %v1246 = vunpack.c.h.b16 %v627
        %v1247 = vunpack.c.l.b16 %v628
        %v1248 = vunpack.c.h.b16 %v628
        %v1249 = vunpack.c.l.b16 %v629
        %v1250 = vunpack.c.h.b16 %v629
        %v1251 = vunpack.c.l.b16 %v630
        %v1252 = vunpack.c.h.b16 %v630
        %v1253 = vunpack.c.l.b16 %v631
        %v1254 = vunpack.c.h.b16 %v631
        %v1255 = vunpack.c.l.b16 %v632
        %v1256 = vunpack.c.h.b16 %v632
        %v1257 = vunpack.c.l.b16 %v633
        %v1258 = vunpack.c.h.b16 %v633
        %v1259 = vunpack.c.l.b16 %v634
        %v1260 = vunpack.c.h.b16 %v634
        %v1261 = vunpack.c.l.b16 %v635
        %v1262 = vunpack.c.h.b16 %v635
        %v1263 = vunpack.c.l.b16 %v636
        %v1264 = vunpack.c.h.b16 %v636
        %v1265 = vunpack.c.l.b16 %v637
        %v1266 = vunpack.c.h.b16 %v637
        %v1267 = vunpack.c.l.b16 %v638
        %v1268 = vunpack.c.h.b16 %v638
        %v1269 = vunpack.c.l.b16 %v639
        %v1270 = vunpack.c.h.b16 %v639
        %v1271 = vunpack.c.l.b16 %v640
        %v1272 = vunpack.c.h.b16 %v640
        %v1273 = vunpack.c.l.b16 %v641
        %v1274 = vunpack.c.h.b16 %v641
        %v1275 = vunpack.c.l.b16 %v642
        %v1276 = vunpack.c.h.b16 %v642
        %v1277 = vunpack.c.l.b16 %v643
        %v1278 = vunpack.c.h.b16 %v643
        %v1279 = vunpack.c.l.b16 %v644
        %v1280 = vunpack.c.h.b16 %v644
        %v1281 = vunpack.c.l.b16 %v645
        %v1282 = vunpack.c.h.b16 %v645
        %v1283 = vunpack.c.l.b16 %v646
        %v1284 = vunpack.c.h.b16 %v646
        %v1285 = vunpack.c.l.b16 %v647
        %v1286 = vunpack.c.h.b16 %v647
        %v1287 = vunpack.c.l.b16 %v648
        %v1288 = vunpack.c.h.b16 %v648
        %v1289 = vunpack.c.l.b16 %v649
        %v1290 = vunpack.c.h.b16 %v649
        %v1291 = vunpack.c.l.b16 %v650
        %v1292 = vunpack.c.h.b16 %v650
        %v1293 = vpack.c.b16 %v901, %v893
        %v1294 = vpack.c.b16 %v902, %v894
        %v1295 = vpack.c.b16 %v903, %v895
        %v1296 = vpack.c.b16 %v904, %v896
        %v1297 = vpack.c.b16 %v905, %v897
        %v1298 = vpack.c.b16 %v906, %v898
        %v1299 = vpack.c.b16 %v907, %v899
        %v1300 = vpack.c.b16 %v908, %v900
        %v1301 = vpack.c.b16 %v917, %v909
        %v1302 = vpack.c.b16 %v918, %v910
        %v1303 = vpack.c.b16 %v919, %v911
        %v1304 = vpack.c.b16 %v920, %v912
        %v1305 = vpack.c.b16 %v921, %v913
        %v1306 = vpack.c.b16 %v922, %v914
        %v1307 = vpack.c.b16 %v923, %v915
        %v1308 = vpack.c.b16 %v924, %v916
        %v1309 = vpack.c.b16 %v933, %v925
        %v1310 = vpack.c.b16 %v934, %v926
        %v1311 = vpack.c.b16 %v935, %v927
        %v1312 = vpack.c.b16 %v936, %v928
        %v1313 = vpack.c.b16 %v937, %v929
        %v1314 = vpack.c.b16 %v938, %v930
        %v1315 = vpack.c.b16 %v939, %v931
        %v1316 = vpack.c.b16 %v940, %v932
        %v1317 = vpack.c.b16 %v949, %v941
        %v1318 = vpack.c.b16 %v950, %v942
        %v1319 = vpack.c.b16 %v951, %v943
        %v1320 = vpack.c.b16 %v952, %v944
        %v1321 = vpack.c.b16 %v953, %v945
        %v1322 = vpack.c.b16 %v954, %v946
        %v1323 = vpack.c.b16 %v955, %v947
        %v1324 = vpack.c.b16 %v956, %v948
        %v1325 = vpack.c.b16 %v965, %v957
        %v1326 = vpack.c.b16 %v966, %v958
        %v1327 = vpack.c.b16 %v967, %v959
        %v1328 = vpack.c.b16 %v968, %v960
        %v1329 = vpack.c.b16 %v969, %v961
        %v1330 = vpack.c.b16 %v970, %v962
        %v1331 = vpack.c.b16 %v971, %v963
        %v1332 = vpack.c.b16 %v972, %v964
        %v1333 = vpack.c.b16 %v981, %v973
        %v1334 = vpack.c.b16 %v982, %v974
        %v1335 = vpack.c.b16 %v983, %v975
        %v1336 = vpack.c.b16 %v984, %v976
        %v1337 = vpack.c.b16 %v985, %v977
        %v1338 = vpack.c.b16 %v986, %v978
        %v1339 = vpack.c.b16 %v987, %v979
        %v1340 = vpack.c.b16 %v988, %v980
        %v1341 = vpack.c.b16 %v997, %v989
        %v1342 = vpack.c.b16 %v998, %v990
        %v1343 = vpack.c.b16 %v999, %v991
        %v1344 = vpack.c.b16 %v1000, %v992
        %v1345 = vpack.c.b16 %v1001, %v993
        %v1346 = vpack.c.b16 %v1002, %v994
        %v1347 = vpack.c.b16 %v1003, %v995
        %v1348 = vpack.c.b16 %v1004, %v996
        %v1349 = vpack.c.b16 %v1013, %v1005
        %v1350 = vpack.c.b16 %v1014, %v1006
        %v1351 = vpack.c.b16 %v1015, %v1007
        %v1352 = vpack.c.b16 %v1016, %v1008
        %v1353 = vpack.c.b16 %v1017, %v1009
        %v1354 = vpack.c.b16 %v1018, %v1010
        %v1355 = vpack.c.b16 %v1019, %v1011
        %v1356 = vpack.c.b16 %v1020, %v1012
        %v1357 = vpack.c.b16 %v1029, %v1021
        %v1358 = vpack.c.b16 %v1030, %v1022
        %v1359 = vpack.c.b16 %v1031, %v1023
        %v1360 = vpack.c.b16 %v1032, %v1024
        %v1361 = vpack.c.b16 %v1033, %v1025
        %v1362 = vpack.c.b16 %v1034, %v1026
        %v1363 = vpack.c.b16 %v1035, %v1027
        %v1364 = vpack.c.b16 %v1036, %v1028
        %v1365 = vpack.c.b16 %v1045, %v1037
        %v1366 = vpack.c.b16 %v1046, %v1038
        %v1367 = vpack.c.b16 %v1047, %v1039
        %v1368 = vpack.c.b16 %v1048, %v1040
        %v1369 = vpack.c.b16 %v1049, %v1041
        %v1370 = vpack.c.b16 %v1050, %v1042
        %v1371 = vpack.c.b16 %v1051, %v1043
        %v1372 = vpack.c.b16 %v1052, %v1044
        %v1373 = vpack.c.b16 %v1061, %v1053
        %v1374 = vpack.c.b16 %v1062, %v1054
        %v1375 = vpack.c.b16 %v1063, %v1055
        %v1376 = vpack.c.b16 %v1064, %v1056
        %v1377 = vpack.c.b16 %v1065, %v1057
        %v1378 = vpack.c.b16 %v1066, %v1058
        %v1379 = vpack.c.b16 %v1067, %v1059
        %v1380 = vpack.c.b16 %v1068, %v1060
        %v1381 = vpack.c.b16 %v1077, %v1069
        %v1382 = vpack.c.b16 %v1078, %v1070
        %v1383 = vpack.c.b16 %v1079, %v1071
        %v1384 = vpack.c.b16 %v1080, %v1072
        %v1385 = vpack.c.b16 %v1081, %v1073
        %v1386 = vpack.c.b16 %v1082, %v1074
        %v1387 = vpack.c.b16 %v1083, %v1075
        %v1388 = vpack.c.b16 %v1084, %v1076
        %v1389 = vpack.c.b16 %v1093, %v1085
        %v1390 = vpack.c.b16 %v1094, %v1086
        %v1391 = vpack.c.b16 %v1095, %v1087
        %v1392 = vpack.c.b16 %v1096, %v1088
        %v1393 = vpack.c.b16 %v1097, %v1089
        %v1394 = vpack.c.b16 %v1098, %v1090
        %v1395 = vpack.c.b16 %v1099, %v1091
        %v1396 = vpack.c.b16 %v1100, %v1092
        %v1397 = vpack.c.b16 %v1109, %v1101
        %v1398 = vpack.c.b16 %v1110, %v1102
        %v1399 = vpack.c.b16 %v1111, %v1103
        %v1400 = vpack.c.b16 %v1112, %v1104
        %v1401 = vpack.c.b16 %v1113, %v1105
        %v1402 = vpack.c.b16 %v1114, %v1106
        %v1403 = vpack.c.b16 %v1115, %v1107
        %v1404 = vpack.c.b16 %v1116, %v1108
        %v1405 = vpack.c.b16 %v1125, %v1117
        %v1406 = vpack.c.b16 %v1126, %v1118
        %v1407 = vpack.c.b16 %v1127, %v1119
        %v1408 = vpack.c.b16 %v1128, %v1120
        %v1409 = vpack.c.b16 %v1129, %v1121
        %v1410 = vpack.c.b16 %v1130, %v1122
        %v1411 = vpack.c.b16 %v1131, %v1123
        %v1412 = vpack.c.b16 %v1132, %v1124
        %v1413 = vpack.c.b16 %v1141, %v1133
        %v1414 = vpack.c.b16 %v1142, %v1134
        %v1415 = vpack.c.b16 %v1143, %v1135
        %v1416 = vpack.c.b16 %v1144, %v1136
        %v1417 = vpack.c.b16 %v1145, %v1137
        %v1418 = vpack.c.b16 %v1146, %v1138
        %v1419 = vpack.c.b16 %v1147, %v1139
        %v1420 = vpack.c.b16 %v1148, %v1140
        %v1421 = vpack.c.b16 %v1157, %v1149
        %v1422 = vpack.c.b16 %v1158, %v1150
        %v1423 = vpack.c.b16 %v1159, %v1151
        %v1424 = vpack.c.b16 %v1160, %v1152
        %v1425 = vpack.c.b16 %v1161, %v1153
        %v1426 = vpack.c.b16 %v1162, %v1154
        %v1427 = vpack.c.b16 %v1163, %v1155
        %v1428 = vpack.c.b16 %v1164, %v1156
        %v1429 = vpack.c.b16 %v1173, %v1165
        %v1430 = vpack.c.b16 %v1174, %v1166
        %v1431 = vpack.c.b16 %v1175, %v1167
        %v1432 = vpack.c.b16 %v1176, %v1168
        %v1433 = vpack.c.b16 %v1177, %v1169
        %v1434 = vpack.c.b16 %v1178, %v1170
        %v1435 = vpack.c.b16 %v1179, %v1171
        %v1436 = vpack.c.b16 %v1180, %v1172
        %v1437 = vpack.c.b16 %v1189, %v1181
        %v1438 = vpack.c.b16 %v1190, %v1182
        %v1439 = vpack.c.b16 %v1191, %v1183
        %v1440 = vpack.c.b16 %v1192, %v1184
        %v1441 = vpack.c.b16 %v1193, %v1185
        %v1442 = vpack.c.b16 %v1194, %v1186
        %v1443 = vpack.c.b16 %v1195, %v1187
        %v1444 = vpack.c.b16 %v1196, %v1188
        %v1445 = vpack.c.b16 %v1205, %v1197
        %v1446 = vpack.c.b16 %v1206, %v1198
        %v1447 = vpack.c.b16 %v1207, %v1199
        %v1448 = vpack.c.b16 %v1208, %v1200
        %v1449 = vpack.c.b16 %v1209, %v1201
        %v1450 = vpack.c.b16 %v1210, %v1202
        %v1451 = vpack.c.b16 %v1211, %v1203
        %v1452 = vpack.c.b16 %v1212, %v1204
        %v1453 = vpack.c.b16 %v1221, %v1213
        %v1454 = vpack.c.b16 %v1222, %v1214
        %v1455 = vpack.c.b16 %v1223, %v1215
        %v1456 = vpack.c.b16 %v1224, %v1216
        %v1457 = vpack.c.b16 %v1225, %v1217
        %v1458 = vpack.c.b16 %v1226, %v1218
        %v1459 = vpack.c.b16 %v1227, %v1219
        %v1460 = vpack.c.b16 %v1228, %v1220
        %v1461 = vpack.c.b16 %v1237, %v1229
        %v1462 = vpack.c.b16 %v1238, %v1230
        %v1463 = vpack.c.b16 %v1239, %v1231
        %v1464 = vpack.c.b16 %v1240, %v1232
        %v1465 = vpack.c.b16 %v1241, %v1233
        %v1466 = vpack.c.b16 %v1242, %v1234
        %v1467 = vpack.c.b16 %v1243, %v1235
        %v1468 = vpack.c.b16 %v1244, %v1236
        %v1469 = vpack.c.b16 %v1253, %v1245
        %v1470 = vpack.c.b16 %v1254, %v1246
        %v1471 = vpack.c.b16 %v1255, %v1247
        %v1472 = vpack.c.b16 %v1256, %v1248
        %v1473 = vpack.c.b16 %v1257, %v1249
        %v1474 = vpack.c.b16 %v1258, %v1250
        %v1475 = vpack.c.b16 %v1259, %v1251
        %v1476 = vpack.c.b16 %v1260, %v1252
        %v1477 = vpack.c.b16 %v1269, %v1261
        %v1478 = vpack.c.b16 %v1270, %v1262
        %v1479 = vpack.c.b16 %v1271, %v1263
        %v1480 = vpack.c.b16 %v1272, %v1264
        %v1481 = vpack.c.b16 %v1273, %v1265
        %v1482 = vpack.c.b16 %v1274, %v1266
        %v1483 = vpack.c.b16 %v1275, %v1267
        %v1484 = vpack.c.b16 %v1276, %v1268
        %v1485 = vpack.c.b16 %v1285, %v1277
        %v1486 = vpack.c.b16 %v1286, %v1278
        %v1487 = vpack.c.b16 %v1287, %v1279
        %v1488 = vpack.c.b16 %v1288, %v1280
        %v1489 = vpack.c.b16 %v1289, %v1281
        %v1490 = vpack.c.b16 %v1290, %v1282
        %v1491 = vpack.c.b16 %v1291, %v1283
        %v1492 = vpack.c.b16 %v1292, %v1284
        %vm1693 = vcmask 130048
        %v1695 = vsel %vm1693, %v390, 0
        %v1698 = vsel %vm1693, %v394, 0
        %v1701 = vsel %vm1693, %v398, 0
        %v1704 = vsel %vm1693, %v402, 0
        %v1707 = vsel %vm1693, %v406, 0
        %v1710 = vsel %vm1693, %v410, 0
        %v1713 = vsel %vm1693, %v414, 0
        %v1716 = vsel %vm1693, %v418, 0
        %v1719 = vsel %vm1693, %v422, 0
        %v1722 = vsel %vm1693, %v426, 0
        %v1725 = vsel %vm1693, %v430, 0
        %v1728 = vsel %vm1693, %v434, 0
        %v1731 = vsel %vm1693, %v438, 0
        %v1734 = vsel %vm1693, %v442, 0
        %v1737 = vsel %vm1693, %v446, 0
        %v1740 = vsel %vm1693, %v450, 0
        %1742 = vmatprep.subr.bf16.mxu0 %v1350
        %1743 = vmatpush1.bf16.msra.mxu0 %v1349
        %1744 = vmatprep.subr.bf16.mxu0 %v1342
        %1745 = vmatpush1.bf16.msra.mxu0 %v1341
        %1746 = vmatprep.subr.bf16.mxu0 %v1334
        %1747 = vmatpush1.bf16.msra.mxu0 %v1333
        %1748 = vmatprep.subr.bf16.mxu0 %v1326
        %1749 = vmatpush1.bf16.msra.mxu0 %v1325
        %1750 = vmatprep.subr.bf16.mxu0 %v1318
        %1751 = vmatpush1.bf16.msra.mxu0 %v1317
        %1752 = vmatprep.subr.bf16.mxu0 %v1310
        %1753 = vmatpush1.bf16.msra.mxu0 %v1309
        %1754 = vmatprep.subr.bf16.mxu0 %v1302
        %1755 = vmatpush1.bf16.msra.mxu0 %v1301
        %1756 = vmatprep.subr.bf16.mxu0 %v1294
        %1757 = vmatpush1.bf16.msra.mxu0 %v1293
        %1758 = vmatprep.subr.bf16.mxu0 %v1414
        %1759 = vmatpush2.bf16.msra.mxu0 %v1413
        %1760 = vmatprep.subr.bf16.mxu0 %v1406
        %1761 = vmatpush2.bf16.msra.mxu0 %v1405
        %1762 = vmatprep.subr.bf16.mxu0 %v1398
        %1763 = vmatpush2.bf16.msra.mxu0 %v1397
        %1764 = vmatprep.subr.bf16.mxu0 %v1390
        %1765 = vmatpush2.bf16.msra.mxu0 %v1389
        %1766 = vmatprep.subr.bf16.mxu0 %v1382
        %1767 = vmatpush2.bf16.msra.mxu0 %v1381
        %1768 = vmatprep.subr.bf16.mxu0 %v1374
        %1769 = vmatpush2.bf16.msra.mxu0 %v1373
        %1770 = vmatprep.subr.bf16.mxu0 %v1366
        %1771 = vmatpush2.bf16.msra.mxu0 %v1365
        %1772 = vmatprep.subr.bf16.mxu0 %v1358
        %1773 = vmatpush2.bf16.msra.mxu0 %v1357
        %1774 = vmatprep.mubr.bf16.mxu0 %v388
        %1775 = vmatmul.mubr.bf16.gmra.mxu0 %v387
        %v1776 = vpop.f32.mrf.mxu0
        %v1777 = vadd.f32 %v656, %v1776
        %v1778 = vpop.f32.mrf.mxu0
        %v1779 = vadd.f32 %v660, %v1778
        %v1780 = vpop.f32.mrf.mxu0
        %v1781 = vadd.f32 %v656, %v1780
        %v1782 = vpop.f32.mrf.mxu0
        %v1783 = vadd.f32 %v660, %v1782
        %1784 = vmatprep.mubr.bf16.mxu0 %v392
        %1785 = vmatmul.mubr.bf16.gmra.mxu0 %v391
        %v1786 = vpop.f32.mrf.mxu0
        %v1787 = vadd.f32 %v656, %v1786
        %v1788 = vpop.f32.mrf.mxu0
        %v1789 = vadd.f32 %v660, %v1788
        %v1790 = vpop.f32.mrf.mxu0
        %v1791 = vadd.f32 %v656, %v1790
        %v1792 = vpop.f32.mrf.mxu0
        %v1793 = vadd.f32 %v660, %v1792
        %1794 = vmatprep.mubr.bf16.mxu0 %v396
        %1795 = vmatmul.mubr.bf16.gmra.mxu0 %v395
        %v1796 = vpop.f32.mrf.mxu0
        %v1797 = vadd.f32 %v656, %v1796
        %v1798 = vpop.f32.mrf.mxu0
        %v1799 = vadd.f32 %v660, %v1798
        %v1800 = vpop.f32.mrf.mxu0
        %v1801 = vadd.f32 %v656, %v1800
        %v1802 = vpop.f32.mrf.mxu0
        %v1803 = vadd.f32 %v660, %v1802
        %1804 = vmatprep.mubr.bf16.mxu0 %v400
        %1805 = vmatmul.mubr.bf16.gmra.mxu0 %v399
        %v1806 = vpop.f32.mrf.mxu0
        %v1807 = vadd.f32 %v656, %v1806
        %v1808 = vpop.f32.mrf.mxu0
        %v1809 = vadd.f32 %v660, %v1808
        %v1810 = vpop.f32.mrf.mxu0
        %v1811 = vadd.f32 %v656, %v1810
        %v1812 = vpop.f32.mrf.mxu0
        %v1813 = vadd.f32 %v660, %v1812
        %1814 = vmatprep.mubr.bf16.mxu0 %v404
        %1815 = vmatmul.mubr.bf16.gmra.mxu0 %v403
        %v1816 = vpop.f32.mrf.mxu0
        %v1817 = vadd.f32 %v656, %v1816
        %v1818 = vpop.f32.mrf.mxu0
        %v1819 = vadd.f32 %v660, %v1818
        %v1820 = vpop.f32.mrf.mxu0
        %v1821 = vadd.f32 %v656, %v1820
        %v1822 = vpop.f32.mrf.mxu0
        %v1823 = vadd.f32 %v660, %v1822
        %1824 = vmatprep.mubr.bf16.mxu0 %v408
        %1825 = vmatmul.mubr.bf16.gmra.mxu0 %v407
        %v1826 = vpop.f32.mrf.mxu0
        %v1827 = vadd.f32 %v656, %v1826
        %v1828 = vpop.f32.mrf.mxu0
        %v1829 = vadd.f32 %v660, %v1828
        %v1830 = vpop.f32.mrf.mxu0
        %v1831 = vadd.f32 %v656, %v1830
        %v1832 = vpop.f32.mrf.mxu0
        %v1833 = vadd.f32 %v660, %v1832
        %1834 = vmatprep.mubr.bf16.mxu0 %v412
        %1835 = vmatmul.mubr.bf16.gmra.mxu0 %v411
        %v1836 = vpop.f32.mrf.mxu0
        %v1837 = vadd.f32 %v656, %v1836
        %v1838 = vpop.f32.mrf.mxu0
        %v1839 = vadd.f32 %v660, %v1838
        %v1840 = vpop.f32.mrf.mxu0
        %v1841 = vadd.f32 %v656, %v1840
        %v1842 = vpop.f32.mrf.mxu0
        %v1843 = vadd.f32 %v660, %v1842
        %1844 = vmatprep.mubr.bf16.mxu0 %v416
        %1845 = vmatmul.mubr.bf16.gmra.mxu0 %v415
        %v1846 = vpop.f32.mrf.mxu0
        %v1847 = vadd.f32 %v656, %v1846
        %v1848 = vpop.f32.mrf.mxu0
        %v1849 = vadd.f32 %v660, %v1848
        %v1850 = vpop.f32.mrf.mxu0
        %v1851 = vadd.f32 %v656, %v1850
        %v1852 = vpop.f32.mrf.mxu0
        %v1853 = vadd.f32 %v660, %v1852
        %1854 = vmatprep.mubr.bf16.mxu0 %v420
        %1855 = vmatmul.mubr.bf16.gmra.mxu0 %v419
        %v1856 = vpop.f32.mrf.mxu0
        %v1857 = vadd.f32 %v656, %v1856
        %v1858 = vpop.f32.mrf.mxu0
        %v1859 = vadd.f32 %v660, %v1858
        %v1860 = vpop.f32.mrf.mxu0
        %v1861 = vadd.f32 %v656, %v1860
        %v1862 = vpop.f32.mrf.mxu0
        %v1863 = vadd.f32 %v660, %v1862
        %1864 = vmatprep.mubr.bf16.mxu0 %v424
        %1865 = vmatmul.mubr.bf16.gmra.mxu0 %v423
        %v1866 = vpop.f32.mrf.mxu0
        %v1867 = vadd.f32 %v656, %v1866
        %v1868 = vpop.f32.mrf.mxu0
        %v1869 = vadd.f32 %v660, %v1868
        %v1870 = vpop.f32.mrf.mxu0
        %v1871 = vadd.f32 %v656, %v1870
        %v1872 = vpop.f32.mrf.mxu0
        %v1873 = vadd.f32 %v660, %v1872
        %1874 = vmatprep.mubr.bf16.mxu0 %v428
        %1875 = vmatmul.mubr.bf16.gmra.mxu0 %v427
        %v1876 = vpop.f32.mrf.mxu0
        %v1877 = vadd.f32 %v656, %v1876
        %v1878 = vpop.f32.mrf.mxu0
        %v1879 = vadd.f32 %v660, %v1878
        %v1880 = vpop.f32.mrf.mxu0
        %v1881 = vadd.f32 %v656, %v1880
        %v1882 = vpop.f32.mrf.mxu0
        %v1883 = vadd.f32 %v660, %v1882
        %1884 = vmatprep.mubr.bf16.mxu0 %v432
        %1885 = vmatmul.mubr.bf16.gmra.mxu0 %v431
        %v1886 = vpop.f32.mrf.mxu0
        %v1887 = vadd.f32 %v656, %v1886
        %v1888 = vpop.f32.mrf.mxu0
        %v1889 = vadd.f32 %v660, %v1888
        %v1890 = vpop.f32.mrf.mxu0
        %v1891 = vadd.f32 %v656, %v1890
        %v1892 = vpop.f32.mrf.mxu0
        %v1893 = vadd.f32 %v660, %v1892
        %1894 = vmatprep.mubr.bf16.mxu0 %v436
        %1895 = vmatmul.mubr.bf16.gmra.mxu0 %v435
        %v1896 = vpop.f32.mrf.mxu0
        %v1897 = vadd.f32 %v656, %v1896
        %v1898 = vpop.f32.mrf.mxu0
        %v1899 = vadd.f32 %v660, %v1898
        %v1900 = vpop.f32.mrf.mxu0
        %v1901 = vadd.f32 %v656, %v1900
        %v1902 = vpop.f32.mrf.mxu0
        %v1903 = vadd.f32 %v660, %v1902
        %1904 = vmatprep.mubr.bf16.mxu0 %v440
        %1905 = vmatmul.mubr.bf16.gmra.mxu0 %v439
        %v1906 = vpop.f32.mrf.mxu0
        %v1907 = vadd.f32 %v656, %v1906
        %v1908 = vpop.f32.mrf.mxu0
        %v1909 = vadd.f32 %v660, %v1908
        %v1910 = vpop.f32.mrf.mxu0
        %v1911 = vadd.f32 %v656, %v1910
        %v1912 = vpop.f32.mrf.mxu0
        %v1913 = vadd.f32 %v660, %v1912
        %1914 = vmatprep.mubr.bf16.mxu0 %v444
        %1915 = vmatmul.mubr.bf16.gmra.mxu0 %v443
        %v1916 = vpop.f32.mrf.mxu0
        %v1917 = vadd.f32 %v656, %v1916
        %v1918 = vpop.f32.mrf.mxu0
        %v1919 = vadd.f32 %v660, %v1918
        %v1920 = vpop.f32.mrf.mxu0
        %v1921 = vadd.f32 %v656, %v1920
        %v1922 = vpop.f32.mrf.mxu0
        %v1923 = vadd.f32 %v660, %v1922
        %1924 = vmatprep.mubr.bf16.mxu0 %v448
        %1925 = vmatmul.mubr.bf16.gmra.mxu0 %v447
        %v1926 = vpop.f32.mrf.mxu0
        %v1927 = vadd.f32 %v656, %v1926
        %v1928 = vpop.f32.mrf.mxu0
        %v1929 = vadd.f32 %v660, %v1928
        %v1930 = vpop.f32.mrf.mxu0
        %v1931 = vadd.f32 %v656, %v1930
        %v1932 = vpop.f32.mrf.mxu0
        %v1933 = vadd.f32 %v660, %v1932
        %1934 = vdwg.mxu0
        %1935 = vmatprep.subr.bf16.mxu0 %v1478
        %1936 = vmatpush1.bf16.msra.mxu0 %v1477
        %1937 = vmatprep.subr.bf16.mxu0 %v1470
        %1938 = vmatpush1.bf16.msra.mxu0 %v1469
        %1939 = vmatprep.subr.bf16.mxu0 %v1462
        %1940 = vmatpush1.bf16.msra.mxu0 %v1461
        %1941 = vmatprep.subr.bf16.mxu0 %v1454
        %1942 = vmatpush1.bf16.msra.mxu0 %v1453
        %1943 = vmatprep.subr.bf16.mxu0 %v1446
        %1944 = vmatpush1.bf16.msra.mxu0 %v1445
        %1945 = vmatprep.subr.bf16.mxu0 %v1438
        %1946 = vmatpush1.bf16.msra.mxu0 %v1437
        %1947 = vmatprep.subr.bf16.mxu0 %v1430
        %1948 = vmatpush1.bf16.msra.mxu0 %v1429
        %1949 = vmatprep.subr.bf16.mxu0 %v1422
        %1950 = vmatpush1.bf16.msra.mxu0 %v1421
        %1951 = vmatprep.subr.bf16.mxu0 0
        %1952 = vmatpush2.bf16.msra.mxu0 0
        %1953 = vmatprep.subr.bf16.mxu0 0
        %1954 = vmatpush2.bf16.msra.mxu0 0
        %1955 = vmatprep.subr.bf16.mxu0 0
        %1956 = vmatpush2.bf16.msra.mxu0 0
        %1957 = vmatprep.subr.bf16.mxu0 0
        %1958 = vmatpush2.bf16.msra.mxu0 0
        %1959 = vmatprep.subr.bf16.mxu0 0
        %1960 = vmatpush2.bf16.msra.mxu0 0
        %1961 = vmatprep.subr.bf16.mxu0 0
        %1962 = vmatpush2.bf16.msra.mxu0 0
        %1963 = vmatprep.subr.bf16.mxu0 0
        %1964 = vmatpush2.bf16.msra.mxu0 0
        %1965 = vmatprep.subr.bf16.mxu0 %v1486
        %1966 = vmatpush2.bf16.msra.mxu0 %v1485
        %1967 = vmatprep.mubr.bf16.mxu0 %v1695
        %1968 = vmatmul.mubr.bf16.gmra.mxu0 %v389
        %v1969 = vpop.f32.mrf.mxu0
        %v1970 = vadd.f32 %v1777, %v1969
        %v1971 = vpop.f32.mrf.mxu0
        %v1972 = vadd.f32 %v1779, %v1971
        %v1973 = vpop.f32.mrf.mxu0
        %v1974 = vadd.f32 %v1781, %v1973
        %v1975 = vpop.f32.mrf.mxu0
        %v1976 = vadd.f32 %v1783, %v1975
        %1977 = vmatprep.mubr.bf16.mxu0 %v1698
        %1978 = vmatmul.mubr.bf16.gmra.mxu0 %v393
        %v1979 = vpop.f32.mrf.mxu0
        %v1980 = vadd.f32 %v1787, %v1979
        %v1981 = vpop.f32.mrf.mxu0
        %v1982 = vadd.f32 %v1789, %v1981
        %v1983 = vpop.f32.mrf.mxu0
        %v1984 = vadd.f32 %v1791, %v1983
        %v1985 = vpop.f32.mrf.mxu0
        %v1986 = vadd.f32 %v1793, %v1985
        %1987 = vmatprep.mubr.bf16.mxu0 %v1701
        %1988 = vmatmul.mubr.bf16.gmra.mxu0 %v397
        %v1989 = vpop.f32.mrf.mxu0
        %v1990 = vadd.f32 %v1797, %v1989
        %v1991 = vpop.f32.mrf.mxu0
        %v1992 = vadd.f32 %v1799, %v1991
        %v1993 = vpop.f32.mrf.mxu0
        %v1994 = vadd.f32 %v1801, %v1993
        %v1995 = vpop.f32.mrf.mxu0
        %v1996 = vadd.f32 %v1803, %v1995
        %1997 = vmatprep.mubr.bf16.mxu0 %v1704
        %1998 = vmatmul.mubr.bf16.gmra.mxu0 %v401
        %v1999 = vpop.f32.mrf.mxu0
        %v2000 = vadd.f32 %v1807, %v1999
        %v2001 = vpop.f32.mrf.mxu0
        %v2002 = vadd.f32 %v1809, %v2001
        %v2003 = vpop.f32.mrf.mxu0
        %v2004 = vadd.f32 %v1811, %v2003
        %v2005 = vpop.f32.mrf.mxu0
        %v2006 = vadd.f32 %v1813, %v2005
        %2007 = vmatprep.mubr.bf16.mxu0 %v1707
        %2008 = vmatmul.mubr.bf16.gmra.mxu0 %v405
        %v2009 = vpop.f32.mrf.mxu0
        %v2010 = vadd.f32 %v1817, %v2009
        %v2011 = vpop.f32.mrf.mxu0
        %v2012 = vadd.f32 %v1819, %v2011
        %v2013 = vpop.f32.mrf.mxu0
        %v2014 = vadd.f32 %v1821, %v2013
        %v2015 = vpop.f32.mrf.mxu0
        %v2016 = vadd.f32 %v1823, %v2015
        %2017 = vmatprep.mubr.bf16.mxu0 %v1710
        %2018 = vmatmul.mubr.bf16.gmra.mxu0 %v409
        %v2019 = vpop.f32.mrf.mxu0
        %v2020 = vadd.f32 %v1827, %v2019
        %v2021 = vpop.f32.mrf.mxu0
        %v2022 = vadd.f32 %v1829, %v2021
        %v2023 = vpop.f32.mrf.mxu0
        %v2024 = vadd.f32 %v1831, %v2023
        %v2025 = vpop.f32.mrf.mxu0
        %v2026 = vadd.f32 %v1833, %v2025
        %2027 = vmatprep.mubr.bf16.mxu0 %v1713
        %2028 = vmatmul.mubr.bf16.gmra.mxu0 %v413
        %v2029 = vpop.f32.mrf.mxu0
        %v2030 = vadd.f32 %v1837, %v2029
        %v2031 = vpop.f32.mrf.mxu0
        %v2032 = vadd.f32 %v1839, %v2031
        %v2033 = vpop.f32.mrf.mxu0
        %v2034 = vadd.f32 %v1841, %v2033
        %v2035 = vpop.f32.mrf.mxu0
        %v2036 = vadd.f32 %v1843, %v2035
        %2037 = vmatprep.mubr.bf16.mxu0 %v1716
        %2038 = vmatmul.mubr.bf16.gmra.mxu0 %v417
        %v2039 = vpop.f32.mrf.mxu0
        %v2040 = vadd.f32 %v1847, %v2039
        %v2041 = vpop.f32.mrf.mxu0
        %v2042 = vadd.f32 %v1849, %v2041
        %v2043 = vpop.f32.mrf.mxu0
        %v2044 = vadd.f32 %v1851, %v2043
        %v2045 = vpop.f32.mrf.mxu0
        %v2046 = vadd.f32 %v1853, %v2045
        %2047 = vmatprep.mubr.bf16.mxu0 %v1719
        %2048 = vmatmul.mubr.bf16.gmra.mxu0 %v421
        %v2049 = vpop.f32.mrf.mxu0
        %v2050 = vadd.f32 %v1857, %v2049
        %v2051 = vpop.f32.mrf.mxu0
        %v2052 = vadd.f32 %v1859, %v2051
        %v2053 = vpop.f32.mrf.mxu0
        %v2054 = vadd.f32 %v1861, %v2053
        %v2055 = vpop.f32.mrf.mxu0
        %v2056 = vadd.f32 %v1863, %v2055
        %2057 = vmatprep.mubr.bf16.mxu0 %v1722
        %2058 = vmatmul.mubr.bf16.gmra.mxu0 %v425
        %v2059 = vpop.f32.mrf.mxu0
        %v2060 = vadd.f32 %v1867, %v2059
        %v2061 = vpop.f32.mrf.mxu0
        %v2062 = vadd.f32 %v1869, %v2061
        %v2063 = vpop.f32.mrf.mxu0
        %v2064 = vadd.f32 %v1871, %v2063
        %v2065 = vpop.f32.mrf.mxu0
        %v2066 = vadd.f32 %v1873, %v2065
        %2067 = vmatprep.mubr.bf16.mxu0 %v1725
        %2068 = vmatmul.mubr.bf16.gmra.mxu0 %v429
        %v2069 = vpop.f32.mrf.mxu0
        %v2070 = vadd.f32 %v1877, %v2069
        %v2071 = vpop.f32.mrf.mxu0
        %v2072 = vadd.f32 %v1879, %v2071
        %v2073 = vpop.f32.mrf.mxu0
        %v2074 = vadd.f32 %v1881, %v2073
        %v2075 = vpop.f32.mrf.mxu0
        %v2076 = vadd.f32 %v1883, %v2075
        %2077 = vmatprep.mubr.bf16.mxu0 %v1728
        %2078 = vmatmul.mubr.bf16.gmra.mxu0 %v433
        %v2079 = vpop.f32.mrf.mxu0
        %v2080 = vadd.f32 %v1887, %v2079
        %v2081 = vpop.f32.mrf.mxu0
        %v2082 = vadd.f32 %v1889, %v2081
        %v2083 = vpop.f32.mrf.mxu0
        %v2084 = vadd.f32 %v1891, %v2083
        %v2085 = vpop.f32.mrf.mxu0
        %v2086 = vadd.f32 %v1893, %v2085
        %2087 = vmatprep.mubr.bf16.mxu0 %v1731
        %2088 = vmatmul.mubr.bf16.gmra.mxu0 %v437
        %v2089 = vpop.f32.mrf.mxu0
        %v2090 = vadd.f32 %v1897, %v2089
        %v2091 = vpop.f32.mrf.mxu0
        %v2092 = vadd.f32 %v1899, %v2091
        %v2093 = vpop.f32.mrf.mxu0
        %v2094 = vadd.f32 %v1901, %v2093
        %v2095 = vpop.f32.mrf.mxu0
        %v2096 = vadd.f32 %v1903, %v2095
        %2097 = vmatprep.mubr.bf16.mxu0 %v1734
        %2098 = vmatmul.mubr.bf16.gmra.mxu0 %v441
        %v2099 = vpop.f32.mrf.mxu0
        %v2100 = vadd.f32 %v1907, %v2099
        %v2101 = vpop.f32.mrf.mxu0
        %v2102 = vadd.f32 %v1909, %v2101
        %v2103 = vpop.f32.mrf.mxu0
        %v2104 = vadd.f32 %v1911, %v2103
        %v2105 = vpop.f32.mrf.mxu0
        %v2106 = vadd.f32 %v1913, %v2105
        %2107 = vmatprep.mubr.bf16.mxu0 %v1737
        %2108 = vmatmul.mubr.bf16.gmra.mxu0 %v445
        %v2109 = vpop.f32.mrf.mxu0
        %v2110 = vadd.f32 %v1917, %v2109
        %v2111 = vpop.f32.mrf.mxu0
        %v2112 = vadd.f32 %v1919, %v2111
        %v2113 = vpop.f32.mrf.mxu0
        %v2114 = vadd.f32 %v1921, %v2113
        %v2115 = vpop.f32.mrf.mxu0
        %v2116 = vadd.f32 %v1923, %v2115
        %2117 = vmatprep.mubr.bf16.mxu0 %v1740
        %2118 = vmatmul.mubr.bf16.gmra.mxu0 %v449
        %v2119 = vpop.f32.mrf.mxu0
        %v2120 = vadd.f32 %v1927, %v2119
        %v2121 = vpop.f32.mrf.mxu0
        %v2122 = vadd.f32 %v1929, %v2121
        %v2123 = vpop.f32.mrf.mxu0
        %v2124 = vadd.f32 %v1931, %v2123
        %v2125 = vpop.f32.mrf.mxu0
        %v2126 = vadd.f32 %v1933, %v2125
        %2127 = vdwg.mxu0
        %2128 = vmatprep.subr.bf16.mxu0 %v1352
        %2129 = vmatpush1.bf16.msra.mxu0 %v1351
        %2130 = vmatprep.subr.bf16.mxu0 %v1344
        %2131 = vmatpush1.bf16.msra.mxu0 %v1343
        %2132 = vmatprep.subr.bf16.mxu0 %v1336
        %2133 = vmatpush1.bf16.msra.mxu0 %v1335
        %2134 = vmatprep.subr.bf16.mxu0 %v1328
        %2135 = vmatpush1.bf16.msra.mxu0 %v1327
        %2136 = vmatprep.subr.bf16.mxu0 %v1320
        %2137 = vmatpush1.bf16.msra.mxu0 %v1319
        %2138 = vmatprep.subr.bf16.mxu0 %v1312
        %2139 = vmatpush1.bf16.msra.mxu0 %v1311
        %2140 = vmatprep.subr.bf16.mxu0 %v1304
        %2141 = vmatpush1.bf16.msra.mxu0 %v1303
        %2142 = vmatprep.subr.bf16.mxu0 %v1296
        %2143 = vmatpush1.bf16.msra.mxu0 %v1295
        %2144 = vmatprep.subr.bf16.mxu0 %v1416
        %2145 = vmatpush2.bf16.msra.mxu0 %v1415
        %2146 = vmatprep.subr.bf16.mxu0 %v1408
        %2147 = vmatpush2.bf16.msra.mxu0 %v1407
        %2148 = vmatprep.subr.bf16.mxu0 %v1400
        %2149 = vmatpush2.bf16.msra.mxu0 %v1399
        %2150 = vmatprep.subr.bf16.mxu0 %v1392
        %2151 = vmatpush2.bf16.msra.mxu0 %v1391
        %2152 = vmatprep.subr.bf16.mxu0 %v1384
        %2153 = vmatpush2.bf16.msra.mxu0 %v1383
        %2154 = vmatprep.subr.bf16.mxu0 %v1376
        %2155 = vmatpush2.bf16.msra.mxu0 %v1375
        %2156 = vmatprep.subr.bf16.mxu0 %v1368
        %2157 = vmatpush2.bf16.msra.mxu0 %v1367
        %2158 = vmatprep.subr.bf16.mxu0 %v1360
        %2159 = vmatpush2.bf16.msra.mxu0 %v1359
        %2160 = vmatprep.mubr.bf16.mxu0 %v388
        %2161 = vmatmul.mubr.bf16.gmra.mxu0 %v387
        %v2162 = vpop.f32.mrf.mxu0
        %v2163 = vadd.f32 %v664, %v2162
        %v2164 = vpop.f32.mrf.mxu0
        %v2165 = vadd.f32 %v668, %v2164
        %v2166 = vpop.f32.mrf.mxu0
        %v2167 = vadd.f32 %v664, %v2166
        %v2168 = vpop.f32.mrf.mxu0
        %v2169 = vadd.f32 %v668, %v2168
        %2170 = vmatprep.mubr.bf16.mxu0 %v392
        %2171 = vmatmul.mubr.bf16.gmra.mxu0 %v391
        %v2172 = vpop.f32.mrf.mxu0
        %v2173 = vadd.f32 %v664, %v2172
        %v2174 = vpop.f32.mrf.mxu0
        %v2175 = vadd.f32 %v668, %v2174
        %v2176 = vpop.f32.mrf.mxu0
        %v2177 = vadd.f32 %v664, %v2176
        %v2178 = vpop.f32.mrf.mxu0
        %v2179 = vadd.f32 %v668, %v2178
        %2180 = vmatprep.mubr.bf16.mxu0 %v396
        %2181 = vmatmul.mubr.bf16.gmra.mxu0 %v395
        %v2182 = vpop.f32.mrf.mxu0
        %v2183 = vadd.f32 %v664, %v2182
        %v2184 = vpop.f32.mrf.mxu0
        %v2185 = vadd.f32 %v668, %v2184
        %v2186 = vpop.f32.mrf.mxu0
        %v2187 = vadd.f32 %v664, %v2186
        %v2188 = vpop.f32.mrf.mxu0
        %v2189 = vadd.f32 %v668, %v2188
        %2190 = vmatprep.mubr.bf16.mxu0 %v400
        %2191 = vmatmul.mubr.bf16.gmra.mxu0 %v399
        %v2192 = vpop.f32.mrf.mxu0
        %v2193 = vadd.f32 %v664, %v2192
        %v2194 = vpop.f32.mrf.mxu0
        %v2195 = vadd.f32 %v668, %v2194
        %v2196 = vpop.f32.mrf.mxu0
        %v2197 = vadd.f32 %v664, %v2196
        %v2198 = vpop.f32.mrf.mxu0
        %v2199 = vadd.f32 %v668, %v2198
        %2200 = vmatprep.mubr.bf16.mxu0 %v404
        %2201 = vmatmul.mubr.bf16.gmra.mxu0 %v403
        %v2202 = vpop.f32.mrf.mxu0
        %v2203 = vadd.f32 %v664, %v2202
        %v2204 = vpop.f32.mrf.mxu0
        %v2205 = vadd.f32 %v668, %v2204
        %v2206 = vpop.f32.mrf.mxu0
        %v2207 = vadd.f32 %v664, %v2206
        %v2208 = vpop.f32.mrf.mxu0
        %v2209 = vadd.f32 %v668, %v2208
        %2210 = vmatprep.mubr.bf16.mxu0 %v408
        %2211 = vmatmul.mubr.bf16.gmra.mxu0 %v407
        %v2212 = vpop.f32.mrf.mxu0
        %v2213 = vadd.f32 %v664, %v2212
        %v2214 = vpop.f32.mrf.mxu0
        %v2215 = vadd.f32 %v668, %v2214
        %v2216 = vpop.f32.mrf.mxu0
        %v2217 = vadd.f32 %v664, %v2216
        %v2218 = vpop.f32.mrf.mxu0
        %v2219 = vadd.f32 %v668, %v2218
        %2220 = vmatprep.mubr.bf16.mxu0 %v412
        %2221 = vmatmul.mubr.bf16.gmra.mxu0 %v411
        %v2222 = vpop.f32.mrf.mxu0
        %v2223 = vadd.f32 %v664, %v2222
        %v2224 = vpop.f32.mrf.mxu0
        %v2225 = vadd.f32 %v668, %v2224
        %v2226 = vpop.f32.mrf.mxu0
        %v2227 = vadd.f32 %v664, %v2226
        %v2228 = vpop.f32.mrf.mxu0
        %v2229 = vadd.f32 %v668, %v2228
        %2230 = vmatprep.mubr.bf16.mxu0 %v416
        %2231 = vmatmul.mubr.bf16.gmra.mxu0 %v415
        %v2232 = vpop.f32.mrf.mxu0
        %v2233 = vadd.f32 %v664, %v2232
        %v2234 = vpop.f32.mrf.mxu0
        %v2235 = vadd.f32 %v668, %v2234
        %v2236 = vpop.f32.mrf.mxu0
        %v2237 = vadd.f32 %v664, %v2236
        %v2238 = vpop.f32.mrf.mxu0
        %v2239 = vadd.f32 %v668, %v2238
        %2240 = vmatprep.mubr.bf16.mxu0 %v420
        %2241 = vmatmul.mubr.bf16.gmra.mxu0 %v419
        %v2242 = vpop.f32.mrf.mxu0
        %v2243 = vadd.f32 %v664, %v2242
        %v2244 = vpop.f32.mrf.mxu0
        %v2245 = vadd.f32 %v668, %v2244
        %v2246 = vpop.f32.mrf.mxu0
        %v2247 = vadd.f32 %v664, %v2246
        %v2248 = vpop.f32.mrf.mxu0
        %v2249 = vadd.f32 %v668, %v2248
        %2250 = vmatprep.mubr.bf16.mxu0 %v424
        %2251 = vmatmul.mubr.bf16.gmra.mxu0 %v423
        %v2252 = vpop.f32.mrf.mxu0
        %v2253 = vadd.f32 %v664, %v2252
        %v2254 = vpop.f32.mrf.mxu0
        %v2255 = vadd.f32 %v668, %v2254
        %v2256 = vpop.f32.mrf.mxu0
        %v2257 = vadd.f32 %v664, %v2256
        %v2258 = vpop.f32.mrf.mxu0
        %v2259 = vadd.f32 %v668, %v2258
        %2260 = vmatprep.mubr.bf16.mxu0 %v428
        %2261 = vmatmul.mubr.bf16.gmra.mxu0 %v427
        %v2262 = vpop.f32.mrf.mxu0
        %v2263 = vadd.f32 %v664, %v2262
        %v2264 = vpop.f32.mrf.mxu0
        %v2265 = vadd.f32 %v668, %v2264
        %v2266 = vpop.f32.mrf.mxu0
        %v2267 = vadd.f32 %v664, %v2266
        %v2268 = vpop.f32.mrf.mxu0
        %v2269 = vadd.f32 %v668, %v2268
        %2270 = vmatprep.mubr.bf16.mxu0 %v432
        %2271 = vmatmul.mubr.bf16.gmra.mxu0 %v431
        %v2272 = vpop.f32.mrf.mxu0
        %v2273 = vadd.f32 %v664, %v2272
        %v2274 = vpop.f32.mrf.mxu0
        %v2275 = vadd.f32 %v668, %v2274
        %v2276 = vpop.f32.mrf.mxu0
        %v2277 = vadd.f32 %v664, %v2276
        %v2278 = vpop.f32.mrf.mxu0
        %v2279 = vadd.f32 %v668, %v2278
        %2280 = vmatprep.mubr.bf16.mxu0 %v436
        %2281 = vmatmul.mubr.bf16.gmra.mxu0 %v435
        %v2282 = vpop.f32.mrf.mxu0
        %v2283 = vadd.f32 %v664, %v2282
        %v2284 = vpop.f32.mrf.mxu0
        %v2285 = vadd.f32 %v668, %v2284
        %v2286 = vpop.f32.mrf.mxu0
        %v2287 = vadd.f32 %v664, %v2286
        %v2288 = vpop.f32.mrf.mxu0
        %v2289 = vadd.f32 %v668, %v2288
        %2290 = vmatprep.mubr.bf16.mxu0 %v440
        %2291 = vmatmul.mubr.bf16.gmra.mxu0 %v439
        %v2292 = vpop.f32.mrf.mxu0
        %v2293 = vadd.f32 %v664, %v2292
        %v2294 = vpop.f32.mrf.mxu0
        %v2295 = vadd.f32 %v668, %v2294
        %v2296 = vpop.f32.mrf.mxu0
        %v2297 = vadd.f32 %v664, %v2296
        %v2298 = vpop.f32.mrf.mxu0
        %v2299 = vadd.f32 %v668, %v2298
        %2300 = vmatprep.mubr.bf16.mxu0 %v444
        %2301 = vmatmul.mubr.bf16.gmra.mxu0 %v443
        %v2302 = vpop.f32.mrf.mxu0
        %v2303 = vadd.f32 %v664, %v2302
        %v2304 = vpop.f32.mrf.mxu0
        %v2305 = vadd.f32 %v668, %v2304
        %v2306 = vpop.f32.mrf.mxu0
        %v2307 = vadd.f32 %v664, %v2306
        %v2308 = vpop.f32.mrf.mxu0
        %v2309 = vadd.f32 %v668, %v2308
        %2310 = vmatprep.mubr.bf16.mxu0 %v448
        %2311 = vmatmul.mubr.bf16.gmra.mxu0 %v447
        %v2312 = vpop.f32.mrf.mxu0
        %v2313 = vadd.f32 %v664, %v2312
        %v2314 = vpop.f32.mrf.mxu0
        %v2315 = vadd.f32 %v668, %v2314
        %v2316 = vpop.f32.mrf.mxu0
        %v2317 = vadd.f32 %v664, %v2316
        %v2318 = vpop.f32.mrf.mxu0
        %v2319 = vadd.f32 %v668, %v2318
        %2320 = vdwg.mxu0
        %2321 = vmatprep.subr.bf16.mxu0 %v1480
        %2322 = vmatpush1.bf16.msra.mxu0 %v1479
        %2323 = vmatprep.subr.bf16.mxu0 %v1472
        %2324 = vmatpush1.bf16.msra.mxu0 %v1471
        %2325 = vmatprep.subr.bf16.mxu0 %v1464
        %2326 = vmatpush1.bf16.msra.mxu0 %v1463
        %2327 = vmatprep.subr.bf16.mxu0 %v1456
        %2328 = vmatpush1.bf16.msra.mxu0 %v1455
        %2329 = vmatprep.subr.bf16.mxu0 %v1448
        %2330 = vmatpush1.bf16.msra.mxu0 %v1447
        %2331 = vmatprep.subr.bf16.mxu0 %v1440
        %2332 = vmatpush1.bf16.msra.mxu0 %v1439
        %2333 = vmatprep.subr.bf16.mxu0 %v1432
        %2334 = vmatpush1.bf16.msra.mxu0 %v1431
        %2335 = vmatprep.subr.bf16.mxu0 %v1424
        %2336 = vmatpush1.bf16.msra.mxu0 %v1423
        %2337 = vmatprep.subr.bf16.mxu0 0
        %2338 = vmatpush2.bf16.msra.mxu0 0
        %2339 = vmatprep.subr.bf16.mxu0 0
        %2340 = vmatpush2.bf16.msra.mxu0 0
        %2341 = vmatprep.subr.bf16.mxu0 0
        %2342 = vmatpush2.bf16.msra.mxu0 0
        %2343 = vmatprep.subr.bf16.mxu0 0
        %2344 = vmatpush2.bf16.msra.mxu0 0
        %2345 = vmatprep.subr.bf16.mxu0 0
        %2346 = vmatpush2.bf16.msra.mxu0 0
        %2347 = vmatprep.subr.bf16.mxu0 0
        %2348 = vmatpush2.bf16.msra.mxu0 0
        %2349 = vmatprep.subr.bf16.mxu0 0
        %2350 = vmatpush2.bf16.msra.mxu0 0
        %2351 = vmatprep.subr.bf16.mxu0 %v1488
        %2352 = vmatpush2.bf16.msra.mxu0 %v1487
        %2353 = vmatprep.mubr.bf16.mxu0 %v1695
        %2354 = vmatmul.mubr.bf16.gmra.mxu0 %v389
        %v2355 = vpop.f32.mrf.mxu0
        %v2356 = vadd.f32 %v2163, %v2355
        %v2357 = vpop.f32.mrf.mxu0
        %v2358 = vadd.f32 %v2165, %v2357
        %v2359 = vpop.f32.mrf.mxu0
        %v2360 = vadd.f32 %v2167, %v2359
        %v2361 = vpop.f32.mrf.mxu0
        %v2362 = vadd.f32 %v2169, %v2361
        %2363 = vmatprep.mubr.bf16.mxu0 %v1698
        %2364 = vmatmul.mubr.bf16.gmra.mxu0 %v393
        %v2365 = vpop.f32.mrf.mxu0
        %v2366 = vadd.f32 %v2173, %v2365
        %v2367 = vpop.f32.mrf.mxu0
        %v2368 = vadd.f32 %v2175, %v2367
        %v2369 = vpop.f32.mrf.mxu0
        %v2370 = vadd.f32 %v2177, %v2369
        %v2371 = vpop.f32.mrf.mxu0
        %v2372 = vadd.f32 %v2179, %v2371
        %2373 = vmatprep.mubr.bf16.mxu0 %v1701
        %2374 = vmatmul.mubr.bf16.gmra.mxu0 %v397
        %v2375 = vpop.f32.mrf.mxu0
        %v2376 = vadd.f32 %v2183, %v2375
        %v2377 = vpop.f32.mrf.mxu0
        %v2378 = vadd.f32 %v2185, %v2377
        %v2379 = vpop.f32.mrf.mxu0
        %v2380 = vadd.f32 %v2187, %v2379
        %v2381 = vpop.f32.mrf.mxu0
        %v2382 = vadd.f32 %v2189, %v2381
        %2383 = vmatprep.mubr.bf16.mxu0 %v1704
        %2384 = vmatmul.mubr.bf16.gmra.mxu0 %v401
        %v2385 = vpop.f32.mrf.mxu0
        %v2386 = vadd.f32 %v2193, %v2385
        %v2387 = vpop.f32.mrf.mxu0
        %v2388 = vadd.f32 %v2195, %v2387
        %v2389 = vpop.f32.mrf.mxu0
        %v2390 = vadd.f32 %v2197, %v2389
        %v2391 = vpop.f32.mrf.mxu0
        %v2392 = vadd.f32 %v2199, %v2391
        %2393 = vmatprep.mubr.bf16.mxu0 %v1707
        %2394 = vmatmul.mubr.bf16.gmra.mxu0 %v405
        %v2395 = vpop.f32.mrf.mxu0
        %v2396 = vadd.f32 %v2203, %v2395
        %v2397 = vpop.f32.mrf.mxu0
        %v2398 = vadd.f32 %v2205, %v2397
        %v2399 = vpop.f32.mrf.mxu0
        %v2400 = vadd.f32 %v2207, %v2399
        %v2401 = vpop.f32.mrf.mxu0
        %v2402 = vadd.f32 %v2209, %v2401
        %2403 = vmatprep.mubr.bf16.mxu0 %v1710
        %2404 = vmatmul.mubr.bf16.gmra.mxu0 %v409
        %v2405 = vpop.f32.mrf.mxu0
        %v2406 = vadd.f32 %v2213, %v2405
        %v2407 = vpop.f32.mrf.mxu0
        %v2408 = vadd.f32 %v2215, %v2407
        %v2409 = vpop.f32.mrf.mxu0
        %v2410 = vadd.f32 %v2217, %v2409
        %v2411 = vpop.f32.mrf.mxu0
        %v2412 = vadd.f32 %v2219, %v2411
        %2413 = vmatprep.mubr.bf16.mxu0 %v1713
        %2414 = vmatmul.mubr.bf16.gmra.mxu0 %v413
        %v2415 = vpop.f32.mrf.mxu0
        %v2416 = vadd.f32 %v2223, %v2415
        %v2417 = vpop.f32.mrf.mxu0
        %v2418 = vadd.f32 %v2225, %v2417
        %v2419 = vpop.f32.mrf.mxu0
        %v2420 = vadd.f32 %v2227, %v2419
        %v2421 = vpop.f32.mrf.mxu0
        %v2422 = vadd.f32 %v2229, %v2421
        %2423 = vmatprep.mubr.bf16.mxu0 %v1716
        %2424 = vmatmul.mubr.bf16.gmra.mxu0 %v417
        %v2425 = vpop.f32.mrf.mxu0
        %v2426 = vadd.f32 %v2233, %v2425
        %v2427 = vpop.f32.mrf.mxu0
        %v2428 = vadd.f32 %v2235, %v2427
        %v2429 = vpop.f32.mrf.mxu0
        %v2430 = vadd.f32 %v2237, %v2429
        %v2431 = vpop.f32.mrf.mxu0
        %v2432 = vadd.f32 %v2239, %v2431
        %2433 = vmatprep.mubr.bf16.mxu0 %v1719
        %2434 = vmatmul.mubr.bf16.gmra.mxu0 %v421
        %v2435 = vpop.f32.mrf.mxu0
        %v2436 = vadd.f32 %v2243, %v2435
        %v2437 = vpop.f32.mrf.mxu0
        %v2438 = vadd.f32 %v2245, %v2437
        %v2439 = vpop.f32.mrf.mxu0
        %v2440 = vadd.f32 %v2247, %v2439
        %v2441 = vpop.f32.mrf.mxu0
        %v2442 = vadd.f32 %v2249, %v2441
        %2443 = vmatprep.mubr.bf16.mxu0 %v1722
        %2444 = vmatmul.mubr.bf16.gmra.mxu0 %v425
        %v2445 = vpop.f32.mrf.mxu0
        %v2446 = vadd.f32 %v2253, %v2445
        %v2447 = vpop.f32.mrf.mxu0
        %v2448 = vadd.f32 %v2255, %v2447
        %v2449 = vpop.f32.mrf.mxu0
        %v2450 = vadd.f32 %v2257, %v2449
        %v2451 = vpop.f32.mrf.mxu0
        %v2452 = vadd.f32 %v2259, %v2451
        %2453 = vmatprep.mubr.bf16.mxu0 %v1725
        %2454 = vmatmul.mubr.bf16.gmra.mxu0 %v429
        %v2455 = vpop.f32.mrf.mxu0
        %v2456 = vadd.f32 %v2263, %v2455
        %v2457 = vpop.f32.mrf.mxu0
        %v2458 = vadd.f32 %v2265, %v2457
        %v2459 = vpop.f32.mrf.mxu0
        %v2460 = vadd.f32 %v2267, %v2459
        %v2461 = vpop.f32.mrf.mxu0
        %v2462 = vadd.f32 %v2269, %v2461
        %2463 = vmatprep.mubr.bf16.mxu0 %v1728
        %2464 = vmatmul.mubr.bf16.gmra.mxu0 %v433
        %v2465 = vpop.f32.mrf.mxu0
        %v2466 = vadd.f32 %v2273, %v2465
        %v2467 = vpop.f32.mrf.mxu0
        %v2468 = vadd.f32 %v2275, %v2467
        %v2469 = vpop.f32.mrf.mxu0
        %v2470 = vadd.f32 %v2277, %v2469
        %v2471 = vpop.f32.mrf.mxu0
        %v2472 = vadd.f32 %v2279, %v2471
        %2473 = vmatprep.mubr.bf16.mxu0 %v1731
        %2474 = vmatmul.mubr.bf16.gmra.mxu0 %v437
        %v2475 = vpop.f32.mrf.mxu0
        %v2476 = vadd.f32 %v2283, %v2475
        %v2477 = vpop.f32.mrf.mxu0
        %v2478 = vadd.f32 %v2285, %v2477
        %v2479 = vpop.f32.mrf.mxu0
        %v2480 = vadd.f32 %v2287, %v2479
        %v2481 = vpop.f32.mrf.mxu0
        %v2482 = vadd.f32 %v2289, %v2481
        %2483 = vmatprep.mubr.bf16.mxu0 %v1734
        %2484 = vmatmul.mubr.bf16.gmra.mxu0 %v441
        %v2485 = vpop.f32.mrf.mxu0
        %v2486 = vadd.f32 %v2293, %v2485
        %v2487 = vpop.f32.mrf.mxu0
        %v2488 = vadd.f32 %v2295, %v2487
        %v2489 = vpop.f32.mrf.mxu0
        %v2490 = vadd.f32 %v2297, %v2489
        %v2491 = vpop.f32.mrf.mxu0
        %v2492 = vadd.f32 %v2299, %v2491
        %2493 = vmatprep.mubr.bf16.mxu0 %v1737
        %2494 = vmatmul.mubr.bf16.gmra.mxu0 %v445
        %v2495 = vpop.f32.mrf.mxu0
        %v2496 = vadd.f32 %v2303, %v2495
        %v2497 = vpop.f32.mrf.mxu0
        %v2498 = vadd.f32 %v2305, %v2497
        %v2499 = vpop.f32.mrf.mxu0
        %v2500 = vadd.f32 %v2307, %v2499
        %v2501 = vpop.f32.mrf.mxu0
        %v2502 = vadd.f32 %v2309, %v2501
        %2503 = vmatprep.mubr.bf16.mxu0 %v1740
        %2504 = vmatmul.mubr.bf16.gmra.mxu0 %v449
        %v2505 = vpop.f32.mrf.mxu0
        %v2506 = vadd.f32 %v2313, %v2505
        %v2507 = vpop.f32.mrf.mxu0
        %v2508 = vadd.f32 %v2315, %v2507
        %v2509 = vpop.f32.mrf.mxu0
        %v2510 = vadd.f32 %v2317, %v2509
        %v2511 = vpop.f32.mrf.mxu0
        %v2512 = vadd.f32 %v2319, %v2511
        %2513 = vdwg.mxu0
        %2514 = vmatprep.subr.bf16.mxu0 %v1354
        %2515 = vmatpush1.bf16.msra.mxu0 %v1353
        %2516 = vmatprep.subr.bf16.mxu0 %v1346
        %2517 = vmatpush1.bf16.msra.mxu0 %v1345
        %2518 = vmatprep.subr.bf16.mxu0 %v1338
        %2519 = vmatpush1.bf16.msra.mxu0 %v1337
        %2520 = vmatprep.subr.bf16.mxu0 %v1330
        %2521 = vmatpush1.bf16.msra.mxu0 %v1329
        %2522 = vmatprep.subr.bf16.mxu0 %v1322
        %2523 = vmatpush1.bf16.msra.mxu0 %v1321
        %2524 = vmatprep.subr.bf16.mxu0 %v1314
        %2525 = vmatpush1.bf16.msra.mxu0 %v1313
        %2526 = vmatprep.subr.bf16.mxu0 %v1306
        %2527 = vmatpush1.bf16.msra.mxu0 %v1305
        %2528 = vmatprep.subr.bf16.mxu0 %v1298
        %2529 = vmatpush1.bf16.msra.mxu0 %v1297
        %2530 = vmatprep.subr.bf16.mxu0 %v1418
        %2531 = vmatpush2.bf16.msra.mxu0 %v1417
        %2532 = vmatprep.subr.bf16.mxu0 %v1410
        %2533 = vmatpush2.bf16.msra.mxu0 %v1409
        %2534 = vmatprep.subr.bf16.mxu0 %v1402
        %2535 = vmatpush2.bf16.msra.mxu0 %v1401
        %2536 = vmatprep.subr.bf16.mxu0 %v1394
        %2537 = vmatpush2.bf16.msra.mxu0 %v1393
        %2538 = vmatprep.subr.bf16.mxu0 %v1386
        %2539 = vmatpush2.bf16.msra.mxu0 %v1385
        %2540 = vmatprep.subr.bf16.mxu0 %v1378
        %2541 = vmatpush2.bf16.msra.mxu0 %v1377
        %2542 = vmatprep.subr.bf16.mxu0 %v1370
        %2543 = vmatpush2.bf16.msra.mxu0 %v1369
        %2544 = vmatprep.subr.bf16.mxu0 %v1362
        %2545 = vmatpush2.bf16.msra.mxu0 %v1361
        %2546 = vmatprep.mubr.bf16.mxu0 %v388
        %2547 = vmatmul.mubr.bf16.gmra.mxu0 %v387
        %v2548 = vpop.f32.mrf.mxu0
        %v2549 = vadd.f32 %v672, %v2548
        %v2550 = vpop.f32.mrf.mxu0
        %v2551 = vadd.f32 %v676, %v2550
        %v2552 = vpop.f32.mrf.mxu0
        %v2553 = vadd.f32 %v672, %v2552
        %v2554 = vpop.f32.mrf.mxu0
        %v2555 = vadd.f32 %v676, %v2554
        %2556 = vmatprep.mubr.bf16.mxu0 %v392
        %2557 = vmatmul.mubr.bf16.gmra.mxu0 %v391
        %v2558 = vpop.f32.mrf.mxu0
        %v2559 = vadd.f32 %v672, %v2558
        %v2560 = vpop.f32.mrf.mxu0
        %v2561 = vadd.f32 %v676, %v2560
        %v2562 = vpop.f32.mrf.mxu0
        %v2563 = vadd.f32 %v672, %v2562
        %v2564 = vpop.f32.mrf.mxu0
        %v2565 = vadd.f32 %v676, %v2564
        %2566 = vmatprep.mubr.bf16.mxu0 %v396
        %2567 = vmatmul.mubr.bf16.gmra.mxu0 %v395
        %v2568 = vpop.f32.mrf.mxu0
        %v2569 = vadd.f32 %v672, %v2568
        %v2570 = vpop.f32.mrf.mxu0
        %v2571 = vadd.f32 %v676, %v2570
        %v2572 = vpop.f32.mrf.mxu0
        %v2573 = vadd.f32 %v672, %v2572
        %v2574 = vpop.f32.mrf.mxu0
        %v2575 = vadd.f32 %v676, %v2574
        %2576 = vmatprep.mubr.bf16.mxu0 %v400
        %2577 = vmatmul.mubr.bf16.gmra.mxu0 %v399
        %v2578 = vpop.f32.mrf.mxu0
        %v2579 = vadd.f32 %v672, %v2578
        %v2580 = vpop.f32.mrf.mxu0
        %v2581 = vadd.f32 %v676, %v2580
        %v2582 = vpop.f32.mrf.mxu0
        %v2583 = vadd.f32 %v672, %v2582
        %v2584 = vpop.f32.mrf.mxu0
        %v2585 = vadd.f32 %v676, %v2584
        %2586 = vmatprep.mubr.bf16.mxu0 %v404
        %2587 = vmatmul.mubr.bf16.gmra.mxu0 %v403
        %v2588 = vpop.f32.mrf.mxu0
        %v2589 = vadd.f32 %v672, %v2588
        %v2590 = vpop.f32.mrf.mxu0
        %v2591 = vadd.f32 %v676, %v2590
        %v2592 = vpop.f32.mrf.mxu0
        %v2593 = vadd.f32 %v672, %v2592
        %v2594 = vpop.f32.mrf.mxu0
        %v2595 = vadd.f32 %v676, %v2594
        %2596 = vmatprep.mubr.bf16.mxu0 %v408
        %2597 = vmatmul.mubr.bf16.gmra.mxu0 %v407
        %v2598 = vpop.f32.mrf.mxu0
        %v2599 = vadd.f32 %v672, %v2598
        %v2600 = vpop.f32.mrf.mxu0
        %v2601 = vadd.f32 %v676, %v2600
        %v2602 = vpop.f32.mrf.mxu0
        %v2603 = vadd.f32 %v672, %v2602
        %v2604 = vpop.f32.mrf.mxu0
        %v2605 = vadd.f32 %v676, %v2604
        %2606 = vmatprep.mubr.bf16.mxu0 %v412
        %2607 = vmatmul.mubr.bf16.gmra.mxu0 %v411
        %v2608 = vpop.f32.mrf.mxu0
        %v2609 = vadd.f32 %v672, %v2608
        %v2610 = vpop.f32.mrf.mxu0
        %v2611 = vadd.f32 %v676, %v2610
        %v2612 = vpop.f32.mrf.mxu0
        %v2613 = vadd.f32 %v672, %v2612
        %v2614 = vpop.f32.mrf.mxu0
        %v2615 = vadd.f32 %v676, %v2614
        %2616 = vmatprep.mubr.bf16.mxu0 %v416
        %2617 = vmatmul.mubr.bf16.gmra.mxu0 %v415
        %v2618 = vpop.f32.mrf.mxu0
        %v2619 = vadd.f32 %v672, %v2618
        %v2620 = vpop.f32.mrf.mxu0
        %v2621 = vadd.f32 %v676, %v2620
        %v2622 = vpop.f32.mrf.mxu0
        %v2623 = vadd.f32 %v672, %v2622
        %v2624 = vpop.f32.mrf.mxu0
        %v2625 = vadd.f32 %v676, %v2624
        %2626 = vmatprep.mubr.bf16.mxu0 %v420
        %2627 = vmatmul.mubr.bf16.gmra.mxu0 %v419
        %v2628 = vpop.f32.mrf.mxu0
        %v2629 = vadd.f32 %v672, %v2628
        %v2630 = vpop.f32.mrf.mxu0
        %v2631 = vadd.f32 %v676, %v2630
        %v2632 = vpop.f32.mrf.mxu0
        %v2633 = vadd.f32 %v672, %v2632
        %v2634 = vpop.f32.mrf.mxu0
        %v2635 = vadd.f32 %v676, %v2634
        %2636 = vmatprep.mubr.bf16.mxu0 %v424
        %2637 = vmatmul.mubr.bf16.gmra.mxu0 %v423
        %v2638 = vpop.f32.mrf.mxu0
        %v2639 = vadd.f32 %v672, %v2638
        %v2640 = vpop.f32.mrf.mxu0
        %v2641 = vadd.f32 %v676, %v2640
        %v2642 = vpop.f32.mrf.mxu0
        %v2643 = vadd.f32 %v672, %v2642
        %v2644 = vpop.f32.mrf.mxu0
        %v2645 = vadd.f32 %v676, %v2644
        %2646 = vmatprep.mubr.bf16.mxu0 %v428
        %2647 = vmatmul.mubr.bf16.gmra.mxu0 %v427
        %v2648 = vpop.f32.mrf.mxu0
        %v2649 = vadd.f32 %v672, %v2648
        %v2650 = vpop.f32.mrf.mxu0
        %v2651 = vadd.f32 %v676, %v2650
        %v2652 = vpop.f32.mrf.mxu0
        %v2653 = vadd.f32 %v672, %v2652
        %v2654 = vpop.f32.mrf.mxu0
        %v2655 = vadd.f32 %v676, %v2654
        %2656 = vmatprep.mubr.bf16.mxu0 %v432
        %2657 = vmatmul.mubr.bf16.gmra.mxu0 %v431
        %v2658 = vpop.f32.mrf.mxu0
        %v2659 = vadd.f32 %v672, %v2658
        %v2660 = vpop.f32.mrf.mxu0
        %v2661 = vadd.f32 %v676, %v2660
        %v2662 = vpop.f32.mrf.mxu0
        %v2663 = vadd.f32 %v672, %v2662
        %v2664 = vpop.f32.mrf.mxu0
        %v2665 = vadd.f32 %v676, %v2664
        %2666 = vmatprep.mubr.bf16.mxu0 %v436
        %2667 = vmatmul.mubr.bf16.gmra.mxu0 %v435
        %v2668 = vpop.f32.mrf.mxu0
        %v2669 = vadd.f32 %v672, %v2668
        %v2670 = vpop.f32.mrf.mxu0
        %v2671 = vadd.f32 %v676, %v2670
        %v2672 = vpop.f32.mrf.mxu0
        %v2673 = vadd.f32 %v672, %v2672
        %v2674 = vpop.f32.mrf.mxu0
        %v2675 = vadd.f32 %v676, %v2674
        %2676 = vmatprep.mubr.bf16.mxu0 %v440
        %2677 = vmatmul.mubr.bf16.gmra.mxu0 %v439
        %v2678 = vpop.f32.mrf.mxu0
        %v2679 = vadd.f32 %v672, %v2678
        %v2680 = vpop.f32.mrf.mxu0
        %v2681 = vadd.f32 %v676, %v2680
        %v2682 = vpop.f32.mrf.mxu0
        %v2683 = vadd.f32 %v672, %v2682
        %v2684 = vpop.f32.mrf.mxu0
        %v2685 = vadd.f32 %v676, %v2684
        %2686 = vmatprep.mubr.bf16.mxu0 %v444
        %2687 = vmatmul.mubr.bf16.gmra.mxu0 %v443
        %v2688 = vpop.f32.mrf.mxu0
        %v2689 = vadd.f32 %v672, %v2688
        %v2690 = vpop.f32.mrf.mxu0
        %v2691 = vadd.f32 %v676, %v2690
        %v2692 = vpop.f32.mrf.mxu0
        %v2693 = vadd.f32 %v672, %v2692
        %v2694 = vpop.f32.mrf.mxu0
        %v2695 = vadd.f32 %v676, %v2694
        %2696 = vmatprep.mubr.bf16.mxu0 %v448
        %2697 = vmatmul.mubr.bf16.gmra.mxu0 %v447
        %v2698 = vpop.f32.mrf.mxu0
        %v2699 = vadd.f32 %v672, %v2698
        %v2700 = vpop.f32.mrf.mxu0
        %v2701 = vadd.f32 %v676, %v2700
        %v2702 = vpop.f32.mrf.mxu0
        %v2703 = vadd.f32 %v672, %v2702
        %v2704 = vpop.f32.mrf.mxu0
        %v2705 = vadd.f32 %v676, %v2704
        %2706 = vdwg.mxu0
        %2707 = vmatprep.subr.bf16.mxu0 %v1482
        %2708 = vmatpush1.bf16.msra.mxu0 %v1481
        %2709 = vmatprep.subr.bf16.mxu0 %v1474
        %2710 = vmatpush1.bf16.msra.mxu0 %v1473
        %2711 = vmatprep.subr.bf16.mxu0 %v1466
        %2712 = vmatpush1.bf16.msra.mxu0 %v1465
        %2713 = vmatprep.subr.bf16.mxu0 %v1458
        %2714 = vmatpush1.bf16.msra.mxu0 %v1457
        %2715 = vmatprep.subr.bf16.mxu0 %v1450
        %2716 = vmatpush1.bf16.msra.mxu0 %v1449
        %2717 = vmatprep.subr.bf16.mxu0 %v1442
        %2718 = vmatpush1.bf16.msra.mxu0 %v1441
        %2719 = vmatprep.subr.bf16.mxu0 %v1434
        %2720 = vmatpush1.bf16.msra.mxu0 %v1433
        %2721 = vmatprep.subr.bf16.mxu0 %v1426
        %2722 = vmatpush1.bf16.msra.mxu0 %v1425
        %2723 = vmatprep.subr.bf16.mxu0 0
        %2724 = vmatpush2.bf16.msra.mxu0 0
        %2725 = vmatprep.subr.bf16.mxu0 0
        %2726 = vmatpush2.bf16.msra.mxu0 0
        %2727 = vmatprep.subr.bf16.mxu0 0
        %2728 = vmatpush2.bf16.msra.mxu0 0
        %2729 = vmatprep.subr.bf16.mxu0 0
        %2730 = vmatpush2.bf16.msra.mxu0 0
        %2731 = vmatprep.subr.bf16.mxu0 0
        %2732 = vmatpush2.bf16.msra.mxu0 0
        %2733 = vmatprep.subr.bf16.mxu0 0
        %2734 = vmatpush2.bf16.msra.mxu0 0
        %2735 = vmatprep.subr.bf16.mxu0 0
        %2736 = vmatpush2.bf16.msra.mxu0 0
        %2737 = vmatprep.subr.bf16.mxu0 %v1490
        %2738 = vmatpush2.bf16.msra.mxu0 %v1489
        %2739 = vmatprep.mubr.bf16.mxu0 %v1695
        %2740 = vmatmul.mubr.bf16.gmra.mxu0 %v389
        %v2741 = vpop.f32.mrf.mxu0
        %v2742 = vadd.f32 %v2549, %v2741
        %v2743 = vpop.f32.mrf.mxu0
        %v2744 = vadd.f32 %v2551, %v2743
        %v2745 = vpop.f32.mrf.mxu0
        %v2746 = vadd.f32 %v2553, %v2745
        %v2747 = vpop.f32.mrf.mxu0
        %v2748 = vadd.f32 %v2555, %v2747
        %2749 = vmatprep.mubr.bf16.mxu0 %v1698
        %2750 = vmatmul.mubr.bf16.gmra.mxu0 %v393
        %v2751 = vpop.f32.mrf.mxu0
        %v2752 = vadd.f32 %v2559, %v2751
        %v2753 = vpop.f32.mrf.mxu0
        %v2754 = vadd.f32 %v2561, %v2753
        %v2755 = vpop.f32.mrf.mxu0
        %v2756 = vadd.f32 %v2563, %v2755
        %v2757 = vpop.f32.mrf.mxu0
        %v2758 = vadd.f32 %v2565, %v2757
        %2759 = vmatprep.mubr.bf16.mxu0 %v1701
        %2760 = vmatmul.mubr.bf16.gmra.mxu0 %v397
        %v2761 = vpop.f32.mrf.mxu0
        %v2762 = vadd.f32 %v2569, %v2761
        %v2763 = vpop.f32.mrf.mxu0
        %v2764 = vadd.f32 %v2571, %v2763
        %v2765 = vpop.f32.mrf.mxu0
        %v2766 = vadd.f32 %v2573, %v2765
        %v2767 = vpop.f32.mrf.mxu0
        %v2768 = vadd.f32 %v2575, %v2767
        %2769 = vmatprep.mubr.bf16.mxu0 %v1704
        %2770 = vmatmul.mubr.bf16.gmra.mxu0 %v401
        %v2771 = vpop.f32.mrf.mxu0
        %v2772 = vadd.f32 %v2579, %v2771
        %v2773 = vpop.f32.mrf.mxu0
        %v2774 = vadd.f32 %v2581, %v2773
        %v2775 = vpop.f32.mrf.mxu0
        %v2776 = vadd.f32 %v2583, %v2775
        %v2777 = vpop.f32.mrf.mxu0
        %v2778 = vadd.f32 %v2585, %v2777
        %2779 = vmatprep.mubr.bf16.mxu0 %v1707
        %2780 = vmatmul.mubr.bf16.gmra.mxu0 %v405
        %v2781 = vpop.f32.mrf.mxu0
        %v2782 = vadd.f32 %v2589, %v2781
        %v2783 = vpop.f32.mrf.mxu0
        %v2784 = vadd.f32 %v2591, %v2783
        %v2785 = vpop.f32.mrf.mxu0
        %v2786 = vadd.f32 %v2593, %v2785
        %v2787 = vpop.f32.mrf.mxu0
        %v2788 = vadd.f32 %v2595, %v2787
        %2789 = vmatprep.mubr.bf16.mxu0 %v1710
        %2790 = vmatmul.mubr.bf16.gmra.mxu0 %v409
        %v2791 = vpop.f32.mrf.mxu0
        %v2792 = vadd.f32 %v2599, %v2791
        %v2793 = vpop.f32.mrf.mxu0
        %v2794 = vadd.f32 %v2601, %v2793
        %v2795 = vpop.f32.mrf.mxu0
        %v2796 = vadd.f32 %v2603, %v2795
        %v2797 = vpop.f32.mrf.mxu0
        %v2798 = vadd.f32 %v2605, %v2797
        %2799 = vmatprep.mubr.bf16.mxu0 %v1713
        %2800 = vmatmul.mubr.bf16.gmra.mxu0 %v413
        %v2801 = vpop.f32.mrf.mxu0
        %v2802 = vadd.f32 %v2609, %v2801
        %v2803 = vpop.f32.mrf.mxu0
        %v2804 = vadd.f32 %v2611, %v2803
        %v2805 = vpop.f32.mrf.mxu0
        %v2806 = vadd.f32 %v2613, %v2805
        %v2807 = vpop.f32.mrf.mxu0
        %v2808 = vadd.f32 %v2615, %v2807
        %2809 = vmatprep.mubr.bf16.mxu0 %v1716
        %2810 = vmatmul.mubr.bf16.gmra.mxu0 %v417
        %v2811 = vpop.f32.mrf.mxu0
        %v2812 = vadd.f32 %v2619, %v2811
        %v2813 = vpop.f32.mrf.mxu0
        %v2814 = vadd.f32 %v2621, %v2813
        %v2815 = vpop.f32.mrf.mxu0
        %v2816 = vadd.f32 %v2623, %v2815
        %v2817 = vpop.f32.mrf.mxu0
        %v2818 = vadd.f32 %v2625, %v2817
        %2819 = vmatprep.mubr.bf16.mxu0 %v1719
        %2820 = vmatmul.mubr.bf16.gmra.mxu0 %v421
        %v2821 = vpop.f32.mrf.mxu0
        %v2822 = vadd.f32 %v2629, %v2821
        %v2823 = vpop.f32.mrf.mxu0
        %v2824 = vadd.f32 %v2631, %v2823
        %v2825 = vpop.f32.mrf.mxu0
        %v2826 = vadd.f32 %v2633, %v2825
        %v2827 = vpop.f32.mrf.mxu0
        %v2828 = vadd.f32 %v2635, %v2827
        %2829 = vmatprep.mubr.bf16.mxu0 %v1722
        %2830 = vmatmul.mubr.bf16.gmra.mxu0 %v425
        %v2831 = vpop.f32.mrf.mxu0
        %v2832 = vadd.f32 %v2639, %v2831
        %v2833 = vpop.f32.mrf.mxu0
        %v2834 = vadd.f32 %v2641, %v2833
        %v2835 = vpop.f32.mrf.mxu0
        %v2836 = vadd.f32 %v2643, %v2835
        %v2837 = vpop.f32.mrf.mxu0
        %v2838 = vadd.f32 %v2645, %v2837
        %2839 = vmatprep.mubr.bf16.mxu0 %v1725
        %2840 = vmatmul.mubr.bf16.gmra.mxu0 %v429
        %v2841 = vpop.f32.mrf.mxu0
        %v2842 = vadd.f32 %v2649, %v2841
        %v2843 = vpop.f32.mrf.mxu0
        %v2844 = vadd.f32 %v2651, %v2843
        %v2845 = vpop.f32.mrf.mxu0
        %v2846 = vadd.f32 %v2653, %v2845
        %v2847 = vpop.f32.mrf.mxu0
        %v2848 = vadd.f32 %v2655, %v2847
        %2849 = vmatprep.mubr.bf16.mxu0 %v1728
        %2850 = vmatmul.mubr.bf16.gmra.mxu0 %v433
        %v2851 = vpop.f32.mrf.mxu0
        %v2852 = vadd.f32 %v2659, %v2851
        %v2853 = vpop.f32.mrf.mxu0
        %v2854 = vadd.f32 %v2661, %v2853
        %v2855 = vpop.f32.mrf.mxu0
        %v2856 = vadd.f32 %v2663, %v2855
        %v2857 = vpop.f32.mrf.mxu0
        %v2858 = vadd.f32 %v2665, %v2857
        %2859 = vmatprep.mubr.bf16.mxu0 %v1731
        %2860 = vmatmul.mubr.bf16.gmra.mxu0 %v437
        %v2861 = vpop.f32.mrf.mxu0
        %v2862 = vadd.f32 %v2669, %v2861
        %v2863 = vpop.f32.mrf.mxu0
        %v2864 = vadd.f32 %v2671, %v2863
        %v2865 = vpop.f32.mrf.mxu0
        %v2866 = vadd.f32 %v2673, %v2865
        %v2867 = vpop.f32.mrf.mxu0
        %v2868 = vadd.f32 %v2675, %v2867
        %2869 = vmatprep.mubr.bf16.mxu0 %v1734
        %2870 = vmatmul.mubr.bf16.gmra.mxu0 %v441
        %v2871 = vpop.f32.mrf.mxu0
        %v2872 = vadd.f32 %v2679, %v2871
        %v2873 = vpop.f32.mrf.mxu0
        %v2874 = vadd.f32 %v2681, %v2873
        %v2875 = vpop.f32.mrf.mxu0
        %v2876 = vadd.f32 %v2683, %v2875
        %v2877 = vpop.f32.mrf.mxu0
        %v2878 = vadd.f32 %v2685, %v2877
        %2879 = vmatprep.mubr.bf16.mxu0 %v1737
        %2880 = vmatmul.mubr.bf16.gmra.mxu0 %v445
        %v2881 = vpop.f32.mrf.mxu0
        %v2882 = vadd.f32 %v2689, %v2881
        %v2883 = vpop.f32.mrf.mxu0
        %v2884 = vadd.f32 %v2691, %v2883
        %v2885 = vpop.f32.mrf.mxu0
        %v2886 = vadd.f32 %v2693, %v2885
        %v2887 = vpop.f32.mrf.mxu0
        %v2888 = vadd.f32 %v2695, %v2887
        %2889 = vmatprep.mubr.bf16.mxu0 %v1740
        %2890 = vmatmul.mubr.bf16.gmra.mxu0 %v449
        %v2891 = vpop.f32.mrf.mxu0
        %v2892 = vadd.f32 %v2699, %v2891
        %v2893 = vpop.f32.mrf.mxu0
        %v2894 = vadd.f32 %v2701, %v2893
        %v2895 = vpop.f32.mrf.mxu0
        %v2896 = vadd.f32 %v2703, %v2895
        %v2897 = vpop.f32.mrf.mxu0
        %v2898 = vadd.f32 %v2705, %v2897
        %2899 = vdwg.mxu0
        %2900 = vmatprep.subr.bf16.mxu0 %v1356
        %2901 = vmatpush1.bf16.msra.mxu0 %v1355
        %2902 = vmatprep.subr.bf16.mxu0 %v1348
        %2903 = vmatpush1.bf16.msra.mxu0 %v1347
        %2904 = vmatprep.subr.bf16.mxu0 %v1340
        %2905 = vmatpush1.bf16.msra.mxu0 %v1339
        %2906 = vmatprep.subr.bf16.mxu0 %v1332
        %2907 = vmatpush1.bf16.msra.mxu0 %v1331
        %2908 = vmatprep.subr.bf16.mxu0 %v1324
        %2909 = vmatpush1.bf16.msra.mxu0 %v1323
        %2910 = vmatprep.subr.bf16.mxu0 %v1316
        %2911 = vmatpush1.bf16.msra.mxu0 %v1315
        %2912 = vmatprep.subr.bf16.mxu0 %v1308
        %2913 = vmatpush1.bf16.msra.mxu0 %v1307
        %2914 = vmatprep.subr.bf16.mxu0 %v1300
        %2915 = vmatpush1.bf16.msra.mxu0 %v1299
        %2916 = vmatprep.subr.bf16.mxu0 %v1420
        %2917 = vmatpush2.bf16.msra.mxu0 %v1419
        %2918 = vmatprep.subr.bf16.mxu0 %v1412
        %2919 = vmatpush2.bf16.msra.mxu0 %v1411
        %2920 = vmatprep.subr.bf16.mxu0 %v1404
        %2921 = vmatpush2.bf16.msra.mxu0 %v1403
        %2922 = vmatprep.subr.bf16.mxu0 %v1396
        %2923 = vmatpush2.bf16.msra.mxu0 %v1395
        %2924 = vmatprep.subr.bf16.mxu0 %v1388
        %2925 = vmatpush2.bf16.msra.mxu0 %v1387
        %2926 = vmatprep.subr.bf16.mxu0 %v1380
        %2927 = vmatpush2.bf16.msra.mxu0 %v1379
        %2928 = vmatprep.subr.bf16.mxu0 %v1372
        %2929 = vmatpush2.bf16.msra.mxu0 %v1371
        %2930 = vmatprep.subr.bf16.mxu0 %v1364
        %2931 = vmatpush2.bf16.msra.mxu0 %v1363
        %2932 = vmatprep.mubr.bf16.mxu0 %v388
        %2933 = vmatmul.mubr.bf16.gmra.mxu0 %v387
        %v2934 = vpop.f32.mrf.mxu0
        %v2935 = vadd.f32 %v680, %v2934
        %v2936 = vpop.f32.mrf.mxu0
        %v2937 = vadd.f32 %v684, %v2936
        %v2938 = vpop.f32.mrf.mxu0
        %v2939 = vadd.f32 %v680, %v2938
        %v2940 = vpop.f32.mrf.mxu0
        %v2941 = vadd.f32 %v684, %v2940
        %2942 = vmatprep.mubr.bf16.mxu0 %v392
        %2943 = vmatmul.mubr.bf16.gmra.mxu0 %v391
        %v2944 = vpop.f32.mrf.mxu0
        %v2945 = vadd.f32 %v680, %v2944
        %v2946 = vpop.f32.mrf.mxu0
        %v2947 = vadd.f32 %v684, %v2946
        %v2948 = vpop.f32.mrf.mxu0
        %v2949 = vadd.f32 %v680, %v2948
        %v2950 = vpop.f32.mrf.mxu0
        %v2951 = vadd.f32 %v684, %v2950
        %2952 = vmatprep.mubr.bf16.mxu0 %v396
        %2953 = vmatmul.mubr.bf16.gmra.mxu0 %v395
        %v2954 = vpop.f32.mrf.mxu0
        %v2955 = vadd.f32 %v680, %v2954
        %v2956 = vpop.f32.mrf.mxu0
        %v2957 = vadd.f32 %v684, %v2956
        %v2958 = vpop.f32.mrf.mxu0
        %v2959 = vadd.f32 %v680, %v2958
        %v2960 = vpop.f32.mrf.mxu0
        %v2961 = vadd.f32 %v684, %v2960
        %2962 = vmatprep.mubr.bf16.mxu0 %v400
        %2963 = vmatmul.mubr.bf16.gmra.mxu0 %v399
        %v2964 = vpop.f32.mrf.mxu0
        %v2965 = vadd.f32 %v680, %v2964
        %v2966 = vpop.f32.mrf.mxu0
        %v2967 = vadd.f32 %v684, %v2966
        %v2968 = vpop.f32.mrf.mxu0
        %v2969 = vadd.f32 %v680, %v2968
        %v2970 = vpop.f32.mrf.mxu0
        %v2971 = vadd.f32 %v684, %v2970
        %2972 = vmatprep.mubr.bf16.mxu0 %v404
        %2973 = vmatmul.mubr.bf16.gmra.mxu0 %v403
        %v2974 = vpop.f32.mrf.mxu0
        %v2975 = vadd.f32 %v680, %v2974
        %v2976 = vpop.f32.mrf.mxu0
        %v2977 = vadd.f32 %v684, %v2976
        %v2978 = vpop.f32.mrf.mxu0
        %v2979 = vadd.f32 %v680, %v2978
        %v2980 = vpop.f32.mrf.mxu0
        %v2981 = vadd.f32 %v684, %v2980
        %2982 = vmatprep.mubr.bf16.mxu0 %v408
        %2983 = vmatmul.mubr.bf16.gmra.mxu0 %v407
        %v2984 = vpop.f32.mrf.mxu0
        %v2985 = vadd.f32 %v680, %v2984
        %v2986 = vpop.f32.mrf.mxu0
        %v2987 = vadd.f32 %v684, %v2986
        %v2988 = vpop.f32.mrf.mxu0
        %v2989 = vadd.f32 %v680, %v2988
        %v2990 = vpop.f32.mrf.mxu0
        %v2991 = vadd.f32 %v684, %v2990
        %2992 = vmatprep.mubr.bf16.mxu0 %v412
        %2993 = vmatmul.mubr.bf16.gmra.mxu0 %v411
        %v2994 = vpop.f32.mrf.mxu0
        %v2995 = vadd.f32 %v680, %v2994
        %v2996 = vpop.f32.mrf.mxu0
        %v2997 = vadd.f32 %v684, %v2996
        %v2998 = vpop.f32.mrf.mxu0
        %v2999 = vadd.f32 %v680, %v2998
        %v3000 = vpop.f32.mrf.mxu0
        %v3001 = vadd.f32 %v684, %v3000
        %3002 = vmatprep.mubr.bf16.mxu0 %v416
        %3003 = vmatmul.mubr.bf16.gmra.mxu0 %v415
        %v3004 = vpop.f32.mrf.mxu0
        %v3005 = vadd.f32 %v680, %v3004
        %v3006 = vpop.f32.mrf.mxu0
        %v3007 = vadd.f32 %v684, %v3006
        %v3008 = vpop.f32.mrf.mxu0
        %v3009 = vadd.f32 %v680, %v3008
        %v3010 = vpop.f32.mrf.mxu0
        %v3011 = vadd.f32 %v684, %v3010
        %3012 = vmatprep.mubr.bf16.mxu0 %v420
        %3013 = vmatmul.mubr.bf16.gmra.mxu0 %v419
        %v3014 = vpop.f32.mrf.mxu0
        %v3015 = vadd.f32 %v680, %v3014
        %v3016 = vpop.f32.mrf.mxu0
        %v3017 = vadd.f32 %v684, %v3016
        %v3018 = vpop.f32.mrf.mxu0
        %v3019 = vadd.f32 %v680, %v3018
        %v3020 = vpop.f32.mrf.mxu0
        %v3021 = vadd.f32 %v684, %v3020
        %3022 = vmatprep.mubr.bf16.mxu0 %v424
        %3023 = vmatmul.mubr.bf16.gmra.mxu0 %v423
        %v3024 = vpop.f32.mrf.mxu0
        %v3025 = vadd.f32 %v680, %v3024
        %v3026 = vpop.f32.mrf.mxu0
        %v3027 = vadd.f32 %v684, %v3026
        %v3028 = vpop.f32.mrf.mxu0
        %v3029 = vadd.f32 %v680, %v3028
        %v3030 = vpop.f32.mrf.mxu0
        %v3031 = vadd.f32 %v684, %v3030
        %3032 = vmatprep.mubr.bf16.mxu0 %v428
        %3033 = vmatmul.mubr.bf16.gmra.mxu0 %v427
        %v3034 = vpop.f32.mrf.mxu0
        %v3035 = vadd.f32 %v680, %v3034
        %v3036 = vpop.f32.mrf.mxu0
        %v3037 = vadd.f32 %v684, %v3036
        %v3038 = vpop.f32.mrf.mxu0
        %v3039 = vadd.f32 %v680, %v3038
        %v3040 = vpop.f32.mrf.mxu0
        %v3041 = vadd.f32 %v684, %v3040
        %3042 = vmatprep.mubr.bf16.mxu0 %v432
        %3043 = vmatmul.mubr.bf16.gmra.mxu0 %v431
        %v3044 = vpop.f32.mrf.mxu0
        %v3045 = vadd.f32 %v680, %v3044
        %v3046 = vpop.f32.mrf.mxu0
        %v3047 = vadd.f32 %v684, %v3046
        %v3048 = vpop.f32.mrf.mxu0
        %v3049 = vadd.f32 %v680, %v3048
        %v3050 = vpop.f32.mrf.mxu0
        %v3051 = vadd.f32 %v684, %v3050
        %3052 = vmatprep.mubr.bf16.mxu0 %v436
        %3053 = vmatmul.mubr.bf16.gmra.mxu0 %v435
        %v3054 = vpop.f32.mrf.mxu0
        %v3055 = vadd.f32 %v680, %v3054
        %v3056 = vpop.f32.mrf.mxu0
        %v3057 = vadd.f32 %v684, %v3056
        %v3058 = vpop.f32.mrf.mxu0
        %v3059 = vadd.f32 %v680, %v3058
        %v3060 = vpop.f32.mrf.mxu0
        %v3061 = vadd.f32 %v684, %v3060
        %3062 = vmatprep.mubr.bf16.mxu0 %v440
        %3063 = vmatmul.mubr.bf16.gmra.mxu0 %v439
        %v3064 = vpop.f32.mrf.mxu0
        %v3065 = vadd.f32 %v680, %v3064
        %v3066 = vpop.f32.mrf.mxu0
        %v3067 = vadd.f32 %v684, %v3066
        %v3068 = vpop.f32.mrf.mxu0
        %v3069 = vadd.f32 %v680, %v3068
        %v3070 = vpop.f32.mrf.mxu0
        %v3071 = vadd.f32 %v684, %v3070
        %3072 = vmatprep.mubr.bf16.mxu0 %v444
        %3073 = vmatmul.mubr.bf16.gmra.mxu0 %v443
        %v3074 = vpop.f32.mrf.mxu0
        %v3075 = vadd.f32 %v680, %v3074
        %v3076 = vpop.f32.mrf.mxu0
        %v3077 = vadd.f32 %v684, %v3076
        %v3078 = vpop.f32.mrf.mxu0
        %v3079 = vadd.f32 %v680, %v3078
        %v3080 = vpop.f32.mrf.mxu0
        %v3081 = vadd.f32 %v684, %v3080
        %3082 = vmatprep.mubr.bf16.mxu0 %v448
        %3083 = vmatmul.mubr.bf16.gmra.mxu0 %v447
        %v3084 = vpop.f32.mrf.mxu0
        %v3085 = vadd.f32 %v680, %v3084
        %v3086 = vpop.f32.mrf.mxu0
        %v3087 = vadd.f32 %v684, %v3086
        %v3088 = vpop.f32.mrf.mxu0
        %v3089 = vadd.f32 %v680, %v3088
        %v3090 = vpop.f32.mrf.mxu0
        %v3091 = vadd.f32 %v684, %v3090
        %3092 = vdwg.mxu0
        %3093 = vmatprep.subr.bf16.mxu0 %v1484
        %3094 = vmatpush1.bf16.msra.mxu0 %v1483
        %3095 = vmatprep.subr.bf16.mxu0 %v1476
        %3096 = vmatpush1.bf16.msra.mxu0 %v1475
        %3097 = vmatprep.subr.bf16.mxu0 %v1468
        %3098 = vmatpush1.bf16.msra.mxu0 %v1467
        %3099 = vmatprep.subr.bf16.mxu0 %v1460
        %3100 = vmatpush1.bf16.msra.mxu0 %v1459
        %3101 = vmatprep.subr.bf16.mxu0 %v1452
        %3102 = vmatpush1.bf16.msra.mxu0 %v1451
        %3103 = vmatprep.subr.bf16.mxu0 %v1444
        %3104 = vmatpush1.bf16.msra.mxu0 %v1443
        %3105 = vmatprep.subr.bf16.mxu0 %v1436
        %3106 = vmatpush1.bf16.msra.mxu0 %v1435
        %3107 = vmatprep.subr.bf16.mxu0 %v1428
        %3108 = vmatpush1.bf16.msra.mxu0 %v1427
        %3109 = vmatprep.subr.bf16.mxu0 0
        %3110 = vmatpush2.bf16.msra.mxu0 0
        %3111 = vmatprep.subr.bf16.mxu0 0
        %3112 = vmatpush2.bf16.msra.mxu0 0
        %3113 = vmatprep.subr.bf16.mxu0 0
        %3114 = vmatpush2.bf16.msra.mxu0 0
        %3115 = vmatprep.subr.bf16.mxu0 0
        %3116 = vmatpush2.bf16.msra.mxu0 0
        %3117 = vmatprep.subr.bf16.mxu0 0
        %3118 = vmatpush2.bf16.msra.mxu0 0
        %3119 = vmatprep.subr.bf16.mxu0 0
        %3120 = vmatpush2.bf16.msra.mxu0 0
        %3121 = vmatprep.subr.bf16.mxu0 0
        %3122 = vmatpush2.bf16.msra.mxu0 0
        %3123 = vmatprep.subr.bf16.mxu0 %v1492
        %3124 = vmatpush2.bf16.msra.mxu0 %v1491
        %3125 = vmatprep.mubr.bf16.mxu0 %v1695
        %3126 = vmatmul.mubr.bf16.gmra.mxu0 %v389
        %v3127 = vpop.f32.mrf.mxu0
        %v3128 = vadd.f32 %v2935, %v3127
        %v3129 = vpop.f32.mrf.mxu0
        %v3130 = vadd.f32 %v2937, %v3129
        %v3131 = vpop.f32.mrf.mxu0
        %v3132 = vadd.f32 %v2939, %v3131
        %v3133 = vpop.f32.mrf.mxu0
        %v3134 = vadd.f32 %v2941, %v3133
        %3135 = vmatprep.mubr.bf16.mxu0 %v1698
        %3136 = vmatmul.mubr.bf16.gmra.mxu0 %v393
        %v3137 = vpop.f32.mrf.mxu0
        %v3138 = vadd.f32 %v2945, %v3137
        %v3139 = vpop.f32.mrf.mxu0
        %v3140 = vadd.f32 %v2947, %v3139
        %v3141 = vpop.f32.mrf.mxu0
        %v3142 = vadd.f32 %v2949, %v3141
        %v3143 = vpop.f32.mrf.mxu0
        %v3144 = vadd.f32 %v2951, %v3143
        %3145 = vmatprep.mubr.bf16.mxu0 %v1701
        %3146 = vmatmul.mubr.bf16.gmra.mxu0 %v397
        %v3147 = vpop.f32.mrf.mxu0
        %v3148 = vadd.f32 %v2955, %v3147
        %v3149 = vpop.f32.mrf.mxu0
        %v3150 = vadd.f32 %v2957, %v3149
        %v3151 = vpop.f32.mrf.mxu0
        %v3152 = vadd.f32 %v2959, %v3151
        %v3153 = vpop.f32.mrf.mxu0
        %v3154 = vadd.f32 %v2961, %v3153
        %3155 = vmatprep.mubr.bf16.mxu0 %v1704
        %3156 = vmatmul.mubr.bf16.gmra.mxu0 %v401
        %v3157 = vpop.f32.mrf.mxu0
        %v3158 = vadd.f32 %v2965, %v3157
        %v3159 = vpop.f32.mrf.mxu0
        %v3160 = vadd.f32 %v2967, %v3159
        %v3161 = vpop.f32.mrf.mxu0
        %v3162 = vadd.f32 %v2969, %v3161
        %v3163 = vpop.f32.mrf.mxu0
        %v3164 = vadd.f32 %v2971, %v3163
        %3165 = vmatprep.mubr.bf16.mxu0 %v1707
        %3166 = vmatmul.mubr.bf16.gmra.mxu0 %v405
        %v3167 = vpop.f32.mrf.mxu0
        %v3168 = vadd.f32 %v2975, %v3167
        %v3169 = vpop.f32.mrf.mxu0
        %v3170 = vadd.f32 %v2977, %v3169
        %v3171 = vpop.f32.mrf.mxu0
        %v3172 = vadd.f32 %v2979, %v3171
        %v3173 = vpop.f32.mrf.mxu0
        %v3174 = vadd.f32 %v2981, %v3173
        %3175 = vmatprep.mubr.bf16.mxu0 %v1710
        %3176 = vmatmul.mubr.bf16.gmra.mxu0 %v409
        %v3177 = vpop.f32.mrf.mxu0
        %v3178 = vadd.f32 %v2985, %v3177
        %v3179 = vpop.f32.mrf.mxu0
        %v3180 = vadd.f32 %v2987, %v3179
        %v3181 = vpop.f32.mrf.mxu0
        %v3182 = vadd.f32 %v2989, %v3181
        %v3183 = vpop.f32.mrf.mxu0
        %v3184 = vadd.f32 %v2991, %v3183
        %3185 = vmatprep.mubr.bf16.mxu0 %v1713
        %3186 = vmatmul.mubr.bf16.gmra.mxu0 %v413
        %v3187 = vpop.f32.mrf.mxu0
        %v3188 = vadd.f32 %v2995, %v3187
        %v3189 = vpop.f32.mrf.mxu0
        %v3190 = vadd.f32 %v2997, %v3189
        %v3191 = vpop.f32.mrf.mxu0
        %v3192 = vadd.f32 %v2999, %v3191
        %v3193 = vpop.f32.mrf.mxu0
        %v3194 = vadd.f32 %v3001, %v3193
        %3195 = vmatprep.mubr.bf16.mxu0 %v1716
        %3196 = vmatmul.mubr.bf16.gmra.mxu0 %v417
        %v3197 = vpop.f32.mrf.mxu0
        %v3198 = vadd.f32 %v3005, %v3197
        %v3199 = vpop.f32.mrf.mxu0
        %v3200 = vadd.f32 %v3007, %v3199
        %v3201 = vpop.f32.mrf.mxu0
        %v3202 = vadd.f32 %v3009, %v3201
        %v3203 = vpop.f32.mrf.mxu0
        %v3204 = vadd.f32 %v3011, %v3203
        %3205 = vmatprep.mubr.bf16.mxu0 %v1719
        %3206 = vmatmul.mubr.bf16.gmra.mxu0 %v421
        %v3207 = vpop.f32.mrf.mxu0
        %v3208 = vadd.f32 %v3015, %v3207
        %v3209 = vpop.f32.mrf.mxu0
        %v3210 = vadd.f32 %v3017, %v3209
        %v3211 = vpop.f32.mrf.mxu0
        %v3212 = vadd.f32 %v3019, %v3211
        %v3213 = vpop.f32.mrf.mxu0
        %v3214 = vadd.f32 %v3021, %v3213
        %3215 = vmatprep.mubr.bf16.mxu0 %v1722
        %3216 = vmatmul.mubr.bf16.gmra.mxu0 %v425
        %v3217 = vpop.f32.mrf.mxu0
        %v3218 = vadd.f32 %v3025, %v3217
        %v3219 = vpop.f32.mrf.mxu0
        %v3220 = vadd.f32 %v3027, %v3219
        %v3221 = vpop.f32.mrf.mxu0
        %v3222 = vadd.f32 %v3029, %v3221
        %v3223 = vpop.f32.mrf.mxu0
        %v3224 = vadd.f32 %v3031, %v3223
        %3225 = vmatprep.mubr.bf16.mxu0 %v1725
        %3226 = vmatmul.mubr.bf16.gmra.mxu0 %v429
        %v3227 = vpop.f32.mrf.mxu0
        %v3228 = vadd.f32 %v3035, %v3227
        %v3229 = vpop.f32.mrf.mxu0
        %v3230 = vadd.f32 %v3037, %v3229
        %v3231 = vpop.f32.mrf.mxu0
        %v3232 = vadd.f32 %v3039, %v3231
        %v3233 = vpop.f32.mrf.mxu0
        %v3234 = vadd.f32 %v3041, %v3233
        %3235 = vmatprep.mubr.bf16.mxu0 %v1728
        %3236 = vmatmul.mubr.bf16.gmra.mxu0 %v433
        %v3237 = vpop.f32.mrf.mxu0
        %v3238 = vadd.f32 %v3045, %v3237
        %v3239 = vpop.f32.mrf.mxu0
        %v3240 = vadd.f32 %v3047, %v3239
        %v3241 = vpop.f32.mrf.mxu0
        %v3242 = vadd.f32 %v3049, %v3241
        %v3243 = vpop.f32.mrf.mxu0
        %v3244 = vadd.f32 %v3051, %v3243
        %3245 = vmatprep.mubr.bf16.mxu0 %v1731
        %3246 = vmatmul.mubr.bf16.gmra.mxu0 %v437
        %v3247 = vpop.f32.mrf.mxu0
        %v3248 = vadd.f32 %v3055, %v3247
        %v3249 = vpop.f32.mrf.mxu0
        %v3250 = vadd.f32 %v3057, %v3249
        %v3251 = vpop.f32.mrf.mxu0
        %v3252 = vadd.f32 %v3059, %v3251
        %v3253 = vpop.f32.mrf.mxu0
        %v3254 = vadd.f32 %v3061, %v3253
        %3255 = vmatprep.mubr.bf16.mxu0 %v1734
        %3256 = vmatmul.mubr.bf16.gmra.mxu0 %v441
        %v3257 = vpop.f32.mrf.mxu0
        %v3258 = vadd.f32 %v3065, %v3257
        %v3259 = vpop.f32.mrf.mxu0
        %v3260 = vadd.f32 %v3067, %v3259
        %v3261 = vpop.f32.mrf.mxu0
        %v3262 = vadd.f32 %v3069, %v3261
        %v3263 = vpop.f32.mrf.mxu0
        %v3264 = vadd.f32 %v3071, %v3263
        %3265 = vmatprep.mubr.bf16.mxu0 %v1737
        %3266 = vmatmul.mubr.bf16.gmra.mxu0 %v445
        %v3267 = vpop.f32.mrf.mxu0
        %v3268 = vadd.f32 %v3075, %v3267
        %v3269 = vpop.f32.mrf.mxu0
        %v3270 = vadd.f32 %v3077, %v3269
        %v3271 = vpop.f32.mrf.mxu0
        %v3272 = vadd.f32 %v3079, %v3271
        %v3273 = vpop.f32.mrf.mxu0
        %v3274 = vadd.f32 %v3081, %v3273
        %3275 = vmatprep.mubr.bf16.mxu0 %v1740
        %3276 = vmatmul.mubr.bf16.gmra.mxu0 %v449
        %v3277 = vpop.f32.mrf.mxu0
        %v3278 = vadd.f32 %v3085, %v3277
        %v3279 = vpop.f32.mrf.mxu0
        %v3280 = vadd.f32 %v3087, %v3279
        %v3281 = vpop.f32.mrf.mxu0
        %v3282 = vadd.f32 %v3089, %v3281
        %v3283 = vpop.f32.mrf.mxu0
        %v3284 = vadd.f32 %v3091, %v3283
        %3285 = vdwg.mxu0
        %v3286 = vmax.f32 %v1970, 0.0
        %v3287 = vmax.f32 %v1972, 0.0
        %v3288 = vmax.f32 %v2356, 0.0
        %v3289 = vmax.f32 %v2358, 0.0
        %v3290 = vmax.f32 %v2742, 0.0
        %v3291 = vmax.f32 %v2744, 0.0
        %v3292 = vmax.f32 %v3128, 0.0
        %v3293 = vmax.f32 %v3130, 0.0
        %v3294 = vmax.f32 %v1974, 0.0
        %v3295 = vmax.f32 %v1976, 0.0
        %v3296 = vmax.f32 %v2360, 0.0
        %v3297 = vmax.f32 %v2362, 0.0
        %v3298 = vmax.f32 %v2746, 0.0
        %v3299 = vmax.f32 %v2748, 0.0
        %v3300 = vmax.f32 %v3132, 0.0
        %v3301 = vmax.f32 %v3134, 0.0
        %v3302 = vmax.f32 %v1980, 0.0
        %v3303 = vmax.f32 %v1982, 0.0
        %v3304 = vmax.f32 %v2366, 0.0
        %v3305 = vmax.f32 %v2368, 0.0
        %v3306 = vmax.f32 %v2752, 0.0
        %v3307 = vmax.f32 %v2754, 0.0
        %v3308 = vmax.f32 %v3138, 0.0
        %v3309 = vmax.f32 %v3140, 0.0
        %v3310 = vmax.f32 %v1984, 0.0
        %v3311 = vmax.f32 %v1986, 0.0
        %v3312 = vmax.f32 %v2370, 0.0
        %v3313 = vmax.f32 %v2372, 0.0
        %v3314 = vmax.f32 %v2756, 0.0
        %v3315 = vmax.f32 %v2758, 0.0
        %v3316 = vmax.f32 %v3142, 0.0
        %v3317 = vmax.f32 %v3144, 0.0
        %v3318 = vmax.f32 %v1990, 0.0
        %v3319 = vmax.f32 %v1992, 0.0
        %v3320 = vmax.f32 %v2376, 0.0
        %v3321 = vmax.f32 %v2378, 0.0
        %v3322 = vmax.f32 %v2762, 0.0
        %v3323 = vmax.f32 %v2764, 0.0
        %v3324 = vmax.f32 %v3148, 0.0
        %v3325 = vmax.f32 %v3150, 0.0
        %v3326 = vmax.f32 %v1994, 0.0
        %v3327 = vmax.f32 %v1996, 0.0
        %v3328 = vmax.f32 %v2380, 0.0
        %v3329 = vmax.f32 %v2382, 0.0
        %v3330 = vmax.f32 %v2766, 0.0
        %v3331 = vmax.f32 %v2768, 0.0
        %v3332 = vmax.f32 %v3152, 0.0
        %v3333 = vmax.f32 %v3154, 0.0
        %v3334 = vmax.f32 %v2000, 0.0
        %v3335 = vmax.f32 %v2002, 0.0
        %v3336 = vmax.f32 %v2386, 0.0
        %v3337 = vmax.f32 %v2388, 0.0
        %v3338 = vmax.f32 %v2772, 0.0
        %v3339 = vmax.f32 %v2774, 0.0
        %v3340 = vmax.f32 %v3158, 0.0
        %v3341 = vmax.f32 %v3160, 0.0
        %v3342 = vmax.f32 %v2004, 0.0
        %v3343 = vmax.f32 %v2006, 0.0
        %v3344 = vmax.f32 %v2390, 0.0
        %v3345 = vmax.f32 %v2392, 0.0
        %v3346 = vmax.f32 %v2776, 0.0
        %v3347 = vmax.f32 %v2778, 0.0
        %v3348 = vmax.f32 %v3162, 0.0
        %v3349 = vmax.f32 %v3164, 0.0
        %v3350 = vmax.f32 %v2010, 0.0
        %v3351 = vmax.f32 %v2012, 0.0
        %v3352 = vmax.f32 %v2396, 0.0
        %v3353 = vmax.f32 %v2398, 0.0
        %v3354 = vmax.f32 %v2782, 0.0
        %v3355 = vmax.f32 %v2784, 0.0
        %v3356 = vmax.f32 %v3168, 0.0
        %v3357 = vmax.f32 %v3170, 0.0
        %v3358 = vmax.f32 %v2014, 0.0
        %v3359 = vmax.f32 %v2016, 0.0
        %v3360 = vmax.f32 %v2400, 0.0
        %v3361 = vmax.f32 %v2402, 0.0
        %v3362 = vmax.f32 %v2786, 0.0
        %v3363 = vmax.f32 %v2788, 0.0
        %v3364 = vmax.f32 %v3172, 0.0
        %v3365 = vmax.f32 %v3174, 0.0
        %v3366 = vmax.f32 %v2020, 0.0
        %v3367 = vmax.f32 %v2022, 0.0
        %v3368 = vmax.f32 %v2406, 0.0
        %v3369 = vmax.f32 %v2408, 0.0
        %v3370 = vmax.f32 %v2792, 0.0
        %v3371 = vmax.f32 %v2794, 0.0
        %v3372 = vmax.f32 %v3178, 0.0
        %v3373 = vmax.f32 %v3180, 0.0
        %v3374 = vmax.f32 %v2024, 0.0
        %v3375 = vmax.f32 %v2026, 0.0
        %v3376 = vmax.f32 %v2410, 0.0
        %v3377 = vmax.f32 %v2412, 0.0
        %v3378 = vmax.f32 %v2796, 0.0
        %v3379 = vmax.f32 %v2798, 0.0
        %v3380 = vmax.f32 %v3182, 0.0
        %v3381 = vmax.f32 %v3184, 0.0
        %v3382 = vmax.f32 %v2030, 0.0
        %v3383 = vmax.f32 %v2032, 0.0
        %v3384 = vmax.f32 %v2416, 0.0
        %v3385 = vmax.f32 %v2418, 0.0
        %v3386 = vmax.f32 %v2802, 0.0
        %v3387 = vmax.f32 %v2804, 0.0
        %v3388 = vmax.f32 %v3188, 0.0
        %v3389 = vmax.f32 %v3190, 0.0
        %v3390 = vmax.f32 %v2034, 0.0
        %v3391 = vmax.f32 %v2036, 0.0
        %v3392 = vmax.f32 %v2420, 0.0
        %v3393 = vmax.f32 %v2422, 0.0
        %v3394 = vmax.f32 %v2806, 0.0
        %v3395 = vmax.f32 %v2808, 0.0
        %v3396 = vmax.f32 %v3192, 0.0
        %v3397 = vmax.f32 %v3194, 0.0
        %v3398 = vmax.f32 %v2040, 0.0
        %v3399 = vmax.f32 %v2042, 0.0
        %v3400 = vmax.f32 %v2426, 0.0
        %v3401 = vmax.f32 %v2428, 0.0
        %v3402 = vmax.f32 %v2812, 0.0
        %v3403 = vmax.f32 %v2814, 0.0
        %v3404 = vmax.f32 %v3198, 0.0
        %v3405 = vmax.f32 %v3200, 0.0
        %v3406 = vmax.f32 %v2044, 0.0
        %v3407 = vmax.f32 %v2046, 0.0
        %v3408 = vmax.f32 %v2430, 0.0
        %v3409 = vmax.f32 %v2432, 0.0
        %v3410 = vmax.f32 %v2816, 0.0
        %v3411 = vmax.f32 %v2818, 0.0
        %v3412 = vmax.f32 %v3202, 0.0
        %v3413 = vmax.f32 %v3204, 0.0
        %v3414 = vmax.f32 %v2050, 0.0
        %v3415 = vmax.f32 %v2052, 0.0
        %v3416 = vmax.f32 %v2436, 0.0
        %v3417 = vmax.f32 %v2438, 0.0
        %v3418 = vmax.f32 %v2822, 0.0
        %v3419 = vmax.f32 %v2824, 0.0
        %v3420 = vmax.f32 %v3208, 0.0
        %v3421 = vmax.f32 %v3210, 0.0
        %v3422 = vmax.f32 %v2054, 0.0
        %v3423 = vmax.f32 %v2056, 0.0
        %v3424 = vmax.f32 %v2440, 0.0
        %v3425 = vmax.f32 %v2442, 0.0
        %v3426 = vmax.f32 %v2826, 0.0
        %v3427 = vmax.f32 %v2828, 0.0
        %v3428 = vmax.f32 %v3212, 0.0
        %v3429 = vmax.f32 %v3214, 0.0
        %v3430 = vmax.f32 %v2060, 0.0
        %v3431 = vmax.f32 %v2062, 0.0
        %v3432 = vmax.f32 %v2446, 0.0
        %v3433 = vmax.f32 %v2448, 0.0
        %v3434 = vmax.f32 %v2832, 0.0
        %v3435 = vmax.f32 %v2834, 0.0
        %v3436 = vmax.f32 %v3218, 0.0
        %v3437 = vmax.f32 %v3220, 0.0
        %v3438 = vmax.f32 %v2064, 0.0
        %v3439 = vmax.f32 %v2066, 0.0
        %v3440 = vmax.f32 %v2450, 0.0
        %v3441 = vmax.f32 %v2452, 0.0
        %v3442 = vmax.f32 %v2836, 0.0
        %v3443 = vmax.f32 %v2838, 0.0
        %v3444 = vmax.f32 %v3222, 0.0
        %v3445 = vmax.f32 %v3224, 0.0
        %v3446 = vmax.f32 %v2070, 0.0
        %v3447 = vmax.f32 %v2072, 0.0
        %v3448 = vmax.f32 %v2456, 0.0
        %v3449 = vmax.f32 %v2458, 0.0
        %v3450 = vmax.f32 %v2842, 0.0
        %v3451 = vmax.f32 %v2844, 0.0
        %v3452 = vmax.f32 %v3228, 0.0
        %v3453 = vmax.f32 %v3230, 0.0
        %v3454 = vmax.f32 %v2074, 0.0
        %v3455 = vmax.f32 %v2076, 0.0
        %v3456 = vmax.f32 %v2460, 0.0
        %v3457 = vmax.f32 %v2462, 0.0
        %v3458 = vmax.f32 %v2846, 0.0
        %v3459 = vmax.f32 %v2848, 0.0
        %v3460 = vmax.f32 %v3232, 0.0
        %v3461 = vmax.f32 %v3234, 0.0
        %v3462 = vmax.f32 %v2080, 0.0
        %v3463 = vmax.f32 %v2082, 0.0
        %v3464 = vmax.f32 %v2466, 0.0
        %v3465 = vmax.f32 %v2468, 0.0
        %v3466 = vmax.f32 %v2852, 0.0
        %v3467 = vmax.f32 %v2854, 0.0
        %v3468 = vmax.f32 %v3238, 0.0
        %v3469 = vmax.f32 %v3240, 0.0
        %v3470 = vmax.f32 %v2084, 0.0
        %v3471 = vmax.f32 %v2086, 0.0
        %v3472 = vmax.f32 %v2470, 0.0
        %v3473 = vmax.f32 %v2472, 0.0
        %v3474 = vmax.f32 %v2856, 0.0
        %v3475 = vmax.f32 %v2858, 0.0
        %v3476 = vmax.f32 %v3242, 0.0
        %v3477 = vmax.f32 %v3244, 0.0
        %v3478 = vmax.f32 %v2090, 0.0
        %v3479 = vmax.f32 %v2092, 0.0
        %v3480 = vmax.f32 %v2476, 0.0
        %v3481 = vmax.f32 %v2478, 0.0
        %v3482 = vmax.f32 %v2862, 0.0
        %v3483 = vmax.f32 %v2864, 0.0
        %v3484 = vmax.f32 %v3248, 0.0
        %v3485 = vmax.f32 %v3250, 0.0
        %v3486 = vmax.f32 %v2094, 0.0
        %v3487 = vmax.f32 %v2096, 0.0
        %v3488 = vmax.f32 %v2480, 0.0
        %v3489 = vmax.f32 %v2482, 0.0
        %v3490 = vmax.f32 %v2866, 0.0
        %v3491 = vmax.f32 %v2868, 0.0
        %v3492 = vmax.f32 %v3252, 0.0
        %v3493 = vmax.f32 %v3254, 0.0
        %v3494 = vmax.f32 %v2100, 0.0
        %v3495 = vmax.f32 %v2102, 0.0
        %v3496 = vmax.f32 %v2486, 0.0
        %v3497 = vmax.f32 %v2488, 0.0
        %v3498 = vmax.f32 %v2872, 0.0
        %v3499 = vmax.f32 %v2874, 0.0
        %v3500 = vmax.f32 %v3258, 0.0
        %v3501 = vmax.f32 %v3260, 0.0
        %v3502 = vmax.f32 %v2104, 0.0
        %v3503 = vmax.f32 %v2106, 0.0
        %v3504 = vmax.f32 %v2490, 0.0
        %v3505 = vmax.f32 %v2492, 0.0
        %v3506 = vmax.f32 %v2876, 0.0
        %v3507 = vmax.f32 %v2878, 0.0
        %v3508 = vmax.f32 %v3262, 0.0
        %v3509 = vmax.f32 %v3264, 0.0
        %v3510 = vmax.f32 %v2110, 0.0
        %v3511 = vmax.f32 %v2112, 0.0
        %v3512 = vmax.f32 %v2496, 0.0
        %v3513 = vmax.f32 %v2498, 0.0
        %v3514 = vmax.f32 %v2882, 0.0
        %v3515 = vmax.f32 %v2884, 0.0
        %v3516 = vmax.f32 %v3268, 0.0
        %v3517 = vmax.f32 %v3270, 0.0
        %v3518 = vmax.f32 %v2114, 0.0
        %v3519 = vmax.f32 %v2116, 0.0
        %v3520 = vmax.f32 %v2500, 0.0
        %v3521 = vmax.f32 %v2502, 0.0
        %v3522 = vmax.f32 %v2886, 0.0
        %v3523 = vmax.f32 %v2888, 0.0
        %v3524 = vmax.f32 %v3272, 0.0
        %v3525 = vmax.f32 %v3274, 0.0
        %v3526 = vmax.f32 %v2120, 0.0
        %v3527 = vmax.f32 %v2122, 0.0
        %v3528 = vmax.f32 %v2506, 0.0
        %v3529 = vmax.f32 %v2508, 0.0
        %v3530 = vmax.f32 %v2892, 0.0
        %v3531 = vmax.f32 %v2894, 0.0
        %v3532 = vmax.f32 %v3278, 0.0
        %v3533 = vmax.f32 %v3280, 0.0
        %v3534 = vmax.f32 %v2124, 0.0
        %v3535 = vmax.f32 %v2126, 0.0
        %v3536 = vmax.f32 %v2510, 0.0
        %v3537 = vmax.f32 %v2512, 0.0
        %v3538 = vmax.f32 %v2896, 0.0
        %v3539 = vmax.f32 %v2898, 0.0
        %v3540 = vmax.f32 %v3282, 0.0
        %v3541 = vmax.f32 %v3284, 0.0
        %v3542 = vpack.c.bf16 %v3294, %v3286
        %v3543 = vpack.c.bf16 %v3295, %v3287
        %v3544 = vpack.c.bf16 %v3296, %v3288
        %v3545 = vpack.c.bf16 %v3297, %v3289
        %v3546 = vpack.c.bf16 %v3298, %v3290
        %v3547 = vpack.c.bf16 %v3299, %v3291
        %v3548 = vpack.c.bf16 %v3300, %v3292
        %v3549 = vpack.c.bf16 %v3301, %v3293
        %v3550 = vpack.c.bf16 %v3310, %v3302
        %v3551 = vpack.c.bf16 %v3311, %v3303
        %v3552 = vpack.c.bf16 %v3312, %v3304
        %v3553 = vpack.c.bf16 %v3313, %v3305
        %v3554 = vpack.c.bf16 %v3314, %v3306
        %v3555 = vpack.c.bf16 %v3315, %v3307
        %v3556 = vpack.c.bf16 %v3316, %v3308
        %v3557 = vpack.c.bf16 %v3317, %v3309
        %v3558 = vpack.c.bf16 %v3326, %v3318
        %v3559 = vpack.c.bf16 %v3327, %v3319
        %v3560 = vpack.c.bf16 %v3328, %v3320
        %v3561 = vpack.c.bf16 %v3329, %v3321
        %v3562 = vpack.c.bf16 %v3330, %v3322
        %v3563 = vpack.c.bf16 %v3331, %v3323
        %v3564 = vpack.c.bf16 %v3332, %v3324
        %v3565 = vpack.c.bf16 %v3333, %v3325
        %v3566 = vpack.c.bf16 %v3342, %v3334
        %v3567 = vpack.c.bf16 %v3343, %v3335
        %v3568 = vpack.c.bf16 %v3344, %v3336
        %v3569 = vpack.c.bf16 %v3345, %v3337
        %v3570 = vpack.c.bf16 %v3346, %v3338
        %v3571 = vpack.c.bf16 %v3347, %v3339
        %v3572 = vpack.c.bf16 %v3348, %v3340
        %v3573 = vpack.c.bf16 %v3349, %v3341
        %v3574 = vpack.c.bf16 %v3358, %v3350
        %v3575 = vpack.c.bf16 %v3359, %v3351
        %v3576 = vpack.c.bf16 %v3360, %v3352
        %v3577 = vpack.c.bf16 %v3361, %v3353
        %v3578 = vpack.c.bf16 %v3362, %v3354
        %v3579 = vpack.c.bf16 %v3363, %v3355
        %v3580 = vpack.c.bf16 %v3364, %v3356
        %v3581 = vpack.c.bf16 %v3365, %v3357
        %v3582 = vpack.c.bf16 %v3374, %v3366
        %v3583 = vpack.c.bf16 %v3375, %v3367
        %v3584 = vpack.c.bf16 %v3376, %v3368
        %v3585 = vpack.c.bf16 %v3377, %v3369
        %v3586 = vpack.c.bf16 %v3378, %v3370
        %v3587 = vpack.c.bf16 %v3379, %v3371
        %v3588 = vpack.c.bf16 %v3380, %v3372
        %v3589 = vpack.c.bf16 %v3381, %v3373
        %v3590 = vpack.c.bf16 %v3390, %v3382
        %v3591 = vpack.c.bf16 %v3391, %v3383
        %v3592 = vpack.c.bf16 %v3392, %v3384
        %v3593 = vpack.c.bf16 %v3393, %v3385
        %v3594 = vpack.c.bf16 %v3394, %v3386
        %v3595 = vpack.c.bf16 %v3395, %v3387
        %v3596 = vpack.c.bf16 %v3396, %v3388
        %v3597 = vpack.c.bf16 %v3397, %v3389
        %v3598 = vpack.c.bf16 %v3406, %v3398
        %v3599 = vpack.c.bf16 %v3407, %v3399
        %v3600 = vpack.c.bf16 %v3408, %v3400
        %v3601 = vpack.c.bf16 %v3409, %v3401
        %v3602 = vpack.c.bf16 %v3410, %v3402
        %v3603 = vpack.c.bf16 %v3411, %v3403
        %v3604 = vpack.c.bf16 %v3412, %v3404
        %v3605 = vpack.c.bf16 %v3413, %v3405
        %v3606 = vpack.c.bf16 %v3422, %v3414
        %v3607 = vpack.c.bf16 %v3423, %v3415
        %v3608 = vpack.c.bf16 %v3424, %v3416
        %v3609 = vpack.c.bf16 %v3425, %v3417
        %v3610 = vpack.c.bf16 %v3426, %v3418
        %v3611 = vpack.c.bf16 %v3427, %v3419
        %v3612 = vpack.c.bf16 %v3428, %v3420
        %v3613 = vpack.c.bf16 %v3429, %v3421
        %v3614 = vpack.c.bf16 %v3438, %v3430
        %v3615 = vpack.c.bf16 %v3439, %v3431
        %v3616 = vpack.c.bf16 %v3440, %v3432
        %v3617 = vpack.c.bf16 %v3441, %v3433
        %v3618 = vpack.c.bf16 %v3442, %v3434
        %v3619 = vpack.c.bf16 %v3443, %v3435
        %v3620 = vpack.c.bf16 %v3444, %v3436
        %v3621 = vpack.c.bf16 %v3445, %v3437
        %v3622 = vpack.c.bf16 %v3454, %v3446
        %v3623 = vpack.c.bf16 %v3455, %v3447
        %v3624 = vpack.c.bf16 %v3456, %v3448
        %v3625 = vpack.c.bf16 %v3457, %v3449
        %v3626 = vpack.c.bf16 %v3458, %v3450
        %v3627 = vpack.c.bf16 %v3459, %v3451
        %v3628 = vpack.c.bf16 %v3460, %v3452
        %v3629 = vpack.c.bf16 %v3461, %v3453
        %v3630 = vpack.c.bf16 %v3470, %v3462
        %v3631 = vpack.c.bf16 %v3471, %v3463
        %v3632 = vpack.c.bf16 %v3472, %v3464
        %v3633 = vpack.c.bf16 %v3473, %v3465
        %v3634 = vpack.c.bf16 %v3474, %v3466
        %v3635 = vpack.c.bf16 %v3475, %v3467
        %v3636 = vpack.c.bf16 %v3476, %v3468
        %v3637 = vpack.c.bf16 %v3477, %v3469
        %v3638 = vpack.c.bf16 %v3486, %v3478
        %v3639 = vpack.c.bf16 %v3487, %v3479
        %v3640 = vpack.c.bf16 %v3488, %v3480
        %v3641 = vpack.c.bf16 %v3489, %v3481
        %v3642 = vpack.c.bf16 %v3490, %v3482
        %v3643 = vpack.c.bf16 %v3491, %v3483
        %v3644 = vpack.c.bf16 %v3492, %v3484
        %v3645 = vpack.c.bf16 %v3493, %v3485
        %v3646 = vpack.c.bf16 %v3502, %v3494
        %v3647 = vpack.c.bf16 %v3503, %v3495
        %v3648 = vpack.c.bf16 %v3504, %v3496
        %v3649 = vpack.c.bf16 %v3505, %v3497
        %v3650 = vpack.c.bf16 %v3506, %v3498
        %v3651 = vpack.c.bf16 %v3507, %v3499
        %v3652 = vpack.c.bf16 %v3508, %v3500
        %v3653 = vpack.c.bf16 %v3509, %v3501
        %v3654 = vpack.c.bf16 %v3518, %v3510
        %v3655 = vpack.c.bf16 %v3519, %v3511
        %v3656 = vpack.c.bf16 %v3520, %v3512
        %v3657 = vpack.c.bf16 %v3521, %v3513
        %v3658 = vpack.c.bf16 %v3522, %v3514
        %v3659 = vpack.c.bf16 %v3523, %v3515
        %v3660 = vpack.c.bf16 %v3524, %v3516
        %v3661 = vpack.c.bf16 %v3525, %v3517
        %v3662 = vpack.c.bf16 %v3534, %v3526
        %v3663 = vpack.c.bf16 %v3535, %v3527
        %v3664 = vpack.c.bf16 %v3536, %v3528
        %v3665 = vpack.c.bf16 %v3537, %v3529
        %v3666 = vpack.c.bf16 %v3538, %v3530
        %v3667 = vpack.c.bf16 %v3539, %v3531
        %v3668 = vpack.c.bf16 %v3540, %v3532
        %v3669 = vpack.c.bf16 %v3541, %v3533
        %v3670 = vld [vmem:[%s3] sm:$0xf]
        %v3671 = vld [vmem:[%s3 + $0x4] sm:$0xf]
        %v3672 = vld [vmem:[%s3 + $0x8] sm:$0xf]
        %v3673 = vld [vmem:[%s3 + $0xc] sm:$0xf]
        %v3674 = vld [vmem:[%s3 + $0x10] sm:$0xf]
        %v3675 = vld [vmem:[%s3 + $0x14] sm:$0xf]
        %v3676 = vld [vmem:[%s3 + $0x18] sm:$0xf]
        %v3677 = vld [vmem:[%s3 + $0x1c] sm:$0xf]
        %v3678 = vld [vmem:[%s3 + $0x20] sm:$0xf]
        %v3679 = vld [vmem:[%s3 + $0x24] sm:$0xf]
        %v3680 = vld [vmem:[%s3 + $0x28] sm:$0xf]
        %v3681 = vld [vmem:[%s3 + $0x2c] sm:$0xf]
        %v3682 = vld [vmem:[%s3 + $0x30] sm:$0xf]
        %v3683 = vld [vmem:[%s3 + $0x34] sm:$0xf]
        %v3684 = vld [vmem:[%s3 + $0x38] sm:$0xf]
        %v3685 = vld [vmem:[%s3 + $0x3c] sm:$0xf]
        %v3686 = vld [vmem:[%s3 + $0x40] sm:$0xf]
        %v3687 = vld [vmem:[%s3 + $0x44] sm:$0xf]
        %v3688 = vld [vmem:[%s3 + $0x48] sm:$0xf]
        %v3689 = vld [vmem:[%s3 + $0x4c] sm:$0xf]
        %v3690 = vld [vmem:[%s3 + $0x50] sm:$0xf]
        %v3691 = vld [vmem:[%s3 + $0x54] sm:$0xf]
        %v3692 = vld [vmem:[%s3 + $0x58] sm:$0xf]
        %v3693 = vld [vmem:[%s3 + $0x5c] sm:$0xf]
        %v3694 = vld [vmem:[%s3 + $0x60] sm:$0xf]
        %v3695 = vld [vmem:[%s3 + $0x64] sm:$0xf]
        %v3696 = vld [vmem:[%s3 + $0x68] sm:$0xf]
        %v3697 = vld [vmem:[%s3 + $0x6c] sm:$0xf]
        %v3698 = vld [vmem:[%s3 + $0x70] sm:$0xf]
        %v3699 = vld [vmem:[%s3 + $0x74] sm:$0xf]
        %v3700 = vld [vmem:[%s3 + $0x78] sm:$0xf]
        %v3701 = vld [vmem:[%s3 + $0x7c] sm:$0xf]
        %v3702 = vld [vmem:[%s3 + $0x80] sm:$0xf]
        %v3703 = vld [vmem:[%s3 + $0x84] sm:$0xf]
        %v3704 = vld [vmem:[%s3 + $0x88] sm:$0xf]
        %v3705 = vld [vmem:[%s3 + $0x8c] sm:$0xf]
        %v3706 = vld [vmem:[%s3 + $0x90] sm:$0xf]
        %v3707 = vld [vmem:[%s3 + $0x94] sm:$0xf]
        %v3708 = vld [vmem:[%s3 + $0x98] sm:$0xf]
        %v3709 = vld [vmem:[%s3 + $0x9c] sm:$0xf]
        %v3710 = vld [vmem:[%s3 + $0xa0] sm:$0xf]
        %v3711 = vld [vmem:[%s3 + $0xa4] sm:$0xf]
        %v3712 = vld [vmem:[%s3 + $0xa8] sm:$0xf]
        %v3713 = vld [vmem:[%s3 + $0xac] sm:$0xf]
        %v3714 = vld [vmem:[%s3 + $0xb0] sm:$0xf]
        %v3715 = vld [vmem:[%s3 + $0xb4] sm:$0xf]
        %v3716 = vld [vmem:[%s3 + $0xb8] sm:$0xf]
        %v3717 = vld [vmem:[%s3 + $0xbc] sm:$0xf]
        %v3718 = vld [vmem:[%s3 + $0xc0] sm:$0xf]
        %v3719 = vld [vmem:[%s3 + $0xc4] sm:$0xf]
        %v3720 = vld [vmem:[%s3 + $0xc8] sm:$0xf]
        %v3721 = vld [vmem:[%s3 + $0xcc] sm:$0xf]
        %v3722 = vld [vmem:[%s3 + $0xd0] sm:$0xf]
        %v3723 = vld [vmem:[%s3 + $0xd4] sm:$0xf]
        %v3724 = vld [vmem:[%s3 + $0xd8] sm:$0xf]
        %v3725 = vld [vmem:[%s3 + $0xdc] sm:$0xf]
        %v3726 = vld [vmem:[%s3 + $0xe0] sm:$0xf]
        %v3727 = vld [vmem:[%s3 + $0xe4] sm:$0xf]
        %v3728 = vld [vmem:[%s3 + $0xe8] sm:$0xf]
        %v3729 = vld [vmem:[%s3 + $0xec] sm:$0xf]
        %v3730 = vld [vmem:[%s3 + $0xf0] sm:$0xf]
        %v3731 = vld [vmem:[%s3 + $0xf4] sm:$0xf]
        %v3732 = vld [vmem:[%s3 + $0xf8] sm:$0xf]
        %v3733 = vld [vmem:[%s3 + $0xfc] sm:$0xf]
        %v3734 = vld [vmem:[%s3 + $0x100] sm:$0xf]
        %v3735 = vld [vmem:[%s3 + $0x104] sm:$0xf]
        %v3736 = vld [vmem:[%s3 + $0x108] sm:$0xf]
        %v3737 = vld [vmem:[%s3 + $0x10c] sm:$0xf]
        %v3738 = vld [vmem:[%s3 + $0x110] sm:$0xf]
        %v3739 = vld [vmem:[%s3 + $0x114] sm:$0xf]
        %v3740 = vld [vmem:[%s3 + $0x118] sm:$0xf]
        %v3741 = vld [vmem:[%s3 + $0x11c] sm:$0xf]
        %v3742 = vld [vmem:[%s3 + $0x120] sm:$0xf]
        %v3743 = vld [vmem:[%s3 + $0x124] sm:$0xf]
        %v3744 = vld [vmem:[%s3 + $0x128] sm:$0xf]
        %v3745 = vld [vmem:[%s3 + $0x12c] sm:$0xf]
        %v3746 = vld [vmem:[%s3 + $0x130] sm:$0xf]
        %v3747 = vld [vmem:[%s3 + $0x134] sm:$0xf]
        %v3748 = vld [vmem:[%s3 + $0x138] sm:$0xf]
        %v3749 = vld [vmem:[%s3 + $0x13c] sm:$0xf]
        %v3750 = vld [vmem:[%s3 + $0x140] sm:$0xf]
        %v3751 = vld [vmem:[%s3 + $0x144] sm:$0xf]
        %v3752 = vld [vmem:[%s3 + $0x148] sm:$0xf]
        %v3753 = vld [vmem:[%s3 + $0x14c] sm:$0xf]
        %v3754 = vld [vmem:[%s3 + $0x150] sm:$0xf]
        %v3755 = vld [vmem:[%s3 + $0x154] sm:$0xf]
        %v3756 = vld [vmem:[%s3 + $0x158] sm:$0xf]
        %v3757 = vld [vmem:[%s3 + $0x15c] sm:$0xf]
        %v3758 = vld [vmem:[%s3 + $0x160] sm:$0xf]
        %v3759 = vld [vmem:[%s3 + $0x164] sm:$0xf]
        %v3760 = vld [vmem:[%s3 + $0x168] sm:$0xf]
        %v3761 = vld [vmem:[%s3 + $0x16c] sm:$0xf]
        %v3762 = vld [vmem:[%s3 + $0x170] sm:$0xf]
        %v3763 = vld [vmem:[%s3 + $0x174] sm:$0xf]
        %v3764 = vld [vmem:[%s3 + $0x178] sm:$0xf]
        %v3765 = vld [vmem:[%s3 + $0x17c] sm:$0xf]
        %v3766 = vld [vmem:[%s3 + $0x180] sm:$0xf]
        %v3767 = vld [vmem:[%s3 + $0x184] sm:$0xf]
        %v3768 = vld [vmem:[%s3 + $0x188] sm:$0xf]
        %v3769 = vld [vmem:[%s3 + $0x18c] sm:$0xf]
        %v3770 = vld [vmem:[%s3 + $0x190] sm:$0xf]
        %v3771 = vld [vmem:[%s3 + $0x194] sm:$0xf]
        %v3772 = vld [vmem:[%s3 + $0x198] sm:$0xf]
        %v3773 = vld [vmem:[%s3 + $0x19c] sm:$0xf]
        %v3774 = vld [vmem:[%s3 + $0x1a0] sm:$0xf]
        %v3775 = vld [vmem:[%s3 + $0x1a4] sm:$0xf]
        %v3776 = vld [vmem:[%s3 + $0x1a8] sm:$0xf]
        %v3777 = vld [vmem:[%s3 + $0x1ac] sm:$0xf]
        %v3778 = vld [vmem:[%s3 + $0x1b0] sm:$0xf]
        %v3779 = vld [vmem:[%s3 + $0x1b4] sm:$0xf]
        %v3780 = vld [vmem:[%s3 + $0x1b8] sm:$0xf]
        %v3781 = vld [vmem:[%s3 + $0x1bc] sm:$0xf]
        %v3782 = vld [vmem:[%s3 + $0x1c0] sm:$0xf]
        %v3783 = vld [vmem:[%s3 + $0x1c4] sm:$0xf]
        %v3784 = vld [vmem:[%s3 + $0x1c8] sm:$0xf]
        %v3785 = vld [vmem:[%s3 + $0x1cc] sm:$0xf]
        %v3786 = vld [vmem:[%s3 + $0x1d0] sm:$0xf]
        %v3787 = vld [vmem:[%s3 + $0x1d4] sm:$0xf]
        %v3788 = vld [vmem:[%s3 + $0x1d8] sm:$0xf]
        %v3789 = vld [vmem:[%s3 + $0x1dc] sm:$0xf]
        %v3790 = vld [vmem:[%s3 + $0x1e0] sm:$0xf]
        %v3791 = vld [vmem:[%s3 + $0x1e4] sm:$0xf]
        %v3792 = vld [vmem:[%s3 + $0x1e8] sm:$0xf]
        %v3793 = vld [vmem:[%s3 + $0x1ec] sm:$0xf]
        %v3794 = vld [vmem:[%s3 + $0x1f0] sm:$0xf]
        %v3795 = vld [vmem:[%s3 + $0x1f4] sm:$0xf]
        %v3796 = vld [vmem:[%s3 + $0x1f8] sm:$0xf]
        %v3797 = vld [vmem:[%s3 + $0x1fc] sm:$0xf]
        %v3798 = vld [vmem:[%s4] sm:$0x1]
        %v3800 = vlaneseq
        %v3801 = vshrl.u32 %v3800, 7
        %v3802 = vsub.s32 0, %v3801
        %v3803 = vrot.slane %v3798, %v3802
        %v3933 = vunpack.c.l.b16 %v3670
        %v3934 = vunpack.c.l.b16 %v3671
        %v3935 = vunpack.c.l.b16 %v3672
        %v3936 = vunpack.c.l.b16 %v3673
        %v3937 = vunpack.c.l.b16 %v3674
        %v3938 = vunpack.c.l.b16 %v3675
        %v3939 = vunpack.c.l.b16 %v3676
        %v3940 = vunpack.c.l.b16 %v3677
        %v3941 = vunpack.c.l.b16 %v3678
        %v3942 = vunpack.c.l.b16 %v3679
        %v3943 = vunpack.c.l.b16 %v3680
        %v3944 = vunpack.c.l.b16 %v3681
        %v3945 = vunpack.c.l.b16 %v3682
        %v3946 = vunpack.c.l.b16 %v3683
        %v3947 = vunpack.c.l.b16 %v3684
        %v3948 = vunpack.c.l.b16 %v3685
        %v3949 = vunpack.c.l.b16 %v3686
        %v3950 = vunpack.c.l.b16 %v3687
        %v3951 = vunpack.c.l.b16 %v3688
        %v3952 = vunpack.c.l.b16 %v3689
        %v3953 = vunpack.c.l.b16 %v3690
        %v3954 = vunpack.c.l.b16 %v3691
        %v3955 = vunpack.c.l.b16 %v3692
        %v3956 = vunpack.c.l.b16 %v3693
        %v3957 = vunpack.c.l.b16 %v3694
        %v3958 = vunpack.c.l.b16 %v3695
        %v3959 = vunpack.c.l.b16 %v3696
        %v3960 = vunpack.c.l.b16 %v3697
        %v3961 = vunpack.c.l.b16 %v3698
        %v3962 = vunpack.c.l.b16 %v3699
        %v3963 = vunpack.c.l.b16 %v3700
        %v3964 = vunpack.c.l.b16 %v3701
        %v3965 = vunpack.c.l.b16 %v3702
        %v3966 = vunpack.c.l.b16 %v3703
        %v3967 = vunpack.c.l.b16 %v3704
        %v3968 = vunpack.c.l.b16 %v3705
        %v3969 = vunpack.c.l.b16 %v3706
        %v3970 = vunpack.c.l.b16 %v3707
        %v3971 = vunpack.c.l.b16 %v3708
        %v3972 = vunpack.c.l.b16 %v3709
        %v3973 = vunpack.c.l.b16 %v3710
        %v3974 = vunpack.c.l.b16 %v3711
        %v3975 = vunpack.c.l.b16 %v3712
        %v3976 = vunpack.c.l.b16 %v3713
        %v3977 = vunpack.c.l.b16 %v3714
        %v3978 = vunpack.c.l.b16 %v3715
        %v3979 = vunpack.c.l.b16 %v3716
        %v3980 = vunpack.c.l.b16 %v3717
        %v3981 = vunpack.c.l.b16 %v3718
        %v3982 = vunpack.c.l.b16 %v3719
        %v3983 = vunpack.c.l.b16 %v3720
        %v3984 = vunpack.c.l.b16 %v3721
        %v3985 = vunpack.c.l.b16 %v3722
        %v3986 = vunpack.c.l.b16 %v3723
        %v3987 = vunpack.c.l.b16 %v3724
        %v3988 = vunpack.c.l.b16 %v3725
        %v3989 = vunpack.c.l.b16 %v3726
        %v3990 = vunpack.c.l.b16 %v3727
        %v3991 = vunpack.c.l.b16 %v3728
        %v3992 = vunpack.c.l.b16 %v3729
        %v3993 = vunpack.c.l.b16 %v3730
        %v3994 = vunpack.c.l.b16 %v3731
        %v3995 = vunpack.c.l.b16 %v3732
        %v3996 = vunpack.c.l.b16 %v3733
        %v3997 = vunpack.c.l.b16 %v3734
        %v3998 = vunpack.c.l.b16 %v3735
        %v3999 = vunpack.c.l.b16 %v3736
        %v4000 = vunpack.c.l.b16 %v3737
        %v4001 = vunpack.c.l.b16 %v3738
        %v4002 = vunpack.c.l.b16 %v3739
        %v4003 = vunpack.c.l.b16 %v3740
        %v4004 = vunpack.c.l.b16 %v3741
        %v4005 = vunpack.c.l.b16 %v3742
        %v4006 = vunpack.c.l.b16 %v3743
        %v4007 = vunpack.c.l.b16 %v3744
        %v4008 = vunpack.c.l.b16 %v3745
        %v4009 = vunpack.c.l.b16 %v3746
        %v4010 = vunpack.c.l.b16 %v3747
        %v4011 = vunpack.c.l.b16 %v3748
        %v4012 = vunpack.c.l.b16 %v3749
        %v4013 = vunpack.c.l.b16 %v3750
        %v4014 = vunpack.c.l.b16 %v3751
        %v4015 = vunpack.c.l.b16 %v3752
        %v4016 = vunpack.c.l.b16 %v3753
        %v4017 = vunpack.c.l.b16 %v3754
        %v4018 = vunpack.c.l.b16 %v3755
        %v4019 = vunpack.c.l.b16 %v3756
        %v4020 = vunpack.c.l.b16 %v3757
        %v4021 = vunpack.c.l.b16 %v3758
        %v4022 = vunpack.c.l.b16 %v3759
        %v4023 = vunpack.c.l.b16 %v3760
        %v4024 = vunpack.c.l.b16 %v3761
        %v4025 = vunpack.c.l.b16 %v3762
        %v4026 = vunpack.c.l.b16 %v3763
        %v4027 = vunpack.c.l.b16 %v3764
        %v4028 = vunpack.c.l.b16 %v3765
        %v4029 = vunpack.c.l.b16 %v3766
        %v4030 = vunpack.c.l.b16 %v3767
        %v4031 = vunpack.c.l.b16 %v3768
        %v4032 = vunpack.c.l.b16 %v3769
        %v4033 = vunpack.c.l.b16 %v3770
        %v4034 = vunpack.c.l.b16 %v3771
        %v4035 = vunpack.c.l.b16 %v3772
        %v4036 = vunpack.c.l.b16 %v3773
        %v4037 = vunpack.c.l.b16 %v3774
        %v4038 = vunpack.c.l.b16 %v3775
        %v4039 = vunpack.c.l.b16 %v3776
        %v4040 = vunpack.c.l.b16 %v3777
        %v4041 = vunpack.c.l.b16 %v3778
        %v4042 = vunpack.c.l.b16 %v3779
        %v4043 = vunpack.c.l.b16 %v3780
        %v4044 = vunpack.c.l.b16 %v3781
        %v4045 = vunpack.c.l.b16 %v3782
        %v4046 = vunpack.c.l.b16 %v3783
        %v4047 = vunpack.c.l.b16 %v3784
        %v4048 = vunpack.c.l.b16 %v3785
        %v4049 = vunpack.c.l.b16 %v3786
        %v4050 = vunpack.c.l.b16 %v3787
        %v4051 = vunpack.c.l.b16 %v3788
        %v4052 = vunpack.c.l.b16 %v3789
        %v4053 = vunpack.c.l.b16 %v3790
        %v4054 = vunpack.c.l.b16 %v3791
        %v4055 = vunpack.c.l.b16 %v3792
        %v4056 = vunpack.c.l.b16 %v3793
        %v4057 = vunpack.c.l.b16 %v3794
        %v4058 = vunpack.c.l.b16 %v3795
        %v4059 = vunpack.c.l.b16 %v3796
        %v4060 = vunpack.c.l.b16 %v3797
        %v4061 = vpack.c.b16 %v3934, %v3933
        %v4062 = vpack.c.b16 %v3936, %v3935
        %v4063 = vpack.c.b16 %v3938, %v3937
        %v4064 = vpack.c.b16 %v3940, %v3939
        %v4065 = vpack.c.b16 %v3942, %v3941
        %v4066 = vpack.c.b16 %v3944, %v3943
        %v4067 = vpack.c.b16 %v3946, %v3945
        %v4068 = vpack.c.b16 %v3948, %v3947
        %v4069 = vpack.c.b16 %v3950, %v3949
        %v4070 = vpack.c.b16 %v3952, %v3951
        %v4071 = vpack.c.b16 %v3954, %v3953
        %v4072 = vpack.c.b16 %v3956, %v3955
        %v4073 = vpack.c.b16 %v3958, %v3957
        %v4074 = vpack.c.b16 %v3960, %v3959
        %v4075 = vpack.c.b16 %v3962, %v3961
        %v4076 = vpack.c.b16 %v3964, %v3963
        %v4077 = vpack.c.b16 %v3966, %v3965
        %v4078 = vpack.c.b16 %v3968, %v3967
        %v4079 = vpack.c.b16 %v3970, %v3969
        %v4080 = vpack.c.b16 %v3972, %v3971
        %v4081 = vpack.c.b16 %v3974, %v3973
        %v4082 = vpack.c.b16 %v3976, %v3975
        %v4083 = vpack.c.b16 %v3978, %v3977
        %v4084 = vpack.c.b16 %v3980, %v3979
        %v4085 = vpack.c.b16 %v3982, %v3981
        %v4086 = vpack.c.b16 %v3984, %v3983
        %v4087 = vpack.c.b16 %v3986, %v3985
        %v4088 = vpack.c.b16 %v3988, %v3987
        %v4089 = vpack.c.b16 %v3990, %v3989
        %v4090 = vpack.c.b16 %v3992, %v3991
        %v4091 = vpack.c.b16 %v3994, %v3993
        %v4092 = vpack.c.b16 %v3996, %v3995
        %v4093 = vpack.c.b16 %v3998, %v3997
        %v4094 = vpack.c.b16 %v4000, %v3999
        %v4095 = vpack.c.b16 %v4002, %v4001
        %v4096 = vpack.c.b16 %v4004, %v4003
        %v4097 = vpack.c.b16 %v4006, %v4005
        %v4098 = vpack.c.b16 %v4008, %v4007
        %v4099 = vpack.c.b16 %v4010, %v4009
        %v4100 = vpack.c.b16 %v4012, %v4011
        %v4101 = vpack.c.b16 %v4014, %v4013
        %v4102 = vpack.c.b16 %v4016, %v4015
        %v4103 = vpack.c.b16 %v4018, %v4017
        %v4104 = vpack.c.b16 %v4020, %v4019
        %v4105 = vpack.c.b16 %v4022, %v4021
        %v4106 = vpack.c.b16 %v4024, %v4023
        %v4107 = vpack.c.b16 %v4026, %v4025
        %v4108 = vpack.c.b16 %v4028, %v4027
        %v4109 = vpack.c.b16 %v4030, %v4029
        %v4110 = vpack.c.b16 %v4032, %v4031
        %v4111 = vpack.c.b16 %v4034, %v4033
        %v4112 = vpack.c.b16 %v4036, %v4035
        %v4113 = vpack.c.b16 %v4038, %v4037
        %v4114 = vpack.c.b16 %v4040, %v4039
        %v4115 = vpack.c.b16 %v4042, %v4041
        %v4116 = vpack.c.b16 %v4044, %v4043
        %v4117 = vpack.c.b16 %v4046, %v4045
        %v4118 = vpack.c.b16 %v4048, %v4047
        %v4119 = vpack.c.b16 %v4050, %v4049
        %v4120 = vpack.c.b16 %v4052, %v4051
        %v4121 = vpack.c.b16 %v4054, %v4053
        %v4122 = vpack.c.b16 %v4056, %v4055
        %v4123 = vpack.c.b16 %v4058, %v4057
        %v4124 = vpack.c.b16 %v4060, %v4059
        %4189 = vmatprep.subr.bf16.mxu0 0
        %4190 = vmatpush1.bf16.msra.mxu0 %v4068
        %4191 = vmatprep.subr.bf16.mxu0 0
        %4192 = vmatpush1.bf16.msra.mxu0 %v4067
        %4193 = vmatprep.subr.bf16.mxu0 0
        %4194 = vmatpush1.bf16.msra.mxu0 %v4066
        %4195 = vmatprep.subr.bf16.mxu0 0
        %4196 = vmatpush1.bf16.msra.mxu0 %v4065
        %4197 = vmatprep.subr.bf16.mxu0 0
        %4198 = vmatpush1.bf16.msra.mxu0 %v4064
        %4199 = vmatprep.subr.bf16.mxu0 0
        %4200 = vmatpush1.bf16.msra.mxu0 %v4063
        %4201 = vmatprep.subr.bf16.mxu0 0
        %4202 = vmatpush1.bf16.msra.mxu0 %v4062
        %4203 = vmatprep.subr.bf16.mxu0 0
        %4204 = vmatpush1.bf16.msra.mxu0 %v4061
        %4205 = vmatprep.subr.bf16.mxu0 0
        %4206 = vmatpush2.bf16.msra.mxu0 %v4076
        %4207 = vmatprep.subr.bf16.mxu0 0
        %4208 = vmatpush2.bf16.msra.mxu0 %v4075
        %4209 = vmatprep.subr.bf16.mxu0 0
        %4210 = vmatpush2.bf16.msra.mxu0 %v4074
        %4211 = vmatprep.subr.bf16.mxu0 0
        %4212 = vmatpush2.bf16.msra.mxu0 %v4073
        %4213 = vmatprep.subr.bf16.mxu0 0
        %4214 = vmatpush2.bf16.msra.mxu0 %v4072
        %4215 = vmatprep.subr.bf16.mxu0 0
        %4216 = vmatpush2.bf16.msra.mxu0 %v4071
        %4217 = vmatprep.subr.bf16.mxu0 0
        %4218 = vmatpush2.bf16.msra.mxu0 %v4070
        %4219 = vmatprep.subr.bf16.mxu0 0
        %4220 = vmatpush2.bf16.msra.mxu0 %v4069
        %4221 = vmatprep.mubr.bf16.mxu0 %v3543
        %4222 = vmatmul.mubr.bf16.gmra.mxu0 %v3542
        %v4223 = vpop.f32.mrf.mxu0
        %v4224 = vadd.f32 %v3803, %v4223
        %v4225 = vpop.f32.mrf.mxu0
        %v4226 = vpop.f32.mrf.mxu0
        %v4227 = vadd.f32 %v3803, %v4226
        %v4228 = vpop.f32.mrf.mxu0
        %4229 = vmatprep.mubr.bf16.mxu0 %v3551
        %4230 = vmatmul.mubr.bf16.gmra.mxu0 %v3550
        %v4231 = vpop.f32.mrf.mxu0
        %v4232 = vadd.f32 %v3803, %v4231
        %v4233 = vpop.f32.mrf.mxu0
        %v4234 = vpop.f32.mrf.mxu0
        %v4235 = vadd.f32 %v3803, %v4234
        %v4236 = vpop.f32.mrf.mxu0
        %4237 = vmatprep.mubr.bf16.mxu0 %v3559
        %4238 = vmatmul.mubr.bf16.gmra.mxu0 %v3558
        %v4239 = vpop.f32.mrf.mxu0
        %v4240 = vadd.f32 %v3803, %v4239
        %v4241 = vpop.f32.mrf.mxu0
        %v4242 = vpop.f32.mrf.mxu0
        %v4243 = vadd.f32 %v3803, %v4242
        %v4244 = vpop.f32.mrf.mxu0
        %4245 = vmatprep.mubr.bf16.mxu0 %v3567
        %4246 = vmatmul.mubr.bf16.gmra.mxu0 %v3566
        %v4247 = vpop.f32.mrf.mxu0
        %v4248 = vadd.f32 %v3803, %v4247
        %v4249 = vpop.f32.mrf.mxu0
        %v4250 = vpop.f32.mrf.mxu0
        %v4251 = vadd.f32 %v3803, %v4250
        %v4252 = vpop.f32.mrf.mxu0
        %4253 = vmatprep.mubr.bf16.mxu0 %v3575
        %4254 = vmatmul.mubr.bf16.gmra.mxu0 %v3574
        %v4255 = vpop.f32.mrf.mxu0
        %v4256 = vadd.f32 %v3803, %v4255
        %v4257 = vpop.f32.mrf.mxu0
        %v4258 = vpop.f32.mrf.mxu0
        %v4259 = vadd.f32 %v3803, %v4258
        %v4260 = vpop.f32.mrf.mxu0
        %4261 = vmatprep.mubr.bf16.mxu0 %v3583
        %4262 = vmatmul.mubr.bf16.gmra.mxu0 %v3582
        %v4263 = vpop.f32.mrf.mxu0
        %v4264 = vadd.f32 %v3803, %v4263
        %v4265 = vpop.f32.mrf.mxu0
        %v4266 = vpop.f32.mrf.mxu0
        %v4267 = vadd.f32 %v3803, %v4266
        %v4268 = vpop.f32.mrf.mxu0
        %4269 = vmatprep.mubr.bf16.mxu0 %v3591
        %4270 = vmatmul.mubr.bf16.gmra.mxu0 %v3590
        %v4271 = vpop.f32.mrf.mxu0
        %v4272 = vadd.f32 %v3803, %v4271
        %v4273 = vpop.f32.mrf.mxu0
        %v4274 = vpop.f32.mrf.mxu0
        %v4275 = vadd.f32 %v3803, %v4274
        %v4276 = vpop.f32.mrf.mxu0
        %4277 = vmatprep.mubr.bf16.mxu0 %v3599
        %4278 = vmatmul.mubr.bf16.gmra.mxu0 %v3598
        %v4279 = vpop.f32.mrf.mxu0
        %v4280 = vadd.f32 %v3803, %v4279
        %v4281 = vpop.f32.mrf.mxu0
        %v4282 = vpop.f32.mrf.mxu0
        %v4283 = vadd.f32 %v3803, %v4282
        %v4284 = vpop.f32.mrf.mxu0
        %4285 = vmatprep.mubr.bf16.mxu0 %v3607
        %4286 = vmatmul.mubr.bf16.gmra.mxu0 %v3606
        %v4287 = vpop.f32.mrf.mxu0
        %v4288 = vadd.f32 %v3803, %v4287
        %v4289 = vpop.f32.mrf.mxu0
        %v4290 = vpop.f32.mrf.mxu0
        %v4291 = vadd.f32 %v3803, %v4290
        %v4292 = vpop.f32.mrf.mxu0
        %4293 = vmatprep.mubr.bf16.mxu0 %v3615
        %4294 = vmatmul.mubr.bf16.gmra.mxu0 %v3614
        %v4295 = vpop.f32.mrf.mxu0
        %v4296 = vadd.f32 %v3803, %v4295
        %v4297 = vpop.f32.mrf.mxu0
        %v4298 = vpop.f32.mrf.mxu0
        %v4299 = vadd.f32 %v3803, %v4298
        %v4300 = vpop.f32.mrf.mxu0
        %4301 = vmatprep.mubr.bf16.mxu0 %v3623
        %4302 = vmatmul.mubr.bf16.gmra.mxu0 %v3622
        %v4303 = vpop.f32.mrf.mxu0
        %v4304 = vadd.f32 %v3803, %v4303
        %v4305 = vpop.f32.mrf.mxu0
        %v4306 = vpop.f32.mrf.mxu0
        %v4307 = vadd.f32 %v3803, %v4306
        %v4308 = vpop.f32.mrf.mxu0
        %4309 = vmatprep.mubr.bf16.mxu0 %v3631
        %4310 = vmatmul.mubr.bf16.gmra.mxu0 %v3630
        %v4311 = vpop.f32.mrf.mxu0
        %v4312 = vadd.f32 %v3803, %v4311
        %v4313 = vpop.f32.mrf.mxu0
        %v4314 = vpop.f32.mrf.mxu0
        %v4315 = vadd.f32 %v3803, %v4314
        %v4316 = vpop.f32.mrf.mxu0
        %4317 = vmatprep.mubr.bf16.mxu0 %v3639
        %4318 = vmatmul.mubr.bf16.gmra.mxu0 %v3638
        %v4319 = vpop.f32.mrf.mxu0
        %v4320 = vadd.f32 %v3803, %v4319
        %v4321 = vpop.f32.mrf.mxu0
        %v4322 = vpop.f32.mrf.mxu0
        %v4323 = vadd.f32 %v3803, %v4322
        %v4324 = vpop.f32.mrf.mxu0
        %4325 = vmatprep.mubr.bf16.mxu0 %v3647
        %4326 = vmatmul.mubr.bf16.gmra.mxu0 %v3646
        %v4327 = vpop.f32.mrf.mxu0
        %v4328 = vadd.f32 %v3803, %v4327
        %v4329 = vpop.f32.mrf.mxu0
        %v4330 = vpop.f32.mrf.mxu0
        %v4331 = vadd.f32 %v3803, %v4330
        %v4332 = vpop.f32.mrf.mxu0
        %4333 = vmatprep.mubr.bf16.mxu0 %v3655
        %4334 = vmatmul.mubr.bf16.gmra.mxu0 %v3654
        %v4335 = vpop.f32.mrf.mxu0
        %v4336 = vadd.f32 %v3803, %v4335
        %v4337 = vpop.f32.mrf.mxu0
        %v4338 = vpop.f32.mrf.mxu0
        %v4339 = vadd.f32 %v3803, %v4338
        %v4340 = vpop.f32.mrf.mxu0
        %4341 = vmatprep.mubr.bf16.mxu0 %v3663
        %4342 = vmatmul.mubr.bf16.gmra.mxu0 %v3662
        %v4343 = vpop.f32.mrf.mxu0
        %v4344 = vadd.f32 %v3803, %v4343
        %v4345 = vpop.f32.mrf.mxu0
        %v4346 = vpop.f32.mrf.mxu0
        %v4347 = vadd.f32 %v3803, %v4346
        %v4348 = vpop.f32.mrf.mxu0
        %4349 = vdwg.mxu0
        %4350 = vmatprep.subr.bf16.mxu0 0
        %4351 = vmatpush1.bf16.msra.mxu0 %v4084
        %4352 = vmatprep.subr.bf16.mxu0 0
        %4353 = vmatpush1.bf16.msra.mxu0 %v4083
        %4354 = vmatprep.subr.bf16.mxu0 0
        %4355 = vmatpush1.bf16.msra.mxu0 %v4082
        %4356 = vmatprep.subr.bf16.mxu0 0
        %4357 = vmatpush1.bf16.msra.mxu0 %v4081
        %4358 = vmatprep.subr.bf16.mxu0 0
        %4359 = vmatpush1.bf16.msra.mxu0 %v4080
        %4360 = vmatprep.subr.bf16.mxu0 0
        %4361 = vmatpush1.bf16.msra.mxu0 %v4079
        %4362 = vmatprep.subr.bf16.mxu0 0
        %4363 = vmatpush1.bf16.msra.mxu0 %v4078
        %4364 = vmatprep.subr.bf16.mxu0 0
        %4365 = vmatpush1.bf16.msra.mxu0 %v4077
        %4366 = vmatprep.subr.bf16.mxu0 0
        %4367 = vmatpush2.bf16.msra.mxu0 %v4092
        %4368 = vmatprep.subr.bf16.mxu0 0
        %4369 = vmatpush2.bf16.msra.mxu0 %v4091
        %4370 = vmatprep.subr.bf16.mxu0 0
        %4371 = vmatpush2.bf16.msra.mxu0 %v4090
        %4372 = vmatprep.subr.bf16.mxu0 0
        %4373 = vmatpush2.bf16.msra.mxu0 %v4089
        %4374 = vmatprep.subr.bf16.mxu0 0
        %4375 = vmatpush2.bf16.msra.mxu0 %v4088
        %4376 = vmatprep.subr.bf16.mxu0 0
        %4377 = vmatpush2.bf16.msra.mxu0 %v4087
        %4378 = vmatprep.subr.bf16.mxu0 0
        %4379 = vmatpush2.bf16.msra.mxu0 %v4086
        %4380 = vmatprep.subr.bf16.mxu0 0
        %4381 = vmatpush2.bf16.msra.mxu0 %v4085
        %4382 = vmatprep.mubr.bf16.mxu0 %v3545
        %4383 = vmatmul.mubr.bf16.gmra.mxu0 %v3544
        %v4384 = vpop.f32.mrf.mxu0
        %v4385 = vadd.f32 %v4224, %v4384
        %v4386 = vpop.f32.mrf.mxu0
        %v4387 = vpop.f32.mrf.mxu0
        %v4388 = vadd.f32 %v4227, %v4387
        %v4389 = vpop.f32.mrf.mxu0
        %4390 = vmatprep.mubr.bf16.mxu0 %v3553
        %4391 = vmatmul.mubr.bf16.gmra.mxu0 %v3552
        %v4392 = vpop.f32.mrf.mxu0
        %v4393 = vadd.f32 %v4232, %v4392
        %v4394 = vpop.f32.mrf.mxu0
        %v4395 = vpop.f32.mrf.mxu0
        %v4396 = vadd.f32 %v4235, %v4395
        %v4397 = vpop.f32.mrf.mxu0
        %4398 = vmatprep.mubr.bf16.mxu0 %v3561
        %4399 = vmatmul.mubr.bf16.gmra.mxu0 %v3560
        %v4400 = vpop.f32.mrf.mxu0
        %v4401 = vadd.f32 %v4240, %v4400
        %v4402 = vpop.f32.mrf.mxu0
        %v4403 = vpop.f32.mrf.mxu0
        %v4404 = vadd.f32 %v4243, %v4403
        %v4405 = vpop.f32.mrf.mxu0
        %4406 = vmatprep.mubr.bf16.mxu0 %v3569
        %4407 = vmatmul.mubr.bf16.gmra.mxu0 %v3568
        %v4408 = vpop.f32.mrf.mxu0
        %v4409 = vadd.f32 %v4248, %v4408
        %v4410 = vpop.f32.mrf.mxu0
        %v4411 = vpop.f32.mrf.mxu0
        %v4412 = vadd.f32 %v4251, %v4411
        %v4413 = vpop.f32.mrf.mxu0
        %4414 = vmatprep.mubr.bf16.mxu0 %v3577
        %4415 = vmatmul.mubr.bf16.gmra.mxu0 %v3576
        %v4416 = vpop.f32.mrf.mxu0
        %v4417 = vadd.f32 %v4256, %v4416
        %v4418 = vpop.f32.mrf.mxu0
        %v4419 = vpop.f32.mrf.mxu0
        %v4420 = vadd.f32 %v4259, %v4419
        %v4421 = vpop.f32.mrf.mxu0
        %4422 = vmatprep.mubr.bf16.mxu0 %v3585
        %4423 = vmatmul.mubr.bf16.gmra.mxu0 %v3584
        %v4424 = vpop.f32.mrf.mxu0
        %v4425 = vadd.f32 %v4264, %v4424
        %v4426 = vpop.f32.mrf.mxu0
        %v4427 = vpop.f32.mrf.mxu0
        %v4428 = vadd.f32 %v4267, %v4427
        %v4429 = vpop.f32.mrf.mxu0
        %4430 = vmatprep.mubr.bf16.mxu0 %v3593
        %4431 = vmatmul.mubr.bf16.gmra.mxu0 %v3592
        %v4432 = vpop.f32.mrf.mxu0
        %v4433 = vadd.f32 %v4272, %v4432
        %v4434 = vpop.f32.mrf.mxu0
        %v4435 = vpop.f32.mrf.mxu0
        %v4436 = vadd.f32 %v4275, %v4435
        %v4437 = vpop.f32.mrf.mxu0
        %4438 = vmatprep.mubr.bf16.mxu0 %v3601
        %4439 = vmatmul.mubr.bf16.gmra.mxu0 %v3600
        %v4440 = vpop.f32.mrf.mxu0
        %v4441 = vadd.f32 %v4280, %v4440
        %v4442 = vpop.f32.mrf.mxu0
        %v4443 = vpop.f32.mrf.mxu0
        %v4444 = vadd.f32 %v4283, %v4443
        %v4445 = vpop.f32.mrf.mxu0
        %4446 = vmatprep.mubr.bf16.mxu0 %v3609
        %4447 = vmatmul.mubr.bf16.gmra.mxu0 %v3608
        %v4448 = vpop.f32.mrf.mxu0
        %v4449 = vadd.f32 %v4288, %v4448
        %v4450 = vpop.f32.mrf.mxu0
        %v4451 = vpop.f32.mrf.mxu0
        %v4452 = vadd.f32 %v4291, %v4451
        %v4453 = vpop.f32.mrf.mxu0
        %4454 = vmatprep.mubr.bf16.mxu0 %v3617
        %4455 = vmatmul.mubr.bf16.gmra.mxu0 %v3616
        %v4456 = vpop.f32.mrf.mxu0
        %v4457 = vadd.f32 %v4296, %v4456
        %v4458 = vpop.f32.mrf.mxu0
        %v4459 = vpop.f32.mrf.mxu0
        %v4460 = vadd.f32 %v4299, %v4459
        %v4461 = vpop.f32.mrf.mxu0
        %4462 = vmatprep.mubr.bf16.mxu0 %v3625
        %4463 = vmatmul.mubr.bf16.gmra.mxu0 %v3624
        %v4464 = vpop.f32.mrf.mxu0
        %v4465 = vadd.f32 %v4304, %v4464
        %v4466 = vpop.f32.mrf.mxu0
        %v4467 = vpop.f32.mrf.mxu0
        %v4468 = vadd.f32 %v4307, %v4467
        %v4469 = vpop.f32.mrf.mxu0
        %4470 = vmatprep.mubr.bf16.mxu0 %v3633
        %4471 = vmatmul.mubr.bf16.gmra.mxu0 %v3632
        %v4472 = vpop.f32.mrf.mxu0
        %v4473 = vadd.f32 %v4312, %v4472
        %v4474 = vpop.f32.mrf.mxu0
        %v4475 = vpop.f32.mrf.mxu0
        %v4476 = vadd.f32 %v4315, %v4475
        %v4477 = vpop.f32.mrf.mxu0
        %4478 = vmatprep.mubr.bf16.mxu0 %v3641
        %4479 = vmatmul.mubr.bf16.gmra.mxu0 %v3640
        %v4480 = vpop.f32.mrf.mxu0
        %v4481 = vadd.f32 %v4320, %v4480
        %v4482 = vpop.f32.mrf.mxu0
        %v4483 = vpop.f32.mrf.mxu0
        %v4484 = vadd.f32 %v4323, %v4483
        %v4485 = vpop.f32.mrf.mxu0
        %4486 = vmatprep.mubr.bf16.mxu0 %v3649
        %4487 = vmatmul.mubr.bf16.gmra.mxu0 %v3648
        %v4488 = vpop.f32.mrf.mxu0
        %v4489 = vadd.f32 %v4328, %v4488
        %v4490 = vpop.f32.mrf.mxu0
        %v4491 = vpop.f32.mrf.mxu0
        %v4492 = vadd.f32 %v4331, %v4491
        %v4493 = vpop.f32.mrf.mxu0
        %4494 = vmatprep.mubr.bf16.mxu0 %v3657
        %4495 = vmatmul.mubr.bf16.gmra.mxu0 %v3656
        %v4496 = vpop.f32.mrf.mxu0
        %v4497 = vadd.f32 %v4336, %v4496
        %v4498 = vpop.f32.mrf.mxu0
        %v4499 = vpop.f32.mrf.mxu0
        %v4500 = vadd.f32 %v4339, %v4499
        %v4501 = vpop.f32.mrf.mxu0
        %4502 = vmatprep.mubr.bf16.mxu0 %v3665
        %4503 = vmatmul.mubr.bf16.gmra.mxu0 %v3664
        %v4504 = vpop.f32.mrf.mxu0
        %v4505 = vadd.f32 %v4344, %v4504
        %v4506 = vpop.f32.mrf.mxu0
        %v4507 = vpop.f32.mrf.mxu0
        %v4508 = vadd.f32 %v4347, %v4507
        %v4509 = vpop.f32.mrf.mxu0
        %4510 = vdwg.mxu0
        %4511 = vmatprep.subr.bf16.mxu0 0
        %4512 = vmatpush1.bf16.msra.mxu0 %v4100
        %4513 = vmatprep.subr.bf16.mxu0 0
        %4514 = vmatpush1.bf16.msra.mxu0 %v4099
        %4515 = vmatprep.subr.bf16.mxu0 0
        %4516 = vmatpush1.bf16.msra.mxu0 %v4098
        %4517 = vmatprep.subr.bf16.mxu0 0
        %4518 = vmatpush1.bf16.msra.mxu0 %v4097
        %4519 = vmatprep.subr.bf16.mxu0 0
        %4520 = vmatpush1.bf16.msra.mxu0 %v4096
        %4521 = vmatprep.subr.bf16.mxu0 0
        %4522 = vmatpush1.bf16.msra.mxu0 %v4095
        %4523 = vmatprep.subr.bf16.mxu0 0
        %4524 = vmatpush1.bf16.msra.mxu0 %v4094
        %4525 = vmatprep.subr.bf16.mxu0 0
        %4526 = vmatpush1.bf16.msra.mxu0 %v4093
        %4527 = vmatprep.subr.bf16.mxu0 0
        %4528 = vmatpush2.bf16.msra.mxu0 %v4108
        %4529 = vmatprep.subr.bf16.mxu0 0
        %4530 = vmatpush2.bf16.msra.mxu0 %v4107
        %4531 = vmatprep.subr.bf16.mxu0 0
        %4532 = vmatpush2.bf16.msra.mxu0 %v4106
        %4533 = vmatprep.subr.bf16.mxu0 0
        %4534 = vmatpush2.bf16.msra.mxu0 %v4105
        %4535 = vmatprep.subr.bf16.mxu0 0
        %4536 = vmatpush2.bf16.msra.mxu0 %v4104
        %4537 = vmatprep.subr.bf16.mxu0 0
        %4538 = vmatpush2.bf16.msra.mxu0 %v4103
        %4539 = vmatprep.subr.bf16.mxu0 0
        %4540 = vmatpush2.bf16.msra.mxu0 %v4102
        %4541 = vmatprep.subr.bf16.mxu0 0
        %4542 = vmatpush2.bf16.msra.mxu0 %v4101
        %4543 = vmatprep.mubr.bf16.mxu0 %v3547
        %4544 = vmatmul.mubr.bf16.gmra.mxu0 %v3546
        %v4545 = vpop.f32.mrf.mxu0
        %v4546 = vadd.f32 %v4385, %v4545
        %v4547 = vpop.f32.mrf.mxu0
        %v4548 = vpop.f32.mrf.mxu0
        %v4549 = vadd.f32 %v4388, %v4548
        %v4550 = vpop.f32.mrf.mxu0
        %4551 = vmatprep.mubr.bf16.mxu0 %v3555
        %4552 = vmatmul.mubr.bf16.gmra.mxu0 %v3554
        %v4553 = vpop.f32.mrf.mxu0
        %v4554 = vadd.f32 %v4393, %v4553
        %v4555 = vpop.f32.mrf.mxu0
        %v4556 = vpop.f32.mrf.mxu0
        %v4557 = vadd.f32 %v4396, %v4556
        %v4558 = vpop.f32.mrf.mxu0
        %4559 = vmatprep.mubr.bf16.mxu0 %v3563
        %4560 = vmatmul.mubr.bf16.gmra.mxu0 %v3562
        %v4561 = vpop.f32.mrf.mxu0
        %v4562 = vadd.f32 %v4401, %v4561
        %v4563 = vpop.f32.mrf.mxu0
        %v4564 = vpop.f32.mrf.mxu0
        %v4565 = vadd.f32 %v4404, %v4564
        %v4566 = vpop.f32.mrf.mxu0
        %4567 = vmatprep.mubr.bf16.mxu0 %v3571
        %4568 = vmatmul.mubr.bf16.gmra.mxu0 %v3570
        %v4569 = vpop.f32.mrf.mxu0
        %v4570 = vadd.f32 %v4409, %v4569
        %v4571 = vpop.f32.mrf.mxu0
        %v4572 = vpop.f32.mrf.mxu0
        %v4573 = vadd.f32 %v4412, %v4572
        %v4574 = vpop.f32.mrf.mxu0
        %4575 = vmatprep.mubr.bf16.mxu0 %v3579
        %4576 = vmatmul.mubr.bf16.gmra.mxu0 %v3578
        %v4577 = vpop.f32.mrf.mxu0
        %v4578 = vadd.f32 %v4417, %v4577
        %v4579 = vpop.f32.mrf.mxu0
        %v4580 = vpop.f32.mrf.mxu0
        %v4581 = vadd.f32 %v4420, %v4580
        %v4582 = vpop.f32.mrf.mxu0
        %4583 = vmatprep.mubr.bf16.mxu0 %v3587
        %4584 = vmatmul.mubr.bf16.gmra.mxu0 %v3586
        %v4585 = vpop.f32.mrf.mxu0
        %v4586 = vadd.f32 %v4425, %v4585
        %v4587 = vpop.f32.mrf.mxu0
        %v4588 = vpop.f32.mrf.mxu0
        %v4589 = vadd.f32 %v4428, %v4588
        %v4590 = vpop.f32.mrf.mxu0
        %4591 = vmatprep.mubr.bf16.mxu0 %v3595
        %4592 = vmatmul.mubr.bf16.gmra.mxu0 %v3594
        %v4593 = vpop.f32.mrf.mxu0
        %v4594 = vadd.f32 %v4433, %v4593
        %v4595 = vpop.f32.mrf.mxu0
        %v4596 = vpop.f32.mrf.mxu0
        %v4597 = vadd.f32 %v4436, %v4596
        %v4598 = vpop.f32.mrf.mxu0
        %4599 = vmatprep.mubr.bf16.mxu0 %v3603
        %4600 = vmatmul.mubr.bf16.gmra.mxu0 %v3602
        %v4601 = vpop.f32.mrf.mxu0
        %v4602 = vadd.f32 %v4441, %v4601
        %v4603 = vpop.f32.mrf.mxu0
        %v4604 = vpop.f32.mrf.mxu0
        %v4605 = vadd.f32 %v4444, %v4604
        %v4606 = vpop.f32.mrf.mxu0
        %4607 = vmatprep.mubr.bf16.mxu0 %v3611
        %4608 = vmatmul.mubr.bf16.gmra.mxu0 %v3610
        %v4609 = vpop.f32.mrf.mxu0
        %v4610 = vadd.f32 %v4449, %v4609
        %v4611 = vpop.f32.mrf.mxu0
        %v4612 = vpop.f32.mrf.mxu0
        %v4613 = vadd.f32 %v4452, %v4612
        %v4614 = vpop.f32.mrf.mxu0
        %4615 = vmatprep.mubr.bf16.mxu0 %v3619
        %4616 = vmatmul.mubr.bf16.gmra.mxu0 %v3618
        %v4617 = vpop.f32.mrf.mxu0
        %v4618 = vadd.f32 %v4457, %v4617
        %v4619 = vpop.f32.mrf.mxu0
        %v4620 = vpop.f32.mrf.mxu0
        %v4621 = vadd.f32 %v4460, %v4620
        %v4622 = vpop.f32.mrf.mxu0
        %4623 = vmatprep.mubr.bf16.mxu0 %v3627
        %4624 = vmatmul.mubr.bf16.gmra.mxu0 %v3626
        %v4625 = vpop.f32.mrf.mxu0
        %v4626 = vadd.f32 %v4465, %v4625
        %v4627 = vpop.f32.mrf.mxu0
        %v4628 = vpop.f32.mrf.mxu0
        %v4629 = vadd.f32 %v4468, %v4628
        %v4630 = vpop.f32.mrf.mxu0
        %4631 = vmatprep.mubr.bf16.mxu0 %v3635
        %4632 = vmatmul.mubr.bf16.gmra.mxu0 %v3634
        %v4633 = vpop.f32.mrf.mxu0
        %v4634 = vadd.f32 %v4473, %v4633
        %v4635 = vpop.f32.mrf.mxu0
        %v4636 = vpop.f32.mrf.mxu0
        %v4637 = vadd.f32 %v4476, %v4636
        %v4638 = vpop.f32.mrf.mxu0
        %4639 = vmatprep.mubr.bf16.mxu0 %v3643
        %4640 = vmatmul.mubr.bf16.gmra.mxu0 %v3642
        %v4641 = vpop.f32.mrf.mxu0
        %v4642 = vadd.f32 %v4481, %v4641
        %v4643 = vpop.f32.mrf.mxu0
        %v4644 = vpop.f32.mrf.mxu0
        %v4645 = vadd.f32 %v4484, %v4644
        %v4646 = vpop.f32.mrf.mxu0
        %4647 = vmatprep.mubr.bf16.mxu0 %v3651
        %4648 = vmatmul.mubr.bf16.gmra.mxu0 %v3650
        %v4649 = vpop.f32.mrf.mxu0
        %v4650 = vadd.f32 %v4489, %v4649
        %v4651 = vpop.f32.mrf.mxu0
        %v4652 = vpop.f32.mrf.mxu0
        %v4653 = vadd.f32 %v4492, %v4652
        %v4654 = vpop.f32.mrf.mxu0
        %4655 = vmatprep.mubr.bf16.mxu0 %v3659
        %4656 = vmatmul.mubr.bf16.gmra.mxu0 %v3658
        %v4657 = vpop.f32.mrf.mxu0
        %v4658 = vadd.f32 %v4497, %v4657
        %v4659 = vpop.f32.mrf.mxu0
        %v4660 = vpop.f32.mrf.mxu0
        %v4661 = vadd.f32 %v4500, %v4660
        %v4662 = vpop.f32.mrf.mxu0
        %4663 = vmatprep.mubr.bf16.mxu0 %v3667
        %4664 = vmatmul.mubr.bf16.gmra.mxu0 %v3666
        %v4665 = vpop.f32.mrf.mxu0
        %v4666 = vadd.f32 %v4505, %v4665
        %v4667 = vpop.f32.mrf.mxu0
        %v4668 = vpop.f32.mrf.mxu0
        %v4669 = vadd.f32 %v4508, %v4668
        %v4670 = vpop.f32.mrf.mxu0
        %4671 = vdwg.mxu0
        %4672 = vmatprep.subr.bf16.mxu0 0
        %4673 = vmatpush1.bf16.msra.mxu0 %v4116
        %4674 = vmatprep.subr.bf16.mxu0 0
        %4675 = vmatpush1.bf16.msra.mxu0 %v4115
        %4676 = vmatprep.subr.bf16.mxu0 0
        %4677 = vmatpush1.bf16.msra.mxu0 %v4114
        %4678 = vmatprep.subr.bf16.mxu0 0
        %4679 = vmatpush1.bf16.msra.mxu0 %v4113
        %4680 = vmatprep.subr.bf16.mxu0 0
        %4681 = vmatpush1.bf16.msra.mxu0 %v4112
        %4682 = vmatprep.subr.bf16.mxu0 0
        %4683 = vmatpush1.bf16.msra.mxu0 %v4111
        %4684 = vmatprep.subr.bf16.mxu0 0
        %4685 = vmatpush1.bf16.msra.mxu0 %v4110
        %4686 = vmatprep.subr.bf16.mxu0 0
        %4687 = vmatpush1.bf16.msra.mxu0 %v4109
        %4688 = vmatprep.subr.bf16.mxu0 0
        %4689 = vmatpush2.bf16.msra.mxu0 %v4124
        %4690 = vmatprep.subr.bf16.mxu0 0
        %4691 = vmatpush2.bf16.msra.mxu0 %v4123
        %4692 = vmatprep.subr.bf16.mxu0 0
        %4693 = vmatpush2.bf16.msra.mxu0 %v4122
        %4694 = vmatprep.subr.bf16.mxu0 0
        %4695 = vmatpush2.bf16.msra.mxu0 %v4121
        %4696 = vmatprep.subr.bf16.mxu0 0
        %4697 = vmatpush2.bf16.msra.mxu0 %v4120
        %4698 = vmatprep.subr.bf16.mxu0 0
        %4699 = vmatpush2.bf16.msra.mxu0 %v4119
        %4700 = vmatprep.subr.bf16.mxu0 0
        %4701 = vmatpush2.bf16.msra.mxu0 %v4118
        %4702 = vmatprep.subr.bf16.mxu0 0
        %4703 = vmatpush2.bf16.msra.mxu0 %v4117
        %4704 = vmatprep.mubr.bf16.mxu0 %v3549
        %4705 = vmatmul.mubr.bf16.gmra.mxu0 %v3548
        %v4706 = vpop.f32.mrf.mxu0
        %v4707 = vadd.f32 %v4546, %v4706
        %v4708 = vpop.f32.mrf.mxu0
        %v4709 = vpop.f32.mrf.mxu0
        %v4710 = vadd.f32 %v4549, %v4709
        %v4711 = vpop.f32.mrf.mxu0
        %4712 = vmatprep.mubr.bf16.mxu0 %v3557
        %4713 = vmatmul.mubr.bf16.gmra.mxu0 %v3556
        %v4714 = vpop.f32.mrf.mxu0
        %v4715 = vadd.f32 %v4554, %v4714
        %v4716 = vpop.f32.mrf.mxu0
        %v4717 = vpop.f32.mrf.mxu0
        %v4718 = vadd.f32 %v4557, %v4717
        %v4719 = vpop.f32.mrf.mxu0
        %4720 = vmatprep.mubr.bf16.mxu0 %v3565
        %4721 = vmatmul.mubr.bf16.gmra.mxu0 %v3564
        %v4722 = vpop.f32.mrf.mxu0
        %v4723 = vadd.f32 %v4562, %v4722
        %v4724 = vpop.f32.mrf.mxu0
        %v4725 = vpop.f32.mrf.mxu0
        %v4726 = vadd.f32 %v4565, %v4725
        %v4727 = vpop.f32.mrf.mxu0
        %4728 = vmatprep.mubr.bf16.mxu0 %v3573
        %4729 = vmatmul.mubr.bf16.gmra.mxu0 %v3572
        %v4730 = vpop.f32.mrf.mxu0
        %v4731 = vadd.f32 %v4570, %v4730
        %v4732 = vpop.f32.mrf.mxu0
        %v4733 = vpop.f32.mrf.mxu0
        %v4734 = vadd.f32 %v4573, %v4733
        %v4735 = vpop.f32.mrf.mxu0
        %4736 = vmatprep.mubr.bf16.mxu0 %v3581
        %4737 = vmatmul.mubr.bf16.gmra.mxu0 %v3580
        %v4738 = vpop.f32.mrf.mxu0
        %v4739 = vadd.f32 %v4578, %v4738
        %v4740 = vpop.f32.mrf.mxu0
        %v4741 = vpop.f32.mrf.mxu0
        %v4742 = vadd.f32 %v4581, %v4741
        %v4743 = vpop.f32.mrf.mxu0
        %4744 = vmatprep.mubr.bf16.mxu0 %v3589
        %4745 = vmatmul.mubr.bf16.gmra.mxu0 %v3588
        %v4746 = vpop.f32.mrf.mxu0
        %v4747 = vadd.f32 %v4586, %v4746
        %v4748 = vpop.f32.mrf.mxu0
        %v4749 = vpop.f32.mrf.mxu0
        %v4750 = vadd.f32 %v4589, %v4749
        %v4751 = vpop.f32.mrf.mxu0
        %4752 = vmatprep.mubr.bf16.mxu0 %v3597
        %4753 = vmatmul.mubr.bf16.gmra.mxu0 %v3596
        %v4754 = vpop.f32.mrf.mxu0
        %v4755 = vadd.f32 %v4594, %v4754
        %v4756 = vpop.f32.mrf.mxu0
        %v4757 = vpop.f32.mrf.mxu0
        %v4758 = vadd.f32 %v4597, %v4757
        %v4759 = vpop.f32.mrf.mxu0
        %4760 = vmatprep.mubr.bf16.mxu0 %v3605
        %4761 = vmatmul.mubr.bf16.gmra.mxu0 %v3604
        %v4762 = vpop.f32.mrf.mxu0
        %v4763 = vadd.f32 %v4602, %v4762
        %v4764 = vpop.f32.mrf.mxu0
        %v4765 = vpop.f32.mrf.mxu0
        %v4766 = vadd.f32 %v4605, %v4765
        %v4767 = vpop.f32.mrf.mxu0
        %4768 = vmatprep.mubr.bf16.mxu0 %v3613
        %4769 = vmatmul.mubr.bf16.gmra.mxu0 %v3612
        %v4770 = vpop.f32.mrf.mxu0
        %v4771 = vadd.f32 %v4610, %v4770
        %v4772 = vpop.f32.mrf.mxu0
        %v4773 = vpop.f32.mrf.mxu0
        %v4774 = vadd.f32 %v4613, %v4773
        %v4775 = vpop.f32.mrf.mxu0
        %4776 = vmatprep.mubr.bf16.mxu0 %v3621
        %4777 = vmatmul.mubr.bf16.gmra.mxu0 %v3620
        %v4778 = vpop.f32.mrf.mxu0
        %v4779 = vadd.f32 %v4618, %v4778
        %v4780 = vpop.f32.mrf.mxu0
        %v4781 = vpop.f32.mrf.mxu0
        %v4782 = vadd.f32 %v4621, %v4781
        %v4783 = vpop.f32.mrf.mxu0
        %4784 = vmatprep.mubr.bf16.mxu0 %v3629
        %4785 = vmatmul.mubr.bf16.gmra.mxu0 %v3628
        %v4786 = vpop.f32.mrf.mxu0
        %v4787 = vadd.f32 %v4626, %v4786
        %v4788 = vpop.f32.mrf.mxu0
        %v4789 = vpop.f32.mrf.mxu0
        %v4790 = vadd.f32 %v4629, %v4789
        %v4791 = vpop.f32.mrf.mxu0
        %4792 = vmatprep.mubr.bf16.mxu0 %v3637
        %4793 = vmatmul.mubr.bf16.gmra.mxu0 %v3636
        %v4794 = vpop.f32.mrf.mxu0
        %v4795 = vadd.f32 %v4634, %v4794
        %v4796 = vpop.f32.mrf.mxu0
        %v4797 = vpop.f32.mrf.mxu0
        %v4798 = vadd.f32 %v4637, %v4797
        %v4799 = vpop.f32.mrf.mxu0
        %4800 = vmatprep.mubr.bf16.mxu0 %v3645
        %4801 = vmatmul.mubr.bf16.gmra.mxu0 %v3644
        %v4802 = vpop.f32.mrf.mxu0
        %v4803 = vadd.f32 %v4642, %v4802
        %v4804 = vpop.f32.mrf.mxu0
        %v4805 = vpop.f32.mrf.mxu0
        %v4806 = vadd.f32 %v4645, %v4805
        %v4807 = vpop.f32.mrf.mxu0
        %4808 = vmatprep.mubr.bf16.mxu0 %v3653
        %4809 = vmatmul.mubr.bf16.gmra.mxu0 %v3652
        %v4810 = vpop.f32.mrf.mxu0
        %v4811 = vadd.f32 %v4650, %v4810
        %v4812 = vpop.f32.mrf.mxu0
        %v4813 = vpop.f32.mrf.mxu0
        %v4814 = vadd.f32 %v4653, %v4813
        %v4815 = vpop.f32.mrf.mxu0
        %4816 = vmatprep.mubr.bf16.mxu0 %v3661
        %4817 = vmatmul.mubr.bf16.gmra.mxu0 %v3660
        %v4818 = vpop.f32.mrf.mxu0
        %v4819 = vadd.f32 %v4658, %v4818
        %v4820 = vpop.f32.mrf.mxu0
        %v4821 = vpop.f32.mrf.mxu0
        %v4822 = vadd.f32 %v4661, %v4821
        %v4823 = vpop.f32.mrf.mxu0
        %4824 = vmatprep.mubr.bf16.mxu0 %v3669
        %4825 = vmatmul.mubr.bf16.gmra.mxu0 %v3668
        %v4826 = vpop.f32.mrf.mxu0
        %v4827 = vadd.f32 %v4666, %v4826
        %v4828 = vpop.f32.mrf.mxu0
        %v4829 = vpop.f32.mrf.mxu0
        %v4830 = vadd.f32 %v4669, %v4829
        %v4831 = vpop.f32.mrf.mxu0
        %4832 = vdwg.mxu0
        %4833 = vst [vmem:[%s235] sm:$0xff] %v4707
        %4834 = vst [vmem:[%s235 + $0x8] sm:$0xff] %v4710
        %4835 = vst [vmem:[%s235 + $0x10] sm:$0xff] %v4715
        %4836 = vst [vmem:[%s235 + $0x18] sm:$0xff] %v4718
        %4837 = vst [vmem:[%s235 + $0x20] sm:$0xff] %v4723
        %4838 = vst [vmem:[%s235 + $0x28] sm:$0xff] %v4726
        %4839 = vst [vmem:[%s235 + $0x30] sm:$0xff] %v4731
        %4840 = vst [vmem:[%s235 + $0x38] sm:$0xff] %v4734
        %4841 = vst [vmem:[%s235 + $0x40] sm:$0xff] %v4739
        %4842 = vst [vmem:[%s235 + $0x48] sm:$0xff] %v4742
        %4843 = vst [vmem:[%s235 + $0x50] sm:$0xff] %v4747
        %4844 = vst [vmem:[%s235 + $0x58] sm:$0xff] %v4750
        %4845 = vst [vmem:[%s235 + $0x60] sm:$0xff] %v4755
        %4846 = vst [vmem:[%s235 + $0x68] sm:$0xff] %v4758
        %4847 = vst [vmem:[%s235 + $0x70] sm:$0xff] %v4763
        %4848 = vst [vmem:[%s235 + $0x78] sm:$0xff] %v4766
        %4849 = vst [vmem:[%s235 + $0x80] sm:$0xff] %v4771
        %4850 = vst [vmem:[%s235 + $0x88] sm:$0xff] %v4774
        %4851 = vst [vmem:[%s235 + $0x90] sm:$0xff] %v4779
        %4852 = vst [vmem:[%s235 + $0x98] sm:$0xff] %v4782
        %4853 = vst [vmem:[%s235 + $0xa0] sm:$0xff] %v4787
        %4854 = vst [vmem:[%s235 + $0xa8] sm:$0xff] %v4790
        %4855 = vst [vmem:[%s235 + $0xb0] sm:$0xff] %v4795
        %4856 = vst [vmem:[%s235 + $0xb8] sm:$0xff] %v4798
        %4857 = vst [vmem:[%s235 + $0xc0] sm:$0xff] %v4803
        %4858 = vst [vmem:[%s235 + $0xc8] sm:$0xff] %v4806
        %4859 = vst [vmem:[%s235 + $0xd0] sm:$0xff] %v4811
        %4860 = vst [vmem:[%s235 + $0xd8] sm:$0xff] %v4814
        %4861 = vst [vmem:[%s235 + $0xe0] sm:$0xff] %v4819
        %4862 = vst [vmem:[%s235 + $0xe8] sm:$0xff] %v4822
        %4863 = vst [vmem:[%s235 + $0xf0] sm:$0xff] %v4827
        %4864 = vst [vmem:[%s235 + $0xf8] sm:$0xff] %v4830
        %s4865 = sand.u32 %s137, 1
        %s4866 = scalar_lea.sflag [#allocation3], %s4865
        %s4867 = sand.u32 %s137, 1
        %s4868 = smul.addr %s4867, 256
        %s4869 = scalar_lea.vmem [#allocation2], %s4868
        // Predicated region
        $region41: #{_simple_nn_forward.1} parent=39 // pred_check
          %p4870 = pneg %p147
        $region42: #{_simple_nn_forward.1} parent=39 // pred_check_branch
          %4872 = sbr.rel (%p4870) target = $region44
        $region43: #{_simple_nn_forward.1} parent=39 // pred_region
          %s4873 = smul.u32 32, %s19
          %s4874 = ssub.s32 63, %s4873
          %p4875 = scmp.lt.s32.totalorder %s4874, 32
          %s4876 = scalar_select %p4875, %s4874, 32
          %s4877 = smul.u32 128, %s4876
          %s4879 = ssub.s32 4096, %s4877
          %4880 = vsyncadd %s4866, %s4879
          %p4881 = scmp.ne.s32.totalorder 0, %s4877
          %s4882 = smul.addr %s4873, 128
          %s4883 = scalar_lea.hbm %s5, %s4882
          %s4884 = smul.u32 8, %s4876
          %s4885 = sshll.u32 %s4869, 4
          %s4886 = int_to_ptr.vmem [resolvable:$true] %s4885
          %s4887 = sshll.u32 %s4884, 4
          %4891 = dma.vmem_to_hbm [thread:$0]  (%p4881), %s4886, %s4887, %s4883, %s4866, 128, 128, 8
        $region44: #{_simple_nn_forward.1} parent=39 // pred_fallthru
          _
      $region40: #{_simple_nn_forward.1} parent=5 // pred_fallthru
        _
      %p4892 = scmp.le.s32.totalorder 2, %s14
      // Predicated region
      $region45: #{_simple_nn_forward.1} parent=5 // pred_check
        %p4893 = pneg %p4892
      $region46: #{_simple_nn_forward.1} parent=5 // pred_check_branch
        %4895 = sbr.rel (%p4893) target = $region48
      $region47: #{_simple_nn_forward.1} parent=5 // pred_region
        %s4896 = ssub.s32 %s14, 2
        // Predicated region
        $region49: #{_simple_nn_forward.1} parent=47 // pred_check
          %p4897 = pneg %p153
        $region50: #{_simple_nn_forward.1} parent=47 // pred_check_branch
          %4899 = sbr.rel (%p4897) target = $region52
        $region51: #{_simple_nn_forward.1} parent=47 // pred_region
          %s4900 = sand.u32 %s138, 1
          %s4901 = scalar_lea.sflag [#allocation3], %s4900
          %s4902 = sand.u32 %s138, 1
          %s4903 = smul.addr %s4902, 256
          %s4904 = scalar_lea.vmem [#allocation2], %s4903
          %4905 = dma.done %s4901, 4096
        $region52: #{_simple_nn_forward.1} parent=47 // pred_fallthru
          _
      $region48: #{_simple_nn_forward.1} parent=5 // pred_fallthru
        _
    $region6: #{_simple_nn_forward.1} parent=1 // loop_footer
      %s18 = sadd.s32 1, %s14
    $region7: #{_simple_nn_forward.1} parent=1 // loop_footer_branch
      %13 = sbr.rel target = $region3
    $region8: #{_simple_nn_forward.1} parent=1 // loop_exit
      _
    %4906 = vsyncpa [#allocation3], 1
    %s4907 = scalar_lea.sflag [#allocation3], 1
    %4908 = vsyncpa %s4907, 1

</llo_original>
